<compile_context>
chip_gen: v5e
topology: v5e:2x2
jax: 0.10.0
libtpu: 0.0.40
codegen_flags: <defaults>
</compile_context>

<pallas_src>
import functools

import jax
import jax.numpy as jnp
from jax.experimental import pallas as pl
from jax.experimental.pallas import tpu as pltpu


def _round_up(n: int, m: int) -> int:
    return (n + m - 1) // m * m


# ---------------------------------------------------------------------------
# One-time capability probe: single-buffered constant blocks
# (pipeline_mode=pl.Buffered(1)) avoid reserving a useless second VMEM copy of
# the resident weights. Probed once at import (trace + lower + compile a tiny
# kernel); the real forward is never wrapped in a broad try/except.
# ---------------------------------------------------------------------------
def _probe_single_buffered() -> bool:
    try:
        spec = pl.BlockSpec((8, 128), lambda i: (0, 0),
                            pipeline_mode=pl.Buffered(buffer_count=1))

        def _copy(x_ref, o_ref):
            o_ref[...] = x_ref[...]

        fn = pl.pallas_call(
            _copy,
            out_shape=jax.ShapeDtypeStruct((8, 128), jnp.float32),
            grid=(1,),
            in_specs=[spec],
            out_specs=pl.BlockSpec((8, 128), lambda i: (0, 0)),
        )
        jax.jit(fn).lower(jax.ShapeDtypeStruct((8, 128), jnp.float32)).compile()
        return True
    except Exception:
        return False


_SINGLE_BUFFER_WEIGHTS = _probe_single_buffered()


# ---------------------------------------------------------------------------
# Fused forward kernel: all four layers on one batch tile, weights resident.
# ---------------------------------------------------------------------------
def _ae_kernel(x_ref, w1_ref, b1_ref, w2_ref, b2_ref, w3_ref, b3_ref,
               w4_ref, b4_ref, out_ref):
    cdt = w1_ref.dtype                       # bf16 MXU operands; f32 accumulation.
    x = x_ref[...].astype(cdt)

    # encoder: Linear -> ReLU -> Linear
    h1 = jnp.dot(x, w1_ref[...], preferred_element_type=jnp.float32)
    h1 = jnp.maximum(h1 + b1_ref[...], 0.0).astype(cdt)

    z = jnp.dot(h1, w2_ref[...], preferred_element_type=jnp.float32)
    z = (z + b2_ref[...]).astype(cdt)

    # decoder: Linear -> ReLU -> Linear
    h2 = jnp.dot(z, w3_ref[...], preferred_element_type=jnp.float32)
    h2 = jnp.maximum(h2 + b3_ref[...], 0.0).astype(cdt)

    out = jnp.dot(h2, w4_ref[...], preferred_element_type=jnp.float32)
    out_ref[...] = (out + b4_ref[...]).astype(out_ref.dtype)


def prepare_params(params, compute_dtype=jnp.bfloat16):
    """One-time weight preparation (call once, reuse across forward calls).

    Internal dims (hidden, embed) are zero-padded to multiples of 128 (exact math);
    the input/output feature dim is left untouched so x / the output need no
    feature-dim pad/slice in the wrapper. Weights -> bf16, biases stay f32.
    """
    w1, b1 = params["w1"], params["b1"]   # (d_in, hid), (1, hid)
    w2, b2 = params["w2"], params["b2"]   # (hid, emb), (1, emb)
    w3, b3 = params["w3"], params["b3"]   # (emb, hid), (1, hid)
    w4, b4 = params["w4"], params["b4"]   # (hid, d_in), (1, d_in)

    d_in, hid = w1.shape
    emb = w2.shape[1]
    h_p = _round_up(hid, 128)
    e_p = _round_up(emb, 128)

    def padw(w, rows, cols):
        return jnp.pad(w, ((0, rows - w.shape[0]), (0, cols - w.shape[1]))).astype(compute_dtype)

    def padb(b, cols):
        return jnp.pad(b, ((0, 0), (0, cols - b.shape[1]))).astype(jnp.float32)

    return dict(
        w1=padw(w1, d_in, h_p), b1=padb(b1, h_p),
        w2=padw(w2, h_p, e_p), b2=padb(b2, e_p),
        w3=padw(w3, e_p, h_p), b3=padb(b3, h_p),
        w4=padw(w4, h_p, d_in), b4=padb(b4, d_in),
    )


@functools.partial(jax.jit,
                   static_argnames=("block_b", "out_dtype", "single_buffer_weights"))
def _forward_impl(x, prepped, *, block_b, out_dtype, single_buffer_weights):
    w1, b1 = prepped["w1"], prepped["b1"]
    w2, b2 = prepped["w2"], prepped["b2"]
    w3, b3 = prepped["w3"], prepped["b3"]
    w4, b4 = prepped["w4"], prepped["b4"]

    B, d_in = x.shape
    h_p = w1.shape[1]
    e_p = w2.shape[1]

    # ---- batch tiling ------------------------------------------------------
    #  * multiple of 16 (bf16 min sublane tile); 128-aligned when large
    #  * keep >= 2 grid steps when the batch allows it so the "parallel" batch
    #    axis can shard across v7x's two TensorCores.
    tile_align = 128 if block_b >= 128 else 16
    bb = _round_up(max(16, block_b), tile_align)
    bb = min(bb, _round_up(B, 16))
    if B > 16:
        bb = min(bb, _round_up(pl.cdiv(B, 2), 16))
    bb = max(16, _round_up(bb, 16))
    B_p = _round_up(B, bb)
    grid = (B_p // bb,)

    # Only cheap batch padding; feature dim stays at d_in (full-extent blocks).
    xp = x if B_p == B else jnp.pad(x, ((0, B_p - B), (0, 0)))

    # ---- derived VMEM budget (portable across 64 MiB v7x / 128 MiB v5e,v6e) ---
    out_itemsize = jnp.dtype(out_dtype).itemsize
    w_copies = 1 if single_buffer_weights else 2
    weight_bytes = w_copies * sum(int(a.size) * a.dtype.itemsize
                                  for a in (w1, b1, w2, b2, w3, b3, w4, b4))
    stream_bytes = 2 * bb * d_in * (x.dtype.itemsize + out_itemsize)   # double-buffered x / out tiles
    act_bytes = bb * (2 * h_p + e_p + d_in) * 4                        # f32 intermediates (upper bound)
    vmem_budget = int(1.5 * (weight_bytes + stream_bytes + act_bytes)) + (4 << 20)
    vmem_budget = max(32 << 20, min(vmem_budget, 56 << 20))

    # ---- block specs ---------------------------------------------------------
    def const_spec(shape):
        # Batch-invariant block (weights/biases): stays resident, never re-DMA'd.
        if single_buffer_weights:
            return pl.BlockSpec(shape, lambda i: (0, 0),
                                pipeline_mode=pl.Buffered(buffer_count=1))
        return pl.BlockSpec(shape, lambda i: (0, 0))

    out_p = pl.pallas_call(
        _ae_kernel,
        out_shape=jax.ShapeDtypeStruct((B_p, d_in), out_dtype),
        grid_spec=pltpu.PrefetchScalarGridSpec(
            num_scalar_prefetch=0,
            grid=grid,
            in_specs=[
                pl.BlockSpec((bb, d_in), lambda i: (i, 0)),      # x tile (streamed over batch)
                const_spec((d_in, h_p)), const_spec((1, h_p)),   # layer 1
                const_spec((h_p, e_p)), const_spec((1, e_p)),    # layer 2
                const_spec((e_p, h_p)), const_spec((1, h_p)),    # layer 3
                const_spec((h_p, d_in)), const_spec((1, d_in)),  # layer 4
            ],
            out_specs=pl.BlockSpec((bb, d_in), lambda i: (i, 0)),
        ),
        compiler_params=pltpu.CompilerParams(
            dimension_semantics=("parallel",),   # batch axis -> megacore shardable
            vmem_limit_bytes=vmem_budget,
        ),
    )(xp, w1, b1, w2, b2, w3, b3, w4, b4)

    return out_p if B_p == B else out_p[:B]


def autoencoder_forward(x, prepared_params, block_b=512, out_dtype=jnp.float32):
    """x: (B, input_dim) f32. prepared_params: output of prepare_params() (cached).

    block_b: batch tile (~256 on v5e, 512 on v6e/v7x). out_dtype=jnp.bfloat16 halves
    output HBM traffic on the HBM-bound v6e path when downstream tolerates it.
    """
    return _forward_impl(x, prepared_params, block_b=int(block_b),
                         out_dtype=out_dtype,
                         single_buffer_weights=_SINGLE_BUFFER_WEIGHTS)


def init_params(key, input_dim=1376, embed_dim=128, hidden=512):
    """PyTorch-style init (uniform +/- 1/sqrt(fan_in)); weights stored transposed (in, out)."""
    def linear(k, fan_in, fan_out):
        kw, kb = jax.random.split(k)
        bound = 1.0 / jnp.sqrt(fan_in)
        w = jax.random.uniform(kw, (fan_in, fan_out), jnp.float32, -bound, bound)
        b = jax.random.uniform(kb, (1, fan_out), jnp.float32, -bound, bound)
        return w, b

    k1, k2, k3, k4 = jax.random.split(key, 4)
    w1, b1 = linear(k1, input_dim, hidden)
    w2, b2 = linear(k2, hidden, embed_dim)
    w3, b3 = linear(k3, embed_dim, hidden)
    w4, b4 = linear(k4, hidden, input_dim)
    return dict(w1=w1, b1=b1, w2=w2, b2=b2, w3=w3, b3=b3, w4=w4, b4=b4)


def reference_forward(x, p):
    h1 = jnp.maximum(x @ p["w1"] + p["b1"], 0.0)
    z = h1 @ p["w2"] + p["b2"]
    h2 = jnp.maximum(z @ p["w3"] + p["b3"], 0.0)
    return h2 @ p["w4"] + p["b4"]


if __name__ == "__main__":
    input_dim, embed_dim, batch = 1376, 128, 40

    key = jax.random.PRNGKey(0)
    kx, kp = jax.random.split(key)
    x = jax.random.normal(kx, (batch, input_dim), jnp.float32)
    params = init_params(kp, input_dim=input_dim, embed_dim=embed_dim)

    # One-time weight preparation (pad internal dims to 128, cast to bf16) -- cached.
    prepared = jax.tree_util.tree_map(jax.block_until_ready, prepare_params(params))

    # batch=40 exercises a multi-step grid (>=2 parallel steps) plus ragged-batch padding.
    out = autoencoder_forward(x, prepared, block_b=512, out_dtype=jnp.float32)
    out = jax.block_until_ready(out)

    ref = reference_forward(x, params)  # f32 reference
    assert out.shape == (batch, input_dim)
    # bf16 MXU operands with f32 accumulation -> looser tolerance than pure f32.
    max_err = float(jnp.max(jnp.abs(out - ref)))
    assert jnp.allclose(out, ref, atol=5e-2, rtol=5e-2), f"mismatch vs reference (max err {max_err})"

    print("KERNEL_OK")
</pallas_src>

<mosaic_0001>
module attributes {stable_mosaic.version = 11 : i64} {
  func.func @_ae_kernel(%arg0: i32, %arg1: memref<32x1376xf32, #tpu.memory_space<vmem>>, %arg2: memref<1376x512xbf16, #tpu.memory_space<vmem>>, %arg3: memref<1x512xf32, #tpu.memory_space<vmem>>, %arg4: memref<512x128xbf16, #tpu.memory_space<vmem>>, %arg5: memref<1x128xf32, #tpu.memory_space<vmem>>, %arg6: memref<128x512xbf16, #tpu.memory_space<vmem>>, %arg7: memref<1x512xf32, #tpu.memory_space<vmem>>, %arg8: memref<512x1376xbf16, #tpu.memory_space<vmem>>, %arg9: memref<1x1376xf32, #tpu.memory_space<vmem>>, %arg10: memref<32x1376xf32, #tpu.memory_space<vmem>>) attributes {dimension_semantics = [#tpu.dimension_semantics<parallel>], iteration_bounds = array<i64: 2>, scalar_prefetch = 0 : i64, scratch_operands = 0 : i64, tpu.core_type = #tpu.core_type<tc>, window_params = [{transform_indices = @transform_0, window_bounds = array<i64: 32, 1376>}, {pipeline_mode = #tpu.pipeline_mode<synchronous>, transform_indices = @transform_1, window_bounds = array<i64: 1376, 512>}, {pipeline_mode = #tpu.pipeline_mode<synchronous>, transform_indices = @transform_2, window_bounds = array<i64: 1, 512>}, {pipeline_mode = #tpu.pipeline_mode<synchronous>, transform_indices = @transform_3, window_bounds = array<i64: 512, 128>}, {pipeline_mode = #tpu.pipeline_mode<synchronous>, transform_indices = @transform_4, window_bounds = array<i64: 1, 128>}, {pipeline_mode = #tpu.pipeline_mode<synchronous>, transform_indices = @transform_5, window_bounds = array<i64: 128, 512>}, {pipeline_mode = #tpu.pipeline_mode<synchronous>, transform_indices = @transform_6, window_bounds = array<i64: 1, 512>}, {pipeline_mode = #tpu.pipeline_mode<synchronous>, transform_indices = @transform_7, window_bounds = array<i64: 512, 1376>}, {pipeline_mode = #tpu.pipeline_mode<synchronous>, transform_indices = @transform_8, window_bounds = array<i64: 1, 1376>}, {transform_indices = @transform_9, window_bounds = array<i64: 32, 1376>}]} {
    %c0 = arith.constant 0 : index
    %c0_0 = arith.constant 0 : index
    %0 = vector.load %arg1[%c0, %c0_0] : memref<32x1376xf32, #tpu.memory_space<vmem>>, vector<32x1376xf32>
    %1 = arith.truncf %0 : vector<32x1376xf32> to vector<32x1376xbf16>
    %c0_1 = arith.constant 0 : index
    %c0_2 = arith.constant 0 : index
    %2 = vector.load %arg2[%c0_1, %c0_2] : memref<1376x512xbf16, #tpu.memory_space<vmem>>, vector<1376x512xbf16>
    %cst = arith.constant dense<0.000000e+00> : vector<32x512xf32>
    %3 = tpu.matmul %1, %2, %cst {dimension_numbers = #tpu.dot_dimension_numbers<[1], [0], [0], [1], [0, 0, 1, 1], [], []>} : vector<32x1376xbf16>, vector<1376x512xbf16>, vector<32x512xf32> -> vector<32x512xf32>
    %c0_3 = arith.constant 0 : index
    %c0_4 = arith.constant 0 : index
    %4 = vector.load %arg3[%c0_3, %c0_4] : memref<1x512xf32, #tpu.memory_space<vmem>>, vector<1x512xf32>
    %5 = vector.broadcast %4 : vector<1x512xf32> to vector<32x512xf32>
    %6 = arith.addf %3, %5 : vector<32x512xf32>
    %cst_5 = arith.constant 0.000000e+00 : f32
    %7 = vector.broadcast %cst_5 : f32 to vector<32x512xf32>
    %8 = arith.maximumf %6, %7 : vector<32x512xf32>
    %9 = arith.truncf %8 : vector<32x512xf32> to vector<32x512xbf16>
    %c0_6 = arith.constant 0 : index
    %c0_7 = arith.constant 0 : index
    %10 = vector.load %arg4[%c0_6, %c0_7] : memref<512x128xbf16, #tpu.memory_space<vmem>>, vector<512x128xbf16>
    %cst_8 = arith.constant dense<0.000000e+00> : vector<32x128xf32>
    %11 = tpu.matmul %9, %10, %cst_8 {dimension_numbers = #tpu.dot_dimension_numbers<[1], [0], [0], [1], [0, 0, 1, 1], [], []>} : vector<32x512xbf16>, vector<512x128xbf16>, vector<32x128xf32> -> vector<32x128xf32>
    %c0_9 = arith.constant 0 : index
    %c0_10 = arith.constant 0 : index
    %12 = vector.load %arg5[%c0_9, %c0_10] : memref<1x128xf32, #tpu.memory_space<vmem>>, vector<1x128xf32>
    %13 = vector.broadcast %12 : vector<1x128xf32> to vector<32x128xf32>
    %14 = arith.addf %11, %13 : vector<32x128xf32>
    %15 = arith.truncf %14 : vector<32x128xf32> to vector<32x128xbf16>
    %c0_11 = arith.constant 0 : index
    %c0_12 = arith.constant 0 : index
    %16 = vector.load %arg6[%c0_11, %c0_12] : memref<128x512xbf16, #tpu.memory_space<vmem>>, vector<128x512xbf16>
    %cst_13 = arith.constant dense<0.000000e+00> : vector<32x512xf32>
    %17 = tpu.matmul %15, %16, %cst_13 {dimension_numbers = #tpu.dot_dimension_numbers<[1], [0], [0], [1], [0, 0, 1, 1], [], []>} : vector<32x128xbf16>, vector<128x512xbf16>, vector<32x512xf32> -> vector<32x512xf32>
    %c0_14 = arith.constant 0 : index
    %c0_15 = arith.constant 0 : index
    %18 = vector.load %arg7[%c0_14, %c0_15] : memref<1x512xf32, #tpu.memory_space<vmem>>, vector<1x512xf32>
    %19 = vector.broadcast %18 : vector<1x512xf32> to vector<32x512xf32>
    %20 = arith.addf %17, %19 : vector<32x512xf32>
    %cst_16 = arith.constant 0.000000e+00 : f32
    %21 = vector.broadcast %cst_16 : f32 to vector<32x512xf32>
    %22 = arith.maximumf %20, %21 : vector<32x512xf32>
    %23 = arith.truncf %22 : vector<32x512xf32> to vector<32x512xbf16>
    %c0_17 = arith.constant 0 : index
    %c0_18 = arith.constant 0 : index
    %24 = vector.load %arg8[%c0_17, %c0_18] : memref<512x1376xbf16, #tpu.memory_space<vmem>>, vector<512x1376xbf16>
    %cst_19 = arith.constant dense<0.000000e+00> : vector<32x1376xf32>
    %25 = tpu.matmul %23, %24, %cst_19 {dimension_numbers = #tpu.dot_dimension_numbers<[1], [0], [0], [1], [0, 0, 1, 1], [], []>} : vector<32x512xbf16>, vector<512x1376xbf16>, vector<32x1376xf32> -> vector<32x1376xf32>
    %c0_20 = arith.constant 0 : index
    %c0_21 = arith.constant 0 : index
    %26 = vector.load %arg9[%c0_20, %c0_21] : memref<1x1376xf32, #tpu.memory_space<vmem>>, vector<1x1376xf32>
    %27 = vector.broadcast %26 : vector<1x1376xf32> to vector<32x1376xf32>
    %28 = arith.addf %25, %27 : vector<32x1376xf32>
    %c0_22 = arith.constant 0 : index
    %c0_23 = arith.constant 0 : index
    %29 = vector.load %arg10[%c0_22, %c0_23] : memref<32x1376xf32, #tpu.memory_space<vmem>>, vector<32x1376xf32>
    tpu.vector_store %arg10[%c0_22, %c0_23], %28 {strides = array<i32>} : memref<32x1376xf32, #tpu.memory_space<vmem>>, vector<32x1376xf32>,
    return
  }
  func.func @transform_0(%arg0: i32) -> (i32, i32) {
    %c0_i32 = arith.constant 0 : i32
    %c0_i32_0 = arith.constant 0 : i32
    return %arg0, %c0_i32 : i32, i32
  }
  func.func @transform_1(%arg0: i32) -> (i32, i32) {
    %c0_i32 = arith.constant 0 : i32
    %c0_i32_0 = arith.constant 0 : i32
    %c0_i32_1 = arith.constant 0 : i32
    return %c0_i32, %c0_i32_0 : i32, i32
  }
  func.func @transform_2(%arg0: i32) -> (i32, i32) {
    %c0_i32 = arith.constant 0 : i32
    %c0_i32_0 = arith.constant 0 : i32
    %c0_i32_1 = arith.constant 0 : i32
    return %c0_i32, %c0_i32_0 : i32, i32
  }
  func.func @transform_3(%arg0: i32) -> (i32, i32) {
    %c0_i32 = arith.constant 0 : i32
    %c0_i32_0 = arith.constant 0 : i32
    %c0_i32_1 = arith.constant 0 : i32
    return %c0_i32, %c0_i32_0 : i32, i32
  }
  func.func @transform_4(%arg0: i32) -> (i32, i32) {
    %c0_i32 = arith.constant 0 : i32
    %c0_i32_0 = arith.constant 0 : i32
    %c0_i32_1 = arith.constant 0 : i32
    return %c0_i32, %c0_i32_0 : i32, i32
  }
  func.func @transform_5(%arg0: i32) -> (i32, i32) {
    %c0_i32 = arith.constant 0 : i32
    %c0_i32_0 = arith.constant 0 : i32
    %c0_i32_1 = arith.constant 0 : i32
    return %c0_i32, %c0_i32_0 : i32, i32
  }
  func.func @transform_6(%arg0: i32) -> (i32, i32) {
    %c0_i32 = arith.constant 0 : i32
    %c0_i32_0 = arith.constant 0 : i32
    %c0_i32_1 = arith.constant 0 : i32
    return %c0_i32, %c0_i32_0 : i32, i32
  }
  func.func @transform_7(%arg0: i32) -> (i32, i32) {
    %c0_i32 = arith.constant 0 : i32
    %c0_i32_0 = arith.constant 0 : i32
    %c0_i32_1 = arith.constant 0 : i32
    return %c0_i32, %c0_i32_0 : i32, i32
  }
  func.func @transform_8(%arg0: i32) -> (i32, i32) {
    %c0_i32 = arith.constant 0 : i32
    %c0_i32_0 = arith.constant 0 : i32
    %c0_i32_1 = arith.constant 0 : i32
    return %c0_i32, %c0_i32_0 : i32, i32
  }
  func.func @transform_9(%arg0: i32) -> (i32, i32) {
    %c0_i32 = arith.constant 0 : i32
    %c0_i32_0 = arith.constant 0 : i32
    return %arg0, %c0_i32 : i32, i32
  }
}

</mosaic_0001>

<llo_original>
// kernel: _forward_impl.1
$region0: #{_forward_impl.1}
  #allocation0 [shape = 'u32[]', space=smem, size = 0x4, offset = 0x4, fixed_abs, tag = 'smem constant byte address 0x4 - core index']
  #allocation1 [shape = 'u32[72,128]{1,0:T(1,128)}', space=vmem, size = 0x9000, scoped, tag = 'internal scratch']
  %s0 = inlined_call_operand.vmem [shape: f32[64,1376], index: 0, kind: input, shape index: {}]
  %s1 = inlined_call_operand.vmem [shape: bf16[1376,512], index: 1, kind: input, shape index: {}]
  %s2 = inlined_call_operand.vmem [shape: f32[1,512], index: 2, kind: input, shape index: {}]
  %s3 = inlined_call_operand.vmem [shape: bf16[512,128], index: 3, kind: input, shape index: {}]
  %s4 = inlined_call_operand.vmem [shape: f32[1,128], index: 4, kind: input, shape index: {}]
  %s5 = inlined_call_operand.vmem [shape: bf16[128,512], index: 5, kind: input, shape index: {}]
  %s6 = inlined_call_operand.vmem [shape: f32[1,512], index: 6, kind: input, shape index: {}]
  %s7 = inlined_call_operand.vmem [shape: bf16[512,1376], index: 7, kind: input, shape index: {}]
  %s8 = inlined_call_operand.vmem [shape: f32[1,1376], index: 8, kind: input, shape index: {}]
  %s9 = inlined_call_operand.vmem [shape: f32[64,1376], index: 9, kind: output, shape index: {}]
  %s10 = sld [smem:[#allocation0]]
  $region69: #{_forward_impl.1} parent=0
    _
  %s12 = ssub.s32 1, %s10
  %s13 = scalar_select 0, %s12, %s10
  loop: start=0, step=1, limit=4
  $region2: #{_forward_impl.1} parent=0 // loop_pre_header
    _
  $region3: #{_forward_impl.1} parent=0 // loop_header
    %s15 = sphi 0, %s19
    %p16 = scmp.ge.s32.totalorder %s15, 4
    %s25 = sphi 0, %s27
    %s28 = sphi 0, %s25
    %s29 = sphi 0, %s28
    %s45 = sphi 0, %s29
    %s49 = sphi 0, %s49
    %s51 = sphi 0, %s49
    %s52 = sphi 0, %s51
    %s66 = sphi 0, %s52
    %s70 = sphi 0, %s70
    %s72 = sphi 0, %s70
    %s73 = sphi 0, %s72
    %s87 = sphi 0, %s73
    %s91 = sphi 0, %s91
    %s93 = sphi 0, %s91
    %s94 = sphi 0, %s93
    %s108 = sphi 0, %s94
    %s112 = sphi 0, %s112
    %s114 = sphi 0, %s112
    %s115 = sphi 0, %s114
    %s129 = sphi 0, %s115
    %s133 = sphi 0, %s133
    %s135 = sphi 0, %s133
    %s136 = sphi 0, %s135
    %s150 = sphi 0, %s136
    %s154 = sphi 0, %s154
    %s156 = sphi 0, %s154
    %s157 = sphi 0, %s156
    %s171 = sphi 0, %s157
    %s175 = sphi 0, %s175
    %s177 = sphi 0, %s175
    %s178 = sphi 0, %s177
    %s192 = sphi 0, %s178
    %s196 = sphi 0, %s196
    %s198 = sphi 0, %s196
    %s199 = sphi 0, %s198
    %s213 = sphi 0, %s199
    %s219 = sphi 0, %s221
    %s222 = sphi 0, %s219
    %s223 = sphi 0, %s222
    %s239 = sphi 0, %s223
  $region4: #{_forward_impl.1} parent=0 // loop_header_branch
    %18 = sbr.rel (%p16) target = $region8
  $region5: #{_forward_impl.1} parent=0 // loop_body
    %s20 = ssub.s32 %s15, 1
    %s21 = ssub.s32 %s15, 2
    %s22 = sadd.s32 %s15, 1
    %s23 = ssub.s32 %s15, %s22
    %p24 = scmp.eq.s32.totalorder %s23, 0
    %s26 = sadd.s32 %s25, 1
    %s27 = scalar_select %p24, %s25, %s26
    %p30 = pneg %p24
    %p31 = scmp.eq.s32.totalorder %s15, 1
    %p32 = por %p30, %p31
    %p33 = scmp.ne.s32.totalorder %s25, %s28
    %p34 = scmp.eq.s32.totalorder %s15, 0
    %p35 = por %p33, %p34
    %p36 = scmp.ne.s32.totalorder %s25, %s28
    %p37 = scmp.eq.s32.totalorder %s20, 1
    %p38 = por %p36, %p37
    %p39 = scmp.ne.s32.totalorder %s28, %s29
    %p40 = scmp.eq.s32.totalorder %s20, 0
    %p41 = por %p39, %p40
    %p42 = scmp.ne.s32.totalorder %s28, %s29
    %p43 = scmp.eq.s32.totalorder %s21, 1
    %p44 = por %p42, %p43
    %p46 = scmp.ne.s32.totalorder %s29, %s45
    %p47 = scmp.eq.s32.totalorder %s21, 0
    %p48 = por %p46, %p47
    %s50 = sadd.s32 %s49, 1
    %p53 = scmp.eq.s32.totalorder %s15, 1
    %p54 = scmp.ne.s32.totalorder %s49, %s51
    %p55 = scmp.eq.s32.totalorder %s15, 0
    %p56 = por %p54, %p55
    %p57 = scmp.ne.s32.totalorder %s49, %s51
    %p58 = scmp.eq.s32.totalorder %s20, 1
    %p59 = por %p57, %p58
    %p60 = scmp.ne.s32.totalorder %s51, %s52
    %p61 = scmp.eq.s32.totalorder %s20, 0
    %p62 = por %p60, %p61
    %p63 = scmp.ne.s32.totalorder %s51, %s52
    %p64 = scmp.eq.s32.totalorder %s21, 1
    %p65 = por %p63, %p64
    %p67 = scmp.ne.s32.totalorder %s52, %s66
    %p68 = scmp.eq.s32.totalorder %s21, 0
    %p69 = por %p67, %p68
    %s71 = sadd.s32 %s70, 1
    %p74 = scmp.eq.s32.totalorder %s15, 1
    %p75 = scmp.ne.s32.totalorder %s70, %s72
    %p76 = scmp.eq.s32.totalorder %s15, 0
    %p77 = por %p75, %p76
    %p78 = scmp.ne.s32.totalorder %s70, %s72
    %p79 = scmp.eq.s32.totalorder %s20, 1
    %p80 = por %p78, %p79
    %p81 = scmp.ne.s32.totalorder %s72, %s73
    %p82 = scmp.eq.s32.totalorder %s20, 0
    %p83 = por %p81, %p82
    %p84 = scmp.ne.s32.totalorder %s72, %s73
    %p85 = scmp.eq.s32.totalorder %s21, 1
    %p86 = por %p84, %p85
    %p88 = scmp.ne.s32.totalorder %s73, %s87
    %p89 = scmp.eq.s32.totalorder %s21, 0
    %p90 = por %p88, %p89
    %s92 = sadd.s32 %s91, 1
    %p95 = scmp.eq.s32.totalorder %s15, 1
    %p96 = scmp.ne.s32.totalorder %s91, %s93
    %p97 = scmp.eq.s32.totalorder %s15, 0
    %p98 = por %p96, %p97
    %p99 = scmp.ne.s32.totalorder %s91, %s93
    %p100 = scmp.eq.s32.totalorder %s20, 1
    %p101 = por %p99, %p100
    %p102 = scmp.ne.s32.totalorder %s93, %s94
    %p103 = scmp.eq.s32.totalorder %s20, 0
    %p104 = por %p102, %p103
    %p105 = scmp.ne.s32.totalorder %s93, %s94
    %p106 = scmp.eq.s32.totalorder %s21, 1
    %p107 = por %p105, %p106
    %p109 = scmp.ne.s32.totalorder %s94, %s108
    %p110 = scmp.eq.s32.totalorder %s21, 0
    %p111 = por %p109, %p110
    %s113 = sadd.s32 %s112, 1
    %p116 = scmp.eq.s32.totalorder %s15, 1
    %p117 = scmp.ne.s32.totalorder %s112, %s114
    %p118 = scmp.eq.s32.totalorder %s15, 0
    %p119 = por %p117, %p118
    %p120 = scmp.ne.s32.totalorder %s112, %s114
    %p121 = scmp.eq.s32.totalorder %s20, 1
    %p122 = por %p120, %p121
    %p123 = scmp.ne.s32.totalorder %s114, %s115
    %p124 = scmp.eq.s32.totalorder %s20, 0
    %p125 = por %p123, %p124
    %p126 = scmp.ne.s32.totalorder %s114, %s115
    %p127 = scmp.eq.s32.totalorder %s21, 1
    %p128 = por %p126, %p127
    %p130 = scmp.ne.s32.totalorder %s115, %s129
    %p131 = scmp.eq.s32.totalorder %s21, 0
    %p132 = por %p130, %p131
    %s134 = sadd.s32 %s133, 1
    %p137 = scmp.eq.s32.totalorder %s15, 1
    %p138 = scmp.ne.s32.totalorder %s133, %s135
    %p139 = scmp.eq.s32.totalorder %s15, 0
    %p140 = por %p138, %p139
    %p141 = scmp.ne.s32.totalorder %s133, %s135
    %p142 = scmp.eq.s32.totalorder %s20, 1
    %p143 = por %p141, %p142
    %p144 = scmp.ne.s32.totalorder %s135, %s136
    %p145 = scmp.eq.s32.totalorder %s20, 0
    %p146 = por %p144, %p145
    %p147 = scmp.ne.s32.totalorder %s135, %s136
    %p148 = scmp.eq.s32.totalorder %s21, 1
    %p149 = por %p147, %p148
    %p151 = scmp.ne.s32.totalorder %s136, %s150
    %p152 = scmp.eq.s32.totalorder %s21, 0
    %p153 = por %p151, %p152
    %s155 = sadd.s32 %s154, 1
    %p158 = scmp.eq.s32.totalorder %s15, 1
    %p159 = scmp.ne.s32.totalorder %s154, %s156
    %p160 = scmp.eq.s32.totalorder %s15, 0
    %p161 = por %p159, %p160
    %p162 = scmp.ne.s32.totalorder %s154, %s156
    %p163 = scmp.eq.s32.totalorder %s20, 1
    %p164 = por %p162, %p163
    %p165 = scmp.ne.s32.totalorder %s156, %s157
    %p166 = scmp.eq.s32.totalorder %s20, 0
    %p167 = por %p165, %p166
    %p168 = scmp.ne.s32.totalorder %s156, %s157
    %p169 = scmp.eq.s32.totalorder %s21, 1
    %p170 = por %p168, %p169
    %p172 = scmp.ne.s32.totalorder %s157, %s171
    %p173 = scmp.eq.s32.totalorder %s21, 0
    %p174 = por %p172, %p173
    %s176 = sadd.s32 %s175, 1
    %p179 = scmp.eq.s32.totalorder %s15, 1
    %p180 = scmp.ne.s32.totalorder %s175, %s177
    %p181 = scmp.eq.s32.totalorder %s15, 0
    %p182 = por %p180, %p181
    %p183 = scmp.ne.s32.totalorder %s175, %s177
    %p184 = scmp.eq.s32.totalorder %s20, 1
    %p185 = por %p183, %p184
    %p186 = scmp.ne.s32.totalorder %s177, %s178
    %p187 = scmp.eq.s32.totalorder %s20, 0
    %p188 = por %p186, %p187
    %p189 = scmp.ne.s32.totalorder %s177, %s178
    %p190 = scmp.eq.s32.totalorder %s21, 1
    %p191 = por %p189, %p190
    %p193 = scmp.ne.s32.totalorder %s178, %s192
    %p194 = scmp.eq.s32.totalorder %s21, 0
    %p195 = por %p193, %p194
    %s197 = sadd.s32 %s196, 1
    %p200 = scmp.eq.s32.totalorder %s15, 1
    %p201 = scmp.ne.s32.totalorder %s196, %s198
    %p202 = scmp.eq.s32.totalorder %s15, 0
    %p203 = por %p201, %p202
    %p204 = scmp.ne.s32.totalorder %s196, %s198
    %p205 = scmp.eq.s32.totalorder %s20, 1
    %p206 = por %p204, %p205
    %p207 = scmp.ne.s32.totalorder %s198, %s199
    %p208 = scmp.eq.s32.totalorder %s20, 0
    %p209 = por %p207, %p208
    %p210 = scmp.ne.s32.totalorder %s198, %s199
    %p211 = scmp.eq.s32.totalorder %s21, 1
    %p212 = por %p210, %p211
    %p214 = scmp.ne.s32.totalorder %s199, %s213
    %p215 = scmp.eq.s32.totalorder %s21, 0
    %p216 = por %p214, %p215
    %s217 = ssub.s32 %s15, %s22
    %p218 = scmp.eq.s32.totalorder %s217, 0
    %s220 = sadd.s32 %s219, 1
    %s221 = scalar_select %p218, %s219, %s220
    %p224 = pneg %p218
    %p225 = scmp.eq.s32.totalorder %s15, 1
    %p226 = por %p224, %p225
    %p227 = scmp.ne.s32.totalorder %s219, %s222
    %p228 = scmp.eq.s32.totalorder %s15, 0
    %p229 = por %p227, %p228
    %p230 = scmp.ne.s32.totalorder %s219, %s222
    %p231 = scmp.eq.s32.totalorder %s20, 1
    %p232 = por %p230, %p231
    %p233 = scmp.ne.s32.totalorder %s222, %s223
    %p234 = scmp.eq.s32.totalorder %s20, 0
    %p235 = por %p233, %p234
    %p236 = scmp.ne.s32.totalorder %s222, %s223
    %p237 = scmp.eq.s32.totalorder %s21, 1
    %p238 = por %p236, %p237
    %p240 = scmp.ne.s32.totalorder %s223, %s239
    %p241 = scmp.eq.s32.totalorder %s21, 0
    %p242 = por %p240, %p241
    %p243 = scmp.le.s32.totalorder 1, %s15
    %p244 = scmp.lt.s32.totalorder %s15, 3
    %p245 = pnand %p243, %p244
    %p246 = pneg %p245
    // Predicated region
    $region9: #{_forward_impl.1} parent=5 // pred_check
      _
    $region10: #{_forward_impl.1} parent=5 // pred_check_branch
      %248 = sbr.rel (%p245) target = $region12
    $region11: #{_forward_impl.1} parent=5 // pred_region
      %s249 = ssub.s32 %s15, 1
      // Predicated region
      $region13: #{_forward_impl.1} parent=11 // pred_check
        %p250 = pneg %p62
      $region14: #{_forward_impl.1} parent=11 // pred_check_branch
        %252 = sbr.rel (%p250) target = $region16
      $region15: #{_forward_impl.1} parent=11 // pred_region
        _
      $region16: #{_forward_impl.1} parent=11 // pred_fallthru
        _
      // Predicated region
      $region17: #{_forward_impl.1} parent=11 // pred_check
        %p253 = pneg %p83
      $region18: #{_forward_impl.1} parent=11 // pred_check_branch
        %255 = sbr.rel (%p253) target = $region20
      $region19: #{_forward_impl.1} parent=11 // pred_region
        _
      $region20: #{_forward_impl.1} parent=11 // pred_fallthru
        _
      // Predicated region
      $region21: #{_forward_impl.1} parent=11 // pred_check
        %p256 = pneg %p104
      $region22: #{_forward_impl.1} parent=11 // pred_check_branch
        %258 = sbr.rel (%p256) target = $region24
      $region23: #{_forward_impl.1} parent=11 // pred_region
        _
      $region24: #{_forward_impl.1} parent=11 // pred_fallthru
        _
      // Predicated region
      $region25: #{_forward_impl.1} parent=11 // pred_check
        %p259 = pneg %p125
      $region26: #{_forward_impl.1} parent=11 // pred_check_branch
        %261 = sbr.rel (%p259) target = $region28
      $region27: #{_forward_impl.1} parent=11 // pred_region
        _
      $region28: #{_forward_impl.1} parent=11 // pred_fallthru
        _
      // Predicated region
      $region29: #{_forward_impl.1} parent=11 // pred_check
        %p262 = pneg %p146
      $region30: #{_forward_impl.1} parent=11 // pred_check_branch
        %264 = sbr.rel (%p262) target = $region32
      $region31: #{_forward_impl.1} parent=11 // pred_region
        _
      $region32: #{_forward_impl.1} parent=11 // pred_fallthru
        _
      // Predicated region
      $region33: #{_forward_impl.1} parent=11 // pred_check
        %p265 = pneg %p167
      $region34: #{_forward_impl.1} parent=11 // pred_check_branch
        %267 = sbr.rel (%p265) target = $region36
      $region35: #{_forward_impl.1} parent=11 // pred_region
        _
      $region36: #{_forward_impl.1} parent=11 // pred_fallthru
        _
      // Predicated region
      $region37: #{_forward_impl.1} parent=11 // pred_check
        %p268 = pneg %p188
      $region38: #{_forward_impl.1} parent=11 // pred_check_branch
        %270 = sbr.rel (%p268) target = $region40
      $region39: #{_forward_impl.1} parent=11 // pred_region
        _
      $region40: #{_forward_impl.1} parent=11 // pred_fallthru
        _
      // Predicated region
      $region41: #{_forward_impl.1} parent=11 // pred_check
        %p271 = pneg %p209
      $region42: #{_forward_impl.1} parent=11 // pred_check_branch
        %273 = sbr.rel (%p271) target = $region44
      $region43: #{_forward_impl.1} parent=11 // pred_region
        _
      $region44: #{_forward_impl.1} parent=11 // pred_fallthru
        _
    $region12: #{_forward_impl.1} parent=5 // pred_fallthru
      _
    %p274 = scmp.lt.s32.totalorder %s15, 2
    // Predicated region
    $region45: #{_forward_impl.1} parent=5 // pred_check
      %p275 = pneg %p274
    $region46: #{_forward_impl.1} parent=5 // pred_check_branch
      %277 = sbr.rel (%p275) target = $region48
    $region47: #{_forward_impl.1} parent=5 // pred_region
      // Predicated region
      $region49: #{_forward_impl.1} parent=47 // pred_check
        %p278 = pneg %p35
      $region50: #{_forward_impl.1} parent=47 // pred_check_branch
        %280 = sbr.rel (%p278) target = $region52
      $region51: #{_forward_impl.1} parent=47 // pred_region
        %s281 = smul.u32 4, %s15
        %p282 = scmp.lt.s32.totalorder %s281, 7
        %s283 = scalar_select %p282, %s281, 7
        %s284 = smul.addr %s283, 11
        %s285 = smul.addr %s284, 8
        %s286 = scalar_lea.vmem %s0, %s285
        %s287 = smul.u32 4, %s15
      $region52: #{_forward_impl.1} parent=47 // pred_fallthru
        _
    $region48: #{_forward_impl.1} parent=5 // pred_fallthru
      _
    %p288 = scmp.le.s32.totalorder 1, %s15
    %p289 = scmp.lt.s32.totalorder %s15, 3
    %p290 = pnand %p288, %p289
    %p291 = pneg %p290
    // Predicated region
    $region53: #{_forward_impl.1} parent=5 // pred_check
      _
    $region54: #{_forward_impl.1} parent=5 // pred_check_branch
      %293 = sbr.rel (%p290) target = $region56
    $region55: #{_forward_impl.1} parent=5 // pred_region
      %s294 = ssub.s32 %s15, 1
      %s295 = smul.u32 4, %s20
      %p296 = scmp.lt.s32.totalorder %s295, 7
      %s297 = scalar_select %p296, %s295, 7
      %s298 = smul.addr %s297, 11
      %s299 = smul.addr %s298, 8
      %s300 = scalar_lea.vmem %s0, %s299
      %p301 = pneg %p41
      %p302 = pneg %p38
      %p303 = pneg %p62
      %p304 = pneg %p59
      %p305 = pneg %p83
      %p306 = pneg %p80
      %p307 = pneg %p104
      %p308 = pneg %p101
      %p309 = pneg %p125
      %p310 = pneg %p122
      %p311 = pneg %p146
      %p312 = pneg %p143
      %p313 = pneg %p167
      %p314 = pneg %p164
      %p315 = pneg %p188
      %p316 = pneg %p185
      %p317 = pneg %p209
      %p318 = pneg %p206
      %p319 = pneg %p235
      %p320 = pneg %p232
      %s321 = smul.u32 4, %s20
      %p322 = scmp.lt.s32.totalorder %s321, 7
      %s323 = scalar_select %p322, %s321, 7
      %s324 = smul.addr %s323, 11
      %s325 = smul.addr %s324, 8
      %s326 = scalar_lea.vmem %s9, %s325
      %s327 = smul.u32 4, %s20
      %p328 = scmp.lt.s32.totalorder %s327, 7
      %s329 = scalar_select %p328, %s327, 7
      %s330 = smul.addr %s329, 11
      %s331 = smul.addr %s330, 8
      %s332 = scalar_lea.vmem %s0, %s331
      %s333 = smul.u32 4, %s20
      %s334 = smul.u32 4, %s20
      %p335 = scmp.lt.s32.totalorder %s334, 7
      %s336 = scalar_select %p335, %s334, 7
      %s337 = smul.addr %s336, 11
      %s338 = smul.addr %s337, 8
      %s339 = scalar_lea.vmem %s9, %s338
      %s340 = smul.u32 4, %s20
      %v342 = vld [vmem:[%s332] sm:$0xff]
      %v343 = vld [vmem:[%s332 + $0x8] sm:$0xff]
      %v344 = vld [vmem:[%s332 + $0x10] sm:$0xff]
      %v345 = vld [vmem:[%s332 + $0x18] sm:$0xff]
      %v346 = vld [vmem:[%s332 + $0x20] sm:$0xff]
      %v347 = vld [vmem:[%s332 + $0x28] sm:$0xff]
      %v348 = vld [vmem:[%s332 + $0x30] sm:$0xff]
      %v349 = vld [vmem:[%s332 + $0x38] sm:$0xff]
      %v350 = vld [vmem:[%s332 + $0x40] sm:$0xff]
      %v351 = vld [vmem:[%s332 + $0x48] sm:$0xff]
      %v352 = vld [vmem:[%s332 + $0x50] sm:$0xff]
      %v353 = vld [vmem:[%s332 + $0x58] sm:$0xff]
      %v354 = vld [vmem:[%s332 + $0x60] sm:$0xff]
      %v355 = vld [vmem:[%s332 + $0x68] sm:$0xff]
      %v356 = vld [vmem:[%s332 + $0x70] sm:$0xff]
      %v357 = vld [vmem:[%s332 + $0x78] sm:$0xff]
      %v358 = vld [vmem:[%s332 + $0x80] sm:$0xff]
      %v359 = vld [vmem:[%s332 + $0x88] sm:$0xff]
      %v360 = vld [vmem:[%s332 + $0x90] sm:$0xff]
      %v361 = vld [vmem:[%s332 + $0x98] sm:$0xff]
      %v362 = vld [vmem:[%s332 + $0xa0] sm:$0xff]
      %v363 = vld [vmem:[%s332 + $0xa8] sm:$0xff]
      %v364 = vld [vmem:[%s332 + $0xb0] sm:$0xff]
      %v365 = vld [vmem:[%s332 + $0xb8] sm:$0xff]
      %v366 = vld [vmem:[%s332 + $0xc0] sm:$0xff]
      %v367 = vld [vmem:[%s332 + $0xc8] sm:$0xff]
      %v368 = vld [vmem:[%s332 + $0xd0] sm:$0xff]
      %v369 = vld [vmem:[%s332 + $0xd8] sm:$0xff]
      %v370 = vld [vmem:[%s332 + $0xe0] sm:$0xff]
      %v371 = vld [vmem:[%s332 + $0xe8] sm:$0xff]
      %v372 = vld [vmem:[%s332 + $0xf0] sm:$0xff]
      %v373 = vld [vmem:[%s332 + $0xf8] sm:$0xff]
      %v374 = vld [vmem:[%s332 + $0x100] sm:$0xff]
      %v375 = vld [vmem:[%s332 + $0x108] sm:$0xff]
      %v376 = vld [vmem:[%s332 + $0x110] sm:$0xff]
      %v377 = vld [vmem:[%s332 + $0x118] sm:$0xff]
      %v378 = vld [vmem:[%s332 + $0x120] sm:$0xff]
      %v379 = vld [vmem:[%s332 + $0x128] sm:$0xff]
      %v380 = vld [vmem:[%s332 + $0x130] sm:$0xff]
      %v381 = vld [vmem:[%s332 + $0x138] sm:$0xff]
      %v382 = vld [vmem:[%s332 + $0x140] sm:$0xff]
      %v383 = vld [vmem:[%s332 + $0x148] sm:$0xff]
      %v384 = vld [vmem:[%s332 + $0x150] sm:$0xff]
      %v385 = vld [vmem:[%s332 + $0x158] sm:$0xff]
      %v386 = vpack.c.bf16 %v353, %v342
      %v387 = vpack.c.bf16 %v354, %v343
      %v388 = vpack.c.bf16 %v355, %v344
      %v389 = vpack.c.bf16 %v356, %v345
      %v390 = vpack.c.bf16 %v357, %v346
      %v391 = vpack.c.bf16 %v358, %v347
      %v392 = vpack.c.bf16 %v359, %v348
      %v393 = vpack.c.bf16 %v360, %v349
      %v394 = vpack.c.bf16 %v361, %v350
      %v395 = vpack.c.bf16 %v362, %v351
      %v396 = vpack.c.bf16 %v363, %v352
      %v397 = vpack.c.bf16 %v375, %v364
      %v398 = vpack.c.bf16 %v376, %v365
      %v399 = vpack.c.bf16 %v377, %v366
      %v400 = vpack.c.bf16 %v378, %v367
      %v401 = vpack.c.bf16 %v379, %v368
      %v402 = vpack.c.bf16 %v380, %v369
      %v403 = vpack.c.bf16 %v381, %v370
      %v404 = vpack.c.bf16 %v382, %v371
      %v405 = vpack.c.bf16 %v383, %v372
      %v406 = vpack.c.bf16 %v384, %v373
      %v407 = vpack.c.bf16 %v385, %v374
      %v408 = vld [vmem:[%s1] sm:$0xff]
      %v409 = vld [vmem:[%s1 + $0x8] sm:$0xff]
      %v410 = vld [vmem:[%s1 + $0x10] sm:$0xff]
      %v411 = vld [vmem:[%s1 + $0x18] sm:$0xff]
      %v412 = vld [vmem:[%s1 + $0x20] sm:$0xff]
      %v413 = vld [vmem:[%s1 + $0x28] sm:$0xff]
      %v414 = vld [vmem:[%s1 + $0x30] sm:$0xff]
      %v415 = vld [vmem:[%s1 + $0x38] sm:$0xff]
      %v416 = vld [vmem:[%s1 + $0x40] sm:$0xff]
      %v417 = vld [vmem:[%s1 + $0x48] sm:$0xff]
      %v418 = vld [vmem:[%s1 + $0x50] sm:$0xff]
      %v419 = vld [vmem:[%s1 + $0x58] sm:$0xff]
      %v420 = vld [vmem:[%s1 + $0x60] sm:$0xff]
      %v421 = vld [vmem:[%s1 + $0x68] sm:$0xff]
      %v422 = vld [vmem:[%s1 + $0x70] sm:$0xff]
      %v423 = vld [vmem:[%s1 + $0x78] sm:$0xff]
      %v424 = vld [vmem:[%s1 + $0x80] sm:$0xff]
      %v425 = vld [vmem:[%s1 + $0x88] sm:$0xff]
      %v426 = vld [vmem:[%s1 + $0x90] sm:$0xff]
      %v427 = vld [vmem:[%s1 + $0x98] sm:$0xff]
      %v428 = vld [vmem:[%s1 + $0xa0] sm:$0xff]
      %v429 = vld [vmem:[%s1 + $0xa8] sm:$0xff]
      %v430 = vld [vmem:[%s1 + $0xb0] sm:$0xff]
      %v431 = vld [vmem:[%s1 + $0xb8] sm:$0xff]
      %v432 = vld [vmem:[%s1 + $0xc0] sm:$0xff]
      %v433 = vld [vmem:[%s1 + $0xc8] sm:$0xff]
      %v434 = vld [vmem:[%s1 + $0xd0] sm:$0xff]
      %v435 = vld [vmem:[%s1 + $0xd8] sm:$0xff]
      %v436 = vld [vmem:[%s1 + $0xe0] sm:$0xff]
      %v437 = vld [vmem:[%s1 + $0xe8] sm:$0xff]
      %v438 = vld [vmem:[%s1 + $0xf0] sm:$0xff]
      %v439 = vld [vmem:[%s1 + $0xf8] sm:$0xff]
      %v440 = vld [vmem:[%s1 + $0x100] sm:$0xff]
      %v441 = vld [vmem:[%s1 + $0x108] sm:$0xff]
      %v442 = vld [vmem:[%s1 + $0x110] sm:$0xff]
      %v443 = vld [vmem:[%s1 + $0x118] sm:$0xff]
      %v444 = vld [vmem:[%s1 + $0x120] sm:$0xff]
      %v445 = vld [vmem:[%s1 + $0x128] sm:$0xff]
      %v446 = vld [vmem:[%s1 + $0x130] sm:$0xff]
      %v447 = vld [vmem:[%s1 + $0x138] sm:$0xff]
      %v448 = vld [vmem:[%s1 + $0x140] sm:$0xff]
      %v449 = vld [vmem:[%s1 + $0x148] sm:$0xff]
      %v450 = vld [vmem:[%s1 + $0x150] sm:$0xff]
      %v451 = vld [vmem:[%s1 + $0x158] sm:$0xff]
      %v452 = vld [vmem:[%s1 + $0x160] sm:$0xff]
      %v453 = vld [vmem:[%s1 + $0x168] sm:$0xff]
      %v454 = vld [vmem:[%s1 + $0x170] sm:$0xff]
      %v455 = vld [vmem:[%s1 + $0x178] sm:$0xff]
      %v456 = vld [vmem:[%s1 + $0x180] sm:$0xff]
      %v457 = vld [vmem:[%s1 + $0x188] sm:$0xff]
      %v458 = vld [vmem:[%s1 + $0x190] sm:$0xff]
      %v459 = vld [vmem:[%s1 + $0x198] sm:$0xff]
      %v460 = vld [vmem:[%s1 + $0x1a0] sm:$0xff]
      %v461 = vld [vmem:[%s1 + $0x1a8] sm:$0xff]
      %v462 = vld [vmem:[%s1 + $0x1b0] sm:$0xff]
      %v463 = vld [vmem:[%s1 + $0x1b8] sm:$0xff]
      %v464 = vld [vmem:[%s1 + $0x1c0] sm:$0xff]
      %v465 = vld [vmem:[%s1 + $0x1c8] sm:$0xff]
      %v466 = vld [vmem:[%s1 + $0x1d0] sm:$0xff]
      %v467 = vld [vmem:[%s1 + $0x1d8] sm:$0xff]
      %v468 = vld [vmem:[%s1 + $0x1e0] sm:$0xff]
      %v469 = vld [vmem:[%s1 + $0x1e8] sm:$0xff]
      %v470 = vld [vmem:[%s1 + $0x1f0] sm:$0xff]
      %v471 = vld [vmem:[%s1 + $0x1f8] sm:$0xff]
      %v472 = vld [vmem:[%s1 + $0x200] sm:$0xff]
      %v473 = vld [vmem:[%s1 + $0x208] sm:$0xff]
      %v474 = vld [vmem:[%s1 + $0x210] sm:$0xff]
      %v475 = vld [vmem:[%s1 + $0x218] sm:$0xff]
      %v476 = vld [vmem:[%s1 + $0x220] sm:$0xff]
      %v477 = vld [vmem:[%s1 + $0x228] sm:$0xff]
      %v478 = vld [vmem:[%s1 + $0x230] sm:$0xff]
      %v479 = vld [vmem:[%s1 + $0x238] sm:$0xff]
      %v480 = vld [vmem:[%s1 + $0x240] sm:$0xff]
      %v481 = vld [vmem:[%s1 + $0x248] sm:$0xff]
      %v482 = vld [vmem:[%s1 + $0x250] sm:$0xff]
      %v483 = vld [vmem:[%s1 + $0x258] sm:$0xff]
      %v484 = vld [vmem:[%s1 + $0x260] sm:$0xff]
      %v485 = vld [vmem:[%s1 + $0x268] sm:$0xff]
      %v486 = vld [vmem:[%s1 + $0x270] sm:$0xff]
      %v487 = vld [vmem:[%s1 + $0x278] sm:$0xff]
      %v488 = vld [vmem:[%s1 + $0x280] sm:$0xff]
      %v489 = vld [vmem:[%s1 + $0x288] sm:$0xff]
      %v490 = vld [vmem:[%s1 + $0x290] sm:$0xff]
      %v491 = vld [vmem:[%s1 + $0x298] sm:$0xff]
      %v492 = vld [vmem:[%s1 + $0x2a0] sm:$0xff]
      %v493 = vld [vmem:[%s1 + $0x2a8] sm:$0xff]
      %v494 = vld [vmem:[%s1 + $0x2b0] sm:$0xff]
      %v495 = vld [vmem:[%s1 + $0x2b8] sm:$0xff]
      %v496 = vld [vmem:[%s1 + $0x2c0] sm:$0xff]
      %v497 = vld [vmem:[%s1 + $0x2c8] sm:$0xff]
      %v498 = vld [vmem:[%s1 + $0x2d0] sm:$0xff]
      %v499 = vld [vmem:[%s1 + $0x2d8] sm:$0xff]
      %v500 = vld [vmem:[%s1 + $0x2e0] sm:$0xff]
      %v501 = vld [vmem:[%s1 + $0x2e8] sm:$0xff]
      %v502 = vld [vmem:[%s1 + $0x2f0] sm:$0xff]
      %v503 = vld [vmem:[%s1 + $0x2f8] sm:$0xff]
      %v504 = vld [vmem:[%s1 + $0x300] sm:$0xff]
      %v505 = vld [vmem:[%s1 + $0x308] sm:$0xff]
      %v506 = vld [vmem:[%s1 + $0x310] sm:$0xff]
      %v507 = vld [vmem:[%s1 + $0x318] sm:$0xff]
      %v508 = vld [vmem:[%s1 + $0x320] sm:$0xff]
      %v509 = vld [vmem:[%s1 + $0x328] sm:$0xff]
      %v510 = vld [vmem:[%s1 + $0x330] sm:$0xff]
      %v511 = vld [vmem:[%s1 + $0x338] sm:$0xff]
      %v512 = vld [vmem:[%s1 + $0x340] sm:$0xff]
      %v513 = vld [vmem:[%s1 + $0x348] sm:$0xff]
      %v514 = vld [vmem:[%s1 + $0x350] sm:$0xff]
      %v515 = vld [vmem:[%s1 + $0x358] sm:$0xff]
      %v516 = vld [vmem:[%s1 + $0x360] sm:$0xff]
      %v517 = vld [vmem:[%s1 + $0x368] sm:$0xff]
      %v518 = vld [vmem:[%s1 + $0x370] sm:$0xff]
      %v519 = vld [vmem:[%s1 + $0x378] sm:$0xff]
      %v520 = vld [vmem:[%s1 + $0x380] sm:$0xff]
      %v521 = vld [vmem:[%s1 + $0x388] sm:$0xff]
      %v522 = vld [vmem:[%s1 + $0x390] sm:$0xff]
      %v523 = vld [vmem:[%s1 + $0x398] sm:$0xff]
      %v524 = vld [vmem:[%s1 + $0x3a0] sm:$0xff]
      %v525 = vld [vmem:[%s1 + $0x3a8] sm:$0xff]
      %v526 = vld [vmem:[%s1 + $0x3b0] sm:$0xff]
      %v527 = vld [vmem:[%s1 + $0x3b8] sm:$0xff]
      %v528 = vld [vmem:[%s1 + $0x3c0] sm:$0xff]
      %v529 = vld [vmem:[%s1 + $0x3c8] sm:$0xff]
      %v530 = vld [vmem:[%s1 + $0x3d0] sm:$0xff]
      %v531 = vld [vmem:[%s1 + $0x3d8] sm:$0xff]
      %v532 = vld [vmem:[%s1 + $0x3e0] sm:$0xff]
      %v533 = vld [vmem:[%s1 + $0x3e8] sm:$0xff]
      %v534 = vld [vmem:[%s1 + $0x3f0] sm:$0xff]
      %v535 = vld [vmem:[%s1 + $0x3f8] sm:$0xff]
      %v536 = vld [vmem:[%s1 + $0x400] sm:$0xff]
      %v537 = vld [vmem:[%s1 + $0x408] sm:$0xff]
      %v538 = vld [vmem:[%s1 + $0x410] sm:$0xff]
      %v539 = vld [vmem:[%s1 + $0x418] sm:$0xff]
      %v540 = vld [vmem:[%s1 + $0x420] sm:$0xff]
      %v541 = vld [vmem:[%s1 + $0x428] sm:$0xff]
      %v542 = vld [vmem:[%s1 + $0x430] sm:$0xff]
      %v543 = vld [vmem:[%s1 + $0x438] sm:$0xff]
      %v544 = vld [vmem:[%s1 + $0x440] sm:$0xff]
      %v545 = vld [vmem:[%s1 + $0x448] sm:$0xff]
      %v546 = vld [vmem:[%s1 + $0x450] sm:$0xff]
      %v547 = vld [vmem:[%s1 + $0x458] sm:$0xff]
      %v548 = vld [vmem:[%s1 + $0x460] sm:$0xff]
      %v549 = vld [vmem:[%s1 + $0x468] sm:$0xff]
      %v550 = vld [vmem:[%s1 + $0x470] sm:$0xff]
      %v551 = vld [vmem:[%s1 + $0x478] sm:$0xff]
      %v552 = vld [vmem:[%s1 + $0x480] sm:$0xff]
      %v553 = vld [vmem:[%s1 + $0x488] sm:$0xff]
      %v554 = vld [vmem:[%s1 + $0x490] sm:$0xff]
      %v555 = vld [vmem:[%s1 + $0x498] sm:$0xff]
      %v556 = vld [vmem:[%s1 + $0x4a0] sm:$0xff]
      %v557 = vld [vmem:[%s1 + $0x4a8] sm:$0xff]
      %v558 = vld [vmem:[%s1 + $0x4b0] sm:$0xff]
      %v559 = vld [vmem:[%s1 + $0x4b8] sm:$0xff]
      %v560 = vld [vmem:[%s1 + $0x4c0] sm:$0xff]
      %v561 = vld [vmem:[%s1 + $0x4c8] sm:$0xff]
      %v562 = vld [vmem:[%s1 + $0x4d0] sm:$0xff]
      %v563 = vld [vmem:[%s1 + $0x4d8] sm:$0xff]
      %v564 = vld [vmem:[%s1 + $0x4e0] sm:$0xff]
      %v565 = vld [vmem:[%s1 + $0x4e8] sm:$0xff]
      %v566 = vld [vmem:[%s1 + $0x4f0] sm:$0xff]
      %v567 = vld [vmem:[%s1 + $0x4f8] sm:$0xff]
      %v568 = vld [vmem:[%s1 + $0x500] sm:$0xff]
      %v569 = vld [vmem:[%s1 + $0x508] sm:$0xff]
      %v570 = vld [vmem:[%s1 + $0x510] sm:$0xff]
      %v571 = vld [vmem:[%s1 + $0x518] sm:$0xff]
      %v572 = vld [vmem:[%s1 + $0x520] sm:$0xff]
      %v573 = vld [vmem:[%s1 + $0x528] sm:$0xff]
      %v574 = vld [vmem:[%s1 + $0x530] sm:$0xff]
      %v575 = vld [vmem:[%s1 + $0x538] sm:$0xff]
      %v576 = vld [vmem:[%s1 + $0x540] sm:$0xff]
      %v577 = vld [vmem:[%s1 + $0x548] sm:$0xff]
      %v578 = vld [vmem:[%s1 + $0x550] sm:$0xff]
      %v579 = vld [vmem:[%s1 + $0x558] sm:$0xff]
      %v580 = vld [vmem:[%s1 + $0x560] sm:$0xff]
      %v581 = vld [vmem:[%s1 + $0x568] sm:$0xff]
      %v582 = vld [vmem:[%s1 + $0x570] sm:$0xff]
      %v583 = vld [vmem:[%s1 + $0x578] sm:$0xff]
      %v584 = vld [vmem:[%s1 + $0x580] sm:$0xff]
      %v585 = vld [vmem:[%s1 + $0x588] sm:$0xff]
      %v586 = vld [vmem:[%s1 + $0x590] sm:$0xff]
      %v587 = vld [vmem:[%s1 + $0x598] sm:$0xff]
      %v588 = vld [vmem:[%s1 + $0x5a0] sm:$0xff]
      %v589 = vld [vmem:[%s1 + $0x5a8] sm:$0xff]
      %v590 = vld [vmem:[%s1 + $0x5b0] sm:$0xff]
      %v591 = vld [vmem:[%s1 + $0x5b8] sm:$0xff]
      %v592 = vld [vmem:[%s1 + $0x5c0] sm:$0xff]
      %v593 = vld [vmem:[%s1 + $0x5c8] sm:$0xff]
      %v594 = vld [vmem:[%s1 + $0x5d0] sm:$0xff]
      %v595 = vld [vmem:[%s1 + $0x5d8] sm:$0xff]
      %v596 = vld [vmem:[%s1 + $0x5e0] sm:$0xff]
      %v597 = vld [vmem:[%s1 + $0x5e8] sm:$0xff]
      %v598 = vld [vmem:[%s1 + $0x5f0] sm:$0xff]
      %v599 = vld [vmem:[%s1 + $0x5f8] sm:$0xff]
      %v600 = vld [vmem:[%s1 + $0x600] sm:$0xff]
      %v601 = vld [vmem:[%s1 + $0x608] sm:$0xff]
      %v602 = vld [vmem:[%s1 + $0x610] sm:$0xff]
      %v603 = vld [vmem:[%s1 + $0x618] sm:$0xff]
      %v604 = vld [vmem:[%s1 + $0x620] sm:$0xff]
      %v605 = vld [vmem:[%s1 + $0x628] sm:$0xff]
      %v606 = vld [vmem:[%s1 + $0x630] sm:$0xff]
      %v607 = vld [vmem:[%s1 + $0x638] sm:$0xff]
      %v608 = vld [vmem:[%s1 + $0x640] sm:$0xff]
      %v609 = vld [vmem:[%s1 + $0x648] sm:$0xff]
      %v610 = vld [vmem:[%s1 + $0x650] sm:$0xff]
      %v611 = vld [vmem:[%s1 + $0x658] sm:$0xff]
      %v612 = vld [vmem:[%s1 + $0x660] sm:$0xff]
      %v613 = vld [vmem:[%s1 + $0x668] sm:$0xff]
      %v614 = vld [vmem:[%s1 + $0x670] sm:$0xff]
      %v615 = vld [vmem:[%s1 + $0x678] sm:$0xff]
      %v616 = vld [vmem:[%s1 + $0x680] sm:$0xff]
      %v617 = vld [vmem:[%s1 + $0x688] sm:$0xff]
      %v618 = vld [vmem:[%s1 + $0x690] sm:$0xff]
      %v619 = vld [vmem:[%s1 + $0x698] sm:$0xff]
      %v620 = vld [vmem:[%s1 + $0x6a0] sm:$0xff]
      %v621 = vld [vmem:[%s1 + $0x6a8] sm:$0xff]
      %v622 = vld [vmem:[%s1 + $0x6b0] sm:$0xff]
      %v623 = vld [vmem:[%s1 + $0x6b8] sm:$0xff]
      %v624 = vld [vmem:[%s1 + $0x6c0] sm:$0xff]
      %v625 = vld [vmem:[%s1 + $0x6c8] sm:$0xff]
      %v626 = vld [vmem:[%s1 + $0x6d0] sm:$0xff]
      %v627 = vld [vmem:[%s1 + $0x6d8] sm:$0xff]
      %v628 = vld [vmem:[%s1 + $0x6e0] sm:$0xff]
      %v629 = vld [vmem:[%s1 + $0x6e8] sm:$0xff]
      %v630 = vld [vmem:[%s1 + $0x6f0] sm:$0xff]
      %v631 = vld [vmem:[%s1 + $0x6f8] sm:$0xff]
      %v632 = vld [vmem:[%s1 + $0x700] sm:$0xff]
      %v633 = vld [vmem:[%s1 + $0x708] sm:$0xff]
      %v634 = vld [vmem:[%s1 + $0x710] sm:$0xff]
      %v635 = vld [vmem:[%s1 + $0x718] sm:$0xff]
      %v636 = vld [vmem:[%s1 + $0x720] sm:$0xff]
      %v637 = vld [vmem:[%s1 + $0x728] sm:$0xff]
      %v638 = vld [vmem:[%s1 + $0x730] sm:$0xff]
      %v639 = vld [vmem:[%s1 + $0x738] sm:$0xff]
      %v640 = vld [vmem:[%s1 + $0x740] sm:$0xff]
      %v641 = vld [vmem:[%s1 + $0x748] sm:$0xff]
      %v642 = vld [vmem:[%s1 + $0x750] sm:$0xff]
      %v643 = vld [vmem:[%s1 + $0x758] sm:$0xff]
      %v644 = vld [vmem:[%s1 + $0x760] sm:$0xff]
      %v645 = vld [vmem:[%s1 + $0x768] sm:$0xff]
      %v646 = vld [vmem:[%s1 + $0x770] sm:$0xff]
      %v647 = vld [vmem:[%s1 + $0x778] sm:$0xff]
      %v648 = vld [vmem:[%s1 + $0x780] sm:$0xff]
      %v649 = vld [vmem:[%s1 + $0x788] sm:$0xff]
      %v650 = vld [vmem:[%s1 + $0x790] sm:$0xff]
      %v651 = vld [vmem:[%s1 + $0x798] sm:$0xff]
      %v652 = vld [vmem:[%s1 + $0x7a0] sm:$0xff]
      %v653 = vld [vmem:[%s1 + $0x7a8] sm:$0xff]
      %v654 = vld [vmem:[%s1 + $0x7b0] sm:$0xff]
      %v655 = vld [vmem:[%s1 + $0x7b8] sm:$0xff]
      %v656 = vld [vmem:[%s1 + $0x7c0] sm:$0xff]
      %v657 = vld [vmem:[%s1 + $0x7c8] sm:$0xff]
      %v658 = vld [vmem:[%s1 + $0x7d0] sm:$0xff]
      %v659 = vld [vmem:[%s1 + $0x7d8] sm:$0xff]
      %v660 = vld [vmem:[%s1 + $0x7e0] sm:$0xff]
      %v661 = vld [vmem:[%s1 + $0x7e8] sm:$0xff]
      %v662 = vld [vmem:[%s1 + $0x7f0] sm:$0xff]
      %v663 = vld [vmem:[%s1 + $0x7f8] sm:$0xff]
      %v664 = vld [vmem:[%s1 + $0x800] sm:$0xff]
      %v665 = vld [vmem:[%s1 + $0x808] sm:$0xff]
      %v666 = vld [vmem:[%s1 + $0x810] sm:$0xff]
      %v667 = vld [vmem:[%s1 + $0x818] sm:$0xff]
      %v668 = vld [vmem:[%s1 + $0x820] sm:$0xff]
      %v669 = vld [vmem:[%s1 + $0x828] sm:$0xff]
      %v670 = vld [vmem:[%s1 + $0x830] sm:$0xff]
      %v671 = vld [vmem:[%s1 + $0x838] sm:$0xff]
      %v672 = vld [vmem:[%s1 + $0x840] sm:$0xff]
      %v673 = vld [vmem:[%s1 + $0x848] sm:$0xff]
      %v674 = vld [vmem:[%s1 + $0x850] sm:$0xff]
      %v675 = vld [vmem:[%s1 + $0x858] sm:$0xff]
      %v676 = vld [vmem:[%s1 + $0x860] sm:$0xff]
      %v677 = vld [vmem:[%s1 + $0x868] sm:$0xff]
      %v678 = vld [vmem:[%s1 + $0x870] sm:$0xff]
      %v679 = vld [vmem:[%s1 + $0x878] sm:$0xff]
      %v680 = vld [vmem:[%s1 + $0x880] sm:$0xff]
      %v681 = vld [vmem:[%s1 + $0x888] sm:$0xff]
      %v682 = vld [vmem:[%s1 + $0x890] sm:$0xff]
      %v683 = vld [vmem:[%s1 + $0x898] sm:$0xff]
      %v684 = vld [vmem:[%s1 + $0x8a0] sm:$0xff]
      %v685 = vld [vmem:[%s1 + $0x8a8] sm:$0xff]
      %v686 = vld [vmem:[%s1 + $0x8b0] sm:$0xff]
      %v687 = vld [vmem:[%s1 + $0x8b8] sm:$0xff]
      %v688 = vld [vmem:[%s1 + $0x8c0] sm:$0xff]
      %v689 = vld [vmem:[%s1 + $0x8c8] sm:$0xff]
      %v690 = vld [vmem:[%s1 + $0x8d0] sm:$0xff]
      %v691 = vld [vmem:[%s1 + $0x8d8] sm:$0xff]
      %v692 = vld [vmem:[%s1 + $0x8e0] sm:$0xff]
      %v693 = vld [vmem:[%s1 + $0x8e8] sm:$0xff]
      %v694 = vld [vmem:[%s1 + $0x8f0] sm:$0xff]
      %v695 = vld [vmem:[%s1 + $0x8f8] sm:$0xff]
      %v696 = vld [vmem:[%s1 + $0x900] sm:$0xff]
      %v697 = vld [vmem:[%s1 + $0x908] sm:$0xff]
      %v698 = vld [vmem:[%s1 + $0x910] sm:$0xff]
      %v699 = vld [vmem:[%s1 + $0x918] sm:$0xff]
      %v700 = vld [vmem:[%s1 + $0x920] sm:$0xff]
      %v701 = vld [vmem:[%s1 + $0x928] sm:$0xff]
      %v702 = vld [vmem:[%s1 + $0x930] sm:$0xff]
      %v703 = vld [vmem:[%s1 + $0x938] sm:$0xff]
      %v704 = vld [vmem:[%s1 + $0x940] sm:$0xff]
      %v705 = vld [vmem:[%s1 + $0x948] sm:$0xff]
      %v706 = vld [vmem:[%s1 + $0x950] sm:$0xff]
      %v707 = vld [vmem:[%s1 + $0x958] sm:$0xff]
      %v708 = vld [vmem:[%s1 + $0x960] sm:$0xff]
      %v709 = vld [vmem:[%s1 + $0x968] sm:$0xff]
      %v710 = vld [vmem:[%s1 + $0x970] sm:$0xff]
      %v711 = vld [vmem:[%s1 + $0x978] sm:$0xff]
      %v712 = vld [vmem:[%s1 + $0x980] sm:$0xff]
      %v713 = vld [vmem:[%s1 + $0x988] sm:$0xff]
      %v714 = vld [vmem:[%s1 + $0x990] sm:$0xff]
      %v715 = vld [vmem:[%s1 + $0x998] sm:$0xff]
      %v716 = vld [vmem:[%s1 + $0x9a0] sm:$0xff]
      %v717 = vld [vmem:[%s1 + $0x9a8] sm:$0xff]
      %v718 = vld [vmem:[%s1 + $0x9b0] sm:$0xff]
      %v719 = vld [vmem:[%s1 + $0x9b8] sm:$0xff]
      %v720 = vld [vmem:[%s1 + $0x9c0] sm:$0xff]
      %v721 = vld [vmem:[%s1 + $0x9c8] sm:$0xff]
      %v722 = vld [vmem:[%s1 + $0x9d0] sm:$0xff]
      %v723 = vld [vmem:[%s1 + $0x9d8] sm:$0xff]
      %v724 = vld [vmem:[%s1 + $0x9e0] sm:$0xff]
      %v725 = vld [vmem:[%s1 + $0x9e8] sm:$0xff]
      %v726 = vld [vmem:[%s1 + $0x9f0] sm:$0xff]
      %v727 = vld [vmem:[%s1 + $0x9f8] sm:$0xff]
      %v728 = vld [vmem:[%s1 + $0xa00] sm:$0xff]
      %v729 = vld [vmem:[%s1 + $0xa08] sm:$0xff]
      %v730 = vld [vmem:[%s1 + $0xa10] sm:$0xff]
      %v731 = vld [vmem:[%s1 + $0xa18] sm:$0xff]
      %v732 = vld [vmem:[%s1 + $0xa20] sm:$0xff]
      %v733 = vld [vmem:[%s1 + $0xa28] sm:$0xff]
      %v734 = vld [vmem:[%s1 + $0xa30] sm:$0xff]
      %v735 = vld [vmem:[%s1 + $0xa38] sm:$0xff]
      %v736 = vld [vmem:[%s1 + $0xa40] sm:$0xff]
      %v737 = vld [vmem:[%s1 + $0xa48] sm:$0xff]
      %v738 = vld [vmem:[%s1 + $0xa50] sm:$0xff]
      %v739 = vld [vmem:[%s1 + $0xa58] sm:$0xff]
      %v740 = vld [vmem:[%s1 + $0xa60] sm:$0xff]
      %v741 = vld [vmem:[%s1 + $0xa68] sm:$0xff]
      %v742 = vld [vmem:[%s1 + $0xa70] sm:$0xff]
      %v743 = vld [vmem:[%s1 + $0xa78] sm:$0xff]
      %v744 = vld [vmem:[%s1 + $0xa80] sm:$0xff]
      %v745 = vld [vmem:[%s1 + $0xa88] sm:$0xff]
      %v746 = vld [vmem:[%s1 + $0xa90] sm:$0xff]
      %v747 = vld [vmem:[%s1 + $0xa98] sm:$0xff]
      %v748 = vld [vmem:[%s1 + $0xaa0] sm:$0xff]
      %v749 = vld [vmem:[%s1 + $0xaa8] sm:$0xff]
      %v750 = vld [vmem:[%s1 + $0xab0] sm:$0xff]
      %v751 = vld [vmem:[%s1 + $0xab8] sm:$0xff]
      %v752 = vld [vmem:[%s2] sm:$0xf]
      %v754 = vperm.slane %v752, 0
      %v755 = vperm.slane %v752, 1
      %v756 = vperm.slane %v752, 2
      %v757 = vperm.slane %v752, 3
      %v1106 = vunpack.c.l.b16 %v408
      %v1107 = vunpack.c.h.b16 %v408
      %v1108 = vunpack.c.l.b16 %v409
      %v1109 = vunpack.c.h.b16 %v409
      %v1110 = vunpack.c.l.b16 %v410
      %v1111 = vunpack.c.h.b16 %v410
      %v1112 = vunpack.c.l.b16 %v411
      %v1113 = vunpack.c.h.b16 %v411
      %v1114 = vunpack.c.l.b16 %v412
      %v1115 = vunpack.c.h.b16 %v412
      %v1116 = vunpack.c.l.b16 %v413
      %v1117 = vunpack.c.h.b16 %v413
      %v1118 = vunpack.c.l.b16 %v414
      %v1119 = vunpack.c.h.b16 %v414
      %v1120 = vunpack.c.l.b16 %v415
      %v1121 = vunpack.c.h.b16 %v415
      %v1122 = vunpack.c.l.b16 %v416
      %v1123 = vunpack.c.h.b16 %v416
      %v1124 = vunpack.c.l.b16 %v417
      %v1125 = vunpack.c.h.b16 %v417
      %v1126 = vunpack.c.l.b16 %v418
      %v1127 = vunpack.c.h.b16 %v418
      %v1128 = vunpack.c.l.b16 %v419
      %v1129 = vunpack.c.h.b16 %v419
      %v1130 = vunpack.c.l.b16 %v420
      %v1131 = vunpack.c.h.b16 %v420
      %v1132 = vunpack.c.l.b16 %v421
      %v1133 = vunpack.c.h.b16 %v421
      %v1134 = vunpack.c.l.b16 %v422
      %v1135 = vunpack.c.h.b16 %v422
      %v1136 = vunpack.c.l.b16 %v423
      %v1137 = vunpack.c.h.b16 %v423
      %v1138 = vunpack.c.l.b16 %v424
      %v1139 = vunpack.c.h.b16 %v424
      %v1140 = vunpack.c.l.b16 %v425
      %v1141 = vunpack.c.h.b16 %v425
      %v1142 = vunpack.c.l.b16 %v426
      %v1143 = vunpack.c.h.b16 %v426
      %v1144 = vunpack.c.l.b16 %v427
      %v1145 = vunpack.c.h.b16 %v427
      %v1146 = vunpack.c.l.b16 %v428
      %v1147 = vunpack.c.h.b16 %v428
      %v1148 = vunpack.c.l.b16 %v429
      %v1149 = vunpack.c.h.b16 %v429
      %v1150 = vunpack.c.l.b16 %v430
      %v1151 = vunpack.c.h.b16 %v430
      %v1152 = vunpack.c.l.b16 %v431
      %v1153 = vunpack.c.h.b16 %v431
      %v1154 = vunpack.c.l.b16 %v432
      %v1155 = vunpack.c.h.b16 %v432
      %v1156 = vunpack.c.l.b16 %v433
      %v1157 = vunpack.c.h.b16 %v433
      %v1158 = vunpack.c.l.b16 %v434
      %v1159 = vunpack.c.h.b16 %v434
      %v1160 = vunpack.c.l.b16 %v435
      %v1161 = vunpack.c.h.b16 %v435
      %v1162 = vunpack.c.l.b16 %v436
      %v1163 = vunpack.c.h.b16 %v436
      %v1164 = vunpack.c.l.b16 %v437
      %v1165 = vunpack.c.h.b16 %v437
      %v1166 = vunpack.c.l.b16 %v438
      %v1167 = vunpack.c.h.b16 %v438
      %v1168 = vunpack.c.l.b16 %v439
      %v1169 = vunpack.c.h.b16 %v439
      %v1170 = vunpack.c.l.b16 %v440
      %v1171 = vunpack.c.h.b16 %v440
      %v1172 = vunpack.c.l.b16 %v441
      %v1173 = vunpack.c.h.b16 %v441
      %v1174 = vunpack.c.l.b16 %v442
      %v1175 = vunpack.c.h.b16 %v442
      %v1176 = vunpack.c.l.b16 %v443
      %v1177 = vunpack.c.h.b16 %v443
      %v1178 = vunpack.c.l.b16 %v444
      %v1179 = vunpack.c.h.b16 %v444
      %v1180 = vunpack.c.l.b16 %v445
      %v1181 = vunpack.c.h.b16 %v445
      %v1182 = vunpack.c.l.b16 %v446
      %v1183 = vunpack.c.h.b16 %v446
      %v1184 = vunpack.c.l.b16 %v447
      %v1185 = vunpack.c.h.b16 %v447
      %v1186 = vunpack.c.l.b16 %v448
      %v1187 = vunpack.c.h.b16 %v448
      %v1188 = vunpack.c.l.b16 %v449
      %v1189 = vunpack.c.h.b16 %v449
      %v1190 = vunpack.c.l.b16 %v450
      %v1191 = vunpack.c.h.b16 %v450
      %v1192 = vunpack.c.l.b16 %v451
      %v1193 = vunpack.c.h.b16 %v451
      %v1194 = vunpack.c.l.b16 %v452
      %v1195 = vunpack.c.h.b16 %v452
      %v1196 = vunpack.c.l.b16 %v453
      %v1197 = vunpack.c.h.b16 %v453
      %v1198 = vunpack.c.l.b16 %v454
      %v1199 = vunpack.c.h.b16 %v454
      %v1200 = vunpack.c.l.b16 %v455
      %v1201 = vunpack.c.h.b16 %v455
      %v1202 = vunpack.c.l.b16 %v456
      %v1203 = vunpack.c.h.b16 %v456
      %v1204 = vunpack.c.l.b16 %v457
      %v1205 = vunpack.c.h.b16 %v457
      %v1206 = vunpack.c.l.b16 %v458
      %v1207 = vunpack.c.h.b16 %v458
      %v1208 = vunpack.c.l.b16 %v459
      %v1209 = vunpack.c.h.b16 %v459
      %v1210 = vunpack.c.l.b16 %v460
      %v1211 = vunpack.c.h.b16 %v460
      %v1212 = vunpack.c.l.b16 %v461
      %v1213 = vunpack.c.h.b16 %v461
      %v1214 = vunpack.c.l.b16 %v462
      %v1215 = vunpack.c.h.b16 %v462
      %v1216 = vunpack.c.l.b16 %v463
      %v1217 = vunpack.c.h.b16 %v463
      %v1218 = vunpack.c.l.b16 %v464
      %v1219 = vunpack.c.h.b16 %v464
      %v1220 = vunpack.c.l.b16 %v465
      %v1221 = vunpack.c.h.b16 %v465
      %v1222 = vunpack.c.l.b16 %v466
      %v1223 = vunpack.c.h.b16 %v466
      %v1224 = vunpack.c.l.b16 %v467
      %v1225 = vunpack.c.h.b16 %v467
      %v1226 = vunpack.c.l.b16 %v468
      %v1227 = vunpack.c.h.b16 %v468
      %v1228 = vunpack.c.l.b16 %v469
      %v1229 = vunpack.c.h.b16 %v469
      %v1230 = vunpack.c.l.b16 %v470
      %v1231 = vunpack.c.h.b16 %v470
      %v1232 = vunpack.c.l.b16 %v471
      %v1233 = vunpack.c.h.b16 %v471
      %v1234 = vunpack.c.l.b16 %v472
      %v1235 = vunpack.c.h.b16 %v472
      %v1236 = vunpack.c.l.b16 %v473
      %v1237 = vunpack.c.h.b16 %v473
      %v1238 = vunpack.c.l.b16 %v474
      %v1239 = vunpack.c.h.b16 %v474
      %v1240 = vunpack.c.l.b16 %v475
      %v1241 = vunpack.c.h.b16 %v475
      %v1242 = vunpack.c.l.b16 %v476
      %v1243 = vunpack.c.h.b16 %v476
      %v1244 = vunpack.c.l.b16 %v477
      %v1245 = vunpack.c.h.b16 %v477
      %v1246 = vunpack.c.l.b16 %v478
      %v1247 = vunpack.c.h.b16 %v478
      %v1248 = vunpack.c.l.b16 %v479
      %v1249 = vunpack.c.h.b16 %v479
      %v1250 = vunpack.c.l.b16 %v480
      %v1251 = vunpack.c.h.b16 %v480
      %v1252 = vunpack.c.l.b16 %v481
      %v1253 = vunpack.c.h.b16 %v481
      %v1254 = vunpack.c.l.b16 %v482
      %v1255 = vunpack.c.h.b16 %v482
      %v1256 = vunpack.c.l.b16 %v483
      %v1257 = vunpack.c.h.b16 %v483
      %v1258 = vunpack.c.l.b16 %v484
      %v1259 = vunpack.c.h.b16 %v484
      %v1260 = vunpack.c.l.b16 %v485
      %v1261 = vunpack.c.h.b16 %v485
      %v1262 = vunpack.c.l.b16 %v486
      %v1263 = vunpack.c.h.b16 %v486
      %v1264 = vunpack.c.l.b16 %v487
      %v1265 = vunpack.c.h.b16 %v487
      %v1266 = vunpack.c.l.b16 %v488
      %v1267 = vunpack.c.h.b16 %v488
      %v1268 = vunpack.c.l.b16 %v489
      %v1269 = vunpack.c.h.b16 %v489
      %v1270 = vunpack.c.l.b16 %v490
      %v1271 = vunpack.c.h.b16 %v490
      %v1272 = vunpack.c.l.b16 %v491
      %v1273 = vunpack.c.h.b16 %v491
      %v1274 = vunpack.c.l.b16 %v492
      %v1275 = vunpack.c.h.b16 %v492
      %v1276 = vunpack.c.l.b16 %v493
      %v1277 = vunpack.c.h.b16 %v493
      %v1278 = vunpack.c.l.b16 %v494
      %v1279 = vunpack.c.h.b16 %v494
      %v1280 = vunpack.c.l.b16 %v495
      %v1281 = vunpack.c.h.b16 %v495
      %v1282 = vunpack.c.l.b16 %v496
      %v1283 = vunpack.c.h.b16 %v496
      %v1284 = vunpack.c.l.b16 %v497
      %v1285 = vunpack.c.h.b16 %v497
      %v1286 = vunpack.c.l.b16 %v498
      %v1287 = vunpack.c.h.b16 %v498
      %v1288 = vunpack.c.l.b16 %v499
      %v1289 = vunpack.c.h.b16 %v499
      %v1290 = vunpack.c.l.b16 %v500
      %v1291 = vunpack.c.h.b16 %v500
      %v1292 = vunpack.c.l.b16 %v501
      %v1293 = vunpack.c.h.b16 %v501
      %v1294 = vunpack.c.l.b16 %v502
      %v1295 = vunpack.c.h.b16 %v502
      %v1296 = vunpack.c.l.b16 %v503
      %v1297 = vunpack.c.h.b16 %v503
      %v1298 = vunpack.c.l.b16 %v504
      %v1299 = vunpack.c.h.b16 %v504
      %v1300 = vunpack.c.l.b16 %v505
      %v1301 = vunpack.c.h.b16 %v505
      %v1302 = vunpack.c.l.b16 %v506
      %v1303 = vunpack.c.h.b16 %v506
      %v1304 = vunpack.c.l.b16 %v507
      %v1305 = vunpack.c.h.b16 %v507
      %v1306 = vunpack.c.l.b16 %v508
      %v1307 = vunpack.c.h.b16 %v508
      %v1308 = vunpack.c.l.b16 %v509
      %v1309 = vunpack.c.h.b16 %v509
      %v1310 = vunpack.c.l.b16 %v510
      %v1311 = vunpack.c.h.b16 %v510
      %v1312 = vunpack.c.l.b16 %v511
      %v1313 = vunpack.c.h.b16 %v511
      %v1314 = vunpack.c.l.b16 %v512
      %v1315 = vunpack.c.h.b16 %v512
      %v1316 = vunpack.c.l.b16 %v513
      %v1317 = vunpack.c.h.b16 %v513
      %v1318 = vunpack.c.l.b16 %v514
      %v1319 = vunpack.c.h.b16 %v514
      %v1320 = vunpack.c.l.b16 %v515
      %v1321 = vunpack.c.h.b16 %v515
      %v1322 = vunpack.c.l.b16 %v516
      %v1323 = vunpack.c.h.b16 %v516
      %v1324 = vunpack.c.l.b16 %v517
      %v1325 = vunpack.c.h.b16 %v517
      %v1326 = vunpack.c.l.b16 %v518
      %v1327 = vunpack.c.h.b16 %v518
      %v1328 = vunpack.c.l.b16 %v519
      %v1329 = vunpack.c.h.b16 %v519
      %v1330 = vunpack.c.l.b16 %v520
      %v1331 = vunpack.c.h.b16 %v520
      %v1332 = vunpack.c.l.b16 %v521
      %v1333 = vunpack.c.h.b16 %v521
      %v1334 = vunpack.c.l.b16 %v522
      %v1335 = vunpack.c.h.b16 %v522
      %v1336 = vunpack.c.l.b16 %v523
      %v1337 = vunpack.c.h.b16 %v523
      %v1338 = vunpack.c.l.b16 %v524
      %v1339 = vunpack.c.h.b16 %v524
      %v1340 = vunpack.c.l.b16 %v525
      %v1341 = vunpack.c.h.b16 %v525
      %v1342 = vunpack.c.l.b16 %v526
      %v1343 = vunpack.c.h.b16 %v526
      %v1344 = vunpack.c.l.b16 %v527
      %v1345 = vunpack.c.h.b16 %v527
      %v1346 = vunpack.c.l.b16 %v528
      %v1347 = vunpack.c.h.b16 %v528
      %v1348 = vunpack.c.l.b16 %v529
      %v1349 = vunpack.c.h.b16 %v529
      %v1350 = vunpack.c.l.b16 %v530
      %v1351 = vunpack.c.h.b16 %v530
      %v1352 = vunpack.c.l.b16 %v531
      %v1353 = vunpack.c.h.b16 %v531
      %v1354 = vunpack.c.l.b16 %v532
      %v1355 = vunpack.c.h.b16 %v532
      %v1356 = vunpack.c.l.b16 %v533
      %v1357 = vunpack.c.h.b16 %v533
      %v1358 = vunpack.c.l.b16 %v534
      %v1359 = vunpack.c.h.b16 %v534
      %v1360 = vunpack.c.l.b16 %v535
      %v1361 = vunpack.c.h.b16 %v535
      %v1362 = vunpack.c.l.b16 %v536
      %v1363 = vunpack.c.h.b16 %v536
      %v1364 = vunpack.c.l.b16 %v537
      %v1365 = vunpack.c.h.b16 %v537
      %v1366 = vunpack.c.l.b16 %v538
      %v1367 = vunpack.c.h.b16 %v538
      %v1368 = vunpack.c.l.b16 %v539
      %v1369 = vunpack.c.h.b16 %v539
      %v1370 = vunpack.c.l.b16 %v540
      %v1371 = vunpack.c.h.b16 %v540
      %v1372 = vunpack.c.l.b16 %v541
      %v1373 = vunpack.c.h.b16 %v541
      %v1374 = vunpack.c.l.b16 %v542
      %v1375 = vunpack.c.h.b16 %v542
      %v1376 = vunpack.c.l.b16 %v543
      %v1377 = vunpack.c.h.b16 %v543
      %v1378 = vunpack.c.l.b16 %v544
      %v1379 = vunpack.c.h.b16 %v544
      %v1380 = vunpack.c.l.b16 %v545
      %v1381 = vunpack.c.h.b16 %v545
      %v1382 = vunpack.c.l.b16 %v546
      %v1383 = vunpack.c.h.b16 %v546
      %v1384 = vunpack.c.l.b16 %v547
      %v1385 = vunpack.c.h.b16 %v547
      %v1386 = vunpack.c.l.b16 %v548
      %v1387 = vunpack.c.h.b16 %v548
      %v1388 = vunpack.c.l.b16 %v549
      %v1389 = vunpack.c.h.b16 %v549
      %v1390 = vunpack.c.l.b16 %v550
      %v1391 = vunpack.c.h.b16 %v550
      %v1392 = vunpack.c.l.b16 %v551
      %v1393 = vunpack.c.h.b16 %v551
      %v1394 = vunpack.c.l.b16 %v552
      %v1395 = vunpack.c.h.b16 %v552
      %v1396 = vunpack.c.l.b16 %v553
      %v1397 = vunpack.c.h.b16 %v553
      %v1398 = vunpack.c.l.b16 %v554
      %v1399 = vunpack.c.h.b16 %v554
      %v1400 = vunpack.c.l.b16 %v555
      %v1401 = vunpack.c.h.b16 %v555
      %v1402 = vunpack.c.l.b16 %v556
      %v1403 = vunpack.c.h.b16 %v556
      %v1404 = vunpack.c.l.b16 %v557
      %v1405 = vunpack.c.h.b16 %v557
      %v1406 = vunpack.c.l.b16 %v558
      %v1407 = vunpack.c.h.b16 %v558
      %v1408 = vunpack.c.l.b16 %v559
      %v1409 = vunpack.c.h.b16 %v559
      %v1410 = vunpack.c.l.b16 %v560
      %v1411 = vunpack.c.h.b16 %v560
      %v1412 = vunpack.c.l.b16 %v561
      %v1413 = vunpack.c.h.b16 %v561
      %v1414 = vunpack.c.l.b16 %v562
      %v1415 = vunpack.c.h.b16 %v562
      %v1416 = vunpack.c.l.b16 %v563
      %v1417 = vunpack.c.h.b16 %v563
      %v1418 = vunpack.c.l.b16 %v564
      %v1419 = vunpack.c.h.b16 %v564
      %v1420 = vunpack.c.l.b16 %v565
      %v1421 = vunpack.c.h.b16 %v565
      %v1422 = vunpack.c.l.b16 %v566
      %v1423 = vunpack.c.h.b16 %v566
      %v1424 = vunpack.c.l.b16 %v567
      %v1425 = vunpack.c.h.b16 %v567
      %v1426 = vunpack.c.l.b16 %v568
      %v1427 = vunpack.c.h.b16 %v568
      %v1428 = vunpack.c.l.b16 %v569
      %v1429 = vunpack.c.h.b16 %v569
      %v1430 = vunpack.c.l.b16 %v570
      %v1431 = vunpack.c.h.b16 %v570
      %v1432 = vunpack.c.l.b16 %v571
      %v1433 = vunpack.c.h.b16 %v571
      %v1434 = vunpack.c.l.b16 %v572
      %v1435 = vunpack.c.h.b16 %v572
      %v1436 = vunpack.c.l.b16 %v573
      %v1437 = vunpack.c.h.b16 %v573
      %v1438 = vunpack.c.l.b16 %v574
      %v1439 = vunpack.c.h.b16 %v574
      %v1440 = vunpack.c.l.b16 %v575
      %v1441 = vunpack.c.h.b16 %v575
      %v1442 = vunpack.c.l.b16 %v576
      %v1443 = vunpack.c.h.b16 %v576
      %v1444 = vunpack.c.l.b16 %v577
      %v1445 = vunpack.c.h.b16 %v577
      %v1446 = vunpack.c.l.b16 %v578
      %v1447 = vunpack.c.h.b16 %v578
      %v1448 = vunpack.c.l.b16 %v579
      %v1449 = vunpack.c.h.b16 %v579
      %v1450 = vunpack.c.l.b16 %v580
      %v1451 = vunpack.c.h.b16 %v580
      %v1452 = vunpack.c.l.b16 %v581
      %v1453 = vunpack.c.h.b16 %v581
      %v1454 = vunpack.c.l.b16 %v582
      %v1455 = vunpack.c.h.b16 %v582
      %v1456 = vunpack.c.l.b16 %v583
      %v1457 = vunpack.c.h.b16 %v583
      %v1458 = vunpack.c.l.b16 %v584
      %v1459 = vunpack.c.h.b16 %v584
      %v1460 = vunpack.c.l.b16 %v585
      %v1461 = vunpack.c.h.b16 %v585
      %v1462 = vunpack.c.l.b16 %v586
      %v1463 = vunpack.c.h.b16 %v586
      %v1464 = vunpack.c.l.b16 %v587
      %v1465 = vunpack.c.h.b16 %v587
      %v1466 = vunpack.c.l.b16 %v588
      %v1467 = vunpack.c.h.b16 %v588
      %v1468 = vunpack.c.l.b16 %v589
      %v1469 = vunpack.c.h.b16 %v589
      %v1470 = vunpack.c.l.b16 %v590
      %v1471 = vunpack.c.h.b16 %v590
      %v1472 = vunpack.c.l.b16 %v591
      %v1473 = vunpack.c.h.b16 %v591
      %v1474 = vunpack.c.l.b16 %v592
      %v1475 = vunpack.c.h.b16 %v592
      %v1476 = vunpack.c.l.b16 %v593
      %v1477 = vunpack.c.h.b16 %v593
      %v1478 = vunpack.c.l.b16 %v594
      %v1479 = vunpack.c.h.b16 %v594
      %v1480 = vunpack.c.l.b16 %v595
      %v1481 = vunpack.c.h.b16 %v595
      %v1482 = vunpack.c.l.b16 %v596
      %v1483 = vunpack.c.h.b16 %v596
      %v1484 = vunpack.c.l.b16 %v597
      %v1485 = vunpack.c.h.b16 %v597
      %v1486 = vunpack.c.l.b16 %v598
      %v1487 = vunpack.c.h.b16 %v598
      %v1488 = vunpack.c.l.b16 %v599
      %v1489 = vunpack.c.h.b16 %v599
      %v1490 = vunpack.c.l.b16 %v600
      %v1491 = vunpack.c.h.b16 %v600
      %v1492 = vunpack.c.l.b16 %v601
      %v1493 = vunpack.c.h.b16 %v601
      %v1494 = vunpack.c.l.b16 %v602
      %v1495 = vunpack.c.h.b16 %v602
      %v1496 = vunpack.c.l.b16 %v603
      %v1497 = vunpack.c.h.b16 %v603
      %v1498 = vunpack.c.l.b16 %v604
      %v1499 = vunpack.c.h.b16 %v604
      %v1500 = vunpack.c.l.b16 %v605
      %v1501 = vunpack.c.h.b16 %v605
      %v1502 = vunpack.c.l.b16 %v606
      %v1503 = vunpack.c.h.b16 %v606
      %v1504 = vunpack.c.l.b16 %v607
      %v1505 = vunpack.c.h.b16 %v607
      %v1506 = vunpack.c.l.b16 %v608
      %v1507 = vunpack.c.h.b16 %v608
      %v1508 = vunpack.c.l.b16 %v609
      %v1509 = vunpack.c.h.b16 %v609
      %v1510 = vunpack.c.l.b16 %v610
      %v1511 = vunpack.c.h.b16 %v610
      %v1512 = vunpack.c.l.b16 %v611
      %v1513 = vunpack.c.h.b16 %v611
      %v1514 = vunpack.c.l.b16 %v612
      %v1515 = vunpack.c.h.b16 %v612
      %v1516 = vunpack.c.l.b16 %v613
      %v1517 = vunpack.c.h.b16 %v613
      %v1518 = vunpack.c.l.b16 %v614
      %v1519 = vunpack.c.h.b16 %v614
      %v1520 = vunpack.c.l.b16 %v615
      %v1521 = vunpack.c.h.b16 %v615
      %v1522 = vunpack.c.l.b16 %v616
      %v1523 = vunpack.c.h.b16 %v616
      %v1524 = vunpack.c.l.b16 %v617
      %v1525 = vunpack.c.h.b16 %v617
      %v1526 = vunpack.c.l.b16 %v618
      %v1527 = vunpack.c.h.b16 %v618
      %v1528 = vunpack.c.l.b16 %v619
      %v1529 = vunpack.c.h.b16 %v619
      %v1530 = vunpack.c.l.b16 %v620
      %v1531 = vunpack.c.h.b16 %v620
      %v1532 = vunpack.c.l.b16 %v621
      %v1533 = vunpack.c.h.b16 %v621
      %v1534 = vunpack.c.l.b16 %v622
      %v1535 = vunpack.c.h.b16 %v622
      %v1536 = vunpack.c.l.b16 %v623
      %v1537 = vunpack.c.h.b16 %v623
      %v1538 = vunpack.c.l.b16 %v624
      %v1539 = vunpack.c.h.b16 %v624
      %v1540 = vunpack.c.l.b16 %v625
      %v1541 = vunpack.c.h.b16 %v625
      %v1542 = vunpack.c.l.b16 %v626
      %v1543 = vunpack.c.h.b16 %v626
      %v1544 = vunpack.c.l.b16 %v627
      %v1545 = vunpack.c.h.b16 %v627
      %v1546 = vunpack.c.l.b16 %v628
      %v1547 = vunpack.c.h.b16 %v628
      %v1548 = vunpack.c.l.b16 %v629
      %v1549 = vunpack.c.h.b16 %v629
      %v1550 = vunpack.c.l.b16 %v630
      %v1551 = vunpack.c.h.b16 %v630
      %v1552 = vunpack.c.l.b16 %v631
      %v1553 = vunpack.c.h.b16 %v631
      %v1554 = vunpack.c.l.b16 %v632
      %v1555 = vunpack.c.h.b16 %v632
      %v1556 = vunpack.c.l.b16 %v633
      %v1557 = vunpack.c.h.b16 %v633
      %v1558 = vunpack.c.l.b16 %v634
      %v1559 = vunpack.c.h.b16 %v634
      %v1560 = vunpack.c.l.b16 %v635
      %v1561 = vunpack.c.h.b16 %v635
      %v1562 = vunpack.c.l.b16 %v636
      %v1563 = vunpack.c.h.b16 %v636
      %v1564 = vunpack.c.l.b16 %v637
      %v1565 = vunpack.c.h.b16 %v637
      %v1566 = vunpack.c.l.b16 %v638
      %v1567 = vunpack.c.h.b16 %v638
      %v1568 = vunpack.c.l.b16 %v639
      %v1569 = vunpack.c.h.b16 %v639
      %v1570 = vunpack.c.l.b16 %v640
      %v1571 = vunpack.c.h.b16 %v640
      %v1572 = vunpack.c.l.b16 %v641
      %v1573 = vunpack.c.h.b16 %v641
      %v1574 = vunpack.c.l.b16 %v642
      %v1575 = vunpack.c.h.b16 %v642
      %v1576 = vunpack.c.l.b16 %v643
      %v1577 = vunpack.c.h.b16 %v643
      %v1578 = vunpack.c.l.b16 %v644
      %v1579 = vunpack.c.h.b16 %v644
      %v1580 = vunpack.c.l.b16 %v645
      %v1581 = vunpack.c.h.b16 %v645
      %v1582 = vunpack.c.l.b16 %v646
      %v1583 = vunpack.c.h.b16 %v646
      %v1584 = vunpack.c.l.b16 %v647
      %v1585 = vunpack.c.h.b16 %v647
      %v1586 = vunpack.c.l.b16 %v648
      %v1587 = vunpack.c.h.b16 %v648
      %v1588 = vunpack.c.l.b16 %v649
      %v1589 = vunpack.c.h.b16 %v649
      %v1590 = vunpack.c.l.b16 %v650
      %v1591 = vunpack.c.h.b16 %v650
      %v1592 = vunpack.c.l.b16 %v651
      %v1593 = vunpack.c.h.b16 %v651
      %v1594 = vunpack.c.l.b16 %v652
      %v1595 = vunpack.c.h.b16 %v652
      %v1596 = vunpack.c.l.b16 %v653
      %v1597 = vunpack.c.h.b16 %v653
      %v1598 = vunpack.c.l.b16 %v654
      %v1599 = vunpack.c.h.b16 %v654
      %v1600 = vunpack.c.l.b16 %v655
      %v1601 = vunpack.c.h.b16 %v655
      %v1602 = vunpack.c.l.b16 %v656
      %v1603 = vunpack.c.h.b16 %v656
      %v1604 = vunpack.c.l.b16 %v657
      %v1605 = vunpack.c.h.b16 %v657
      %v1606 = vunpack.c.l.b16 %v658
      %v1607 = vunpack.c.h.b16 %v658
      %v1608 = vunpack.c.l.b16 %v659
      %v1609 = vunpack.c.h.b16 %v659
      %v1610 = vunpack.c.l.b16 %v660
      %v1611 = vunpack.c.h.b16 %v660
      %v1612 = vunpack.c.l.b16 %v661
      %v1613 = vunpack.c.h.b16 %v661
      %v1614 = vunpack.c.l.b16 %v662
      %v1615 = vunpack.c.h.b16 %v662
      %v1616 = vunpack.c.l.b16 %v663
      %v1617 = vunpack.c.h.b16 %v663
      %v1618 = vunpack.c.l.b16 %v664
      %v1619 = vunpack.c.h.b16 %v664
      %v1620 = vunpack.c.l.b16 %v665
      %v1621 = vunpack.c.h.b16 %v665
      %v1622 = vunpack.c.l.b16 %v666
      %v1623 = vunpack.c.h.b16 %v666
      %v1624 = vunpack.c.l.b16 %v667
      %v1625 = vunpack.c.h.b16 %v667
      %v1626 = vunpack.c.l.b16 %v668
      %v1627 = vunpack.c.h.b16 %v668
      %v1628 = vunpack.c.l.b16 %v669
      %v1629 = vunpack.c.h.b16 %v669
      %v1630 = vunpack.c.l.b16 %v670
      %v1631 = vunpack.c.h.b16 %v670
      %v1632 = vunpack.c.l.b16 %v671
      %v1633 = vunpack.c.h.b16 %v671
      %v1634 = vunpack.c.l.b16 %v672
      %v1635 = vunpack.c.h.b16 %v672
      %v1636 = vunpack.c.l.b16 %v673
      %v1637 = vunpack.c.h.b16 %v673
      %v1638 = vunpack.c.l.b16 %v674
      %v1639 = vunpack.c.h.b16 %v674
      %v1640 = vunpack.c.l.b16 %v675
      %v1641 = vunpack.c.h.b16 %v675
      %v1642 = vunpack.c.l.b16 %v676
      %v1643 = vunpack.c.h.b16 %v676
      %v1644 = vunpack.c.l.b16 %v677
      %v1645 = vunpack.c.h.b16 %v677
      %v1646 = vunpack.c.l.b16 %v678
      %v1647 = vunpack.c.h.b16 %v678
      %v1648 = vunpack.c.l.b16 %v679
      %v1649 = vunpack.c.h.b16 %v679
      %v1650 = vunpack.c.l.b16 %v680
      %v1651 = vunpack.c.h.b16 %v680
      %v1652 = vunpack.c.l.b16 %v681
      %v1653 = vunpack.c.h.b16 %v681
      %v1654 = vunpack.c.l.b16 %v682
      %v1655 = vunpack.c.h.b16 %v682
      %v1656 = vunpack.c.l.b16 %v683
      %v1657 = vunpack.c.h.b16 %v683
      %v1658 = vunpack.c.l.b16 %v684
      %v1659 = vunpack.c.h.b16 %v684
      %v1660 = vunpack.c.l.b16 %v685
      %v1661 = vunpack.c.h.b16 %v685
      %v1662 = vunpack.c.l.b16 %v686
      %v1663 = vunpack.c.h.b16 %v686
      %v1664 = vunpack.c.l.b16 %v687
      %v1665 = vunpack.c.h.b16 %v687
      %v1666 = vunpack.c.l.b16 %v688
      %v1667 = vunpack.c.h.b16 %v688
      %v1668 = vunpack.c.l.b16 %v689
      %v1669 = vunpack.c.h.b16 %v689
      %v1670 = vunpack.c.l.b16 %v690
      %v1671 = vunpack.c.h.b16 %v690
      %v1672 = vunpack.c.l.b16 %v691
      %v1673 = vunpack.c.h.b16 %v691
      %v1674 = vunpack.c.l.b16 %v692
      %v1675 = vunpack.c.h.b16 %v692
      %v1676 = vunpack.c.l.b16 %v693
      %v1677 = vunpack.c.h.b16 %v693
      %v1678 = vunpack.c.l.b16 %v694
      %v1679 = vunpack.c.h.b16 %v694
      %v1680 = vunpack.c.l.b16 %v695
      %v1681 = vunpack.c.h.b16 %v695
      %v1682 = vunpack.c.l.b16 %v696
      %v1683 = vunpack.c.h.b16 %v696
      %v1684 = vunpack.c.l.b16 %v697
      %v1685 = vunpack.c.h.b16 %v697
      %v1686 = vunpack.c.l.b16 %v698
      %v1687 = vunpack.c.h.b16 %v698
      %v1688 = vunpack.c.l.b16 %v699
      %v1689 = vunpack.c.h.b16 %v699
      %v1690 = vunpack.c.l.b16 %v700
      %v1691 = vunpack.c.h.b16 %v700
      %v1692 = vunpack.c.l.b16 %v701
      %v1693 = vunpack.c.h.b16 %v701
      %v1694 = vunpack.c.l.b16 %v702
      %v1695 = vunpack.c.h.b16 %v702
      %v1696 = vunpack.c.l.b16 %v703
      %v1697 = vunpack.c.h.b16 %v703
      %v1698 = vunpack.c.l.b16 %v704
      %v1699 = vunpack.c.h.b16 %v704
      %v1700 = vunpack.c.l.b16 %v705
      %v1701 = vunpack.c.h.b16 %v705
      %v1702 = vunpack.c.l.b16 %v706
      %v1703 = vunpack.c.h.b16 %v706
      %v1704 = vunpack.c.l.b16 %v707
      %v1705 = vunpack.c.h.b16 %v707
      %v1706 = vunpack.c.l.b16 %v708
      %v1707 = vunpack.c.h.b16 %v708
      %v1708 = vunpack.c.l.b16 %v709
      %v1709 = vunpack.c.h.b16 %v709
      %v1710 = vunpack.c.l.b16 %v710
      %v1711 = vunpack.c.h.b16 %v710
      %v1712 = vunpack.c.l.b16 %v711
      %v1713 = vunpack.c.h.b16 %v711
      %v1714 = vunpack.c.l.b16 %v712
      %v1715 = vunpack.c.h.b16 %v712
      %v1716 = vunpack.c.l.b16 %v713
      %v1717 = vunpack.c.h.b16 %v713
      %v1718 = vunpack.c.l.b16 %v714
      %v1719 = vunpack.c.h.b16 %v714
      %v1720 = vunpack.c.l.b16 %v715
      %v1721 = vunpack.c.h.b16 %v715
      %v1722 = vunpack.c.l.b16 %v716
      %v1723 = vunpack.c.h.b16 %v716
      %v1724 = vunpack.c.l.b16 %v717
      %v1725 = vunpack.c.h.b16 %v717
      %v1726 = vunpack.c.l.b16 %v718
      %v1727 = vunpack.c.h.b16 %v718
      %v1728 = vunpack.c.l.b16 %v719
      %v1729 = vunpack.c.h.b16 %v719
      %v1730 = vunpack.c.l.b16 %v720
      %v1731 = vunpack.c.h.b16 %v720
      %v1732 = vunpack.c.l.b16 %v721
      %v1733 = vunpack.c.h.b16 %v721
      %v1734 = vunpack.c.l.b16 %v722
      %v1735 = vunpack.c.h.b16 %v722
      %v1736 = vunpack.c.l.b16 %v723
      %v1737 = vunpack.c.h.b16 %v723
      %v1738 = vunpack.c.l.b16 %v724
      %v1739 = vunpack.c.h.b16 %v724
      %v1740 = vunpack.c.l.b16 %v725
      %v1741 = vunpack.c.h.b16 %v725
      %v1742 = vunpack.c.l.b16 %v726
      %v1743 = vunpack.c.h.b16 %v726
      %v1744 = vunpack.c.l.b16 %v727
      %v1745 = vunpack.c.h.b16 %v727
      %v1746 = vunpack.c.l.b16 %v728
      %v1747 = vunpack.c.h.b16 %v728
      %v1748 = vunpack.c.l.b16 %v729
      %v1749 = vunpack.c.h.b16 %v729
      %v1750 = vunpack.c.l.b16 %v730
      %v1751 = vunpack.c.h.b16 %v730
      %v1752 = vunpack.c.l.b16 %v731
      %v1753 = vunpack.c.h.b16 %v731
      %v1754 = vunpack.c.l.b16 %v732
      %v1755 = vunpack.c.h.b16 %v732
      %v1756 = vunpack.c.l.b16 %v733
      %v1757 = vunpack.c.h.b16 %v733
      %v1758 = vunpack.c.l.b16 %v734
      %v1759 = vunpack.c.h.b16 %v734
      %v1760 = vunpack.c.l.b16 %v735
      %v1761 = vunpack.c.h.b16 %v735
      %v1762 = vunpack.c.l.b16 %v736
      %v1763 = vunpack.c.h.b16 %v736
      %v1764 = vunpack.c.l.b16 %v737
      %v1765 = vunpack.c.h.b16 %v737
      %v1766 = vunpack.c.l.b16 %v738
      %v1767 = vunpack.c.h.b16 %v738
      %v1768 = vunpack.c.l.b16 %v739
      %v1769 = vunpack.c.h.b16 %v739
      %v1770 = vunpack.c.l.b16 %v740
      %v1771 = vunpack.c.h.b16 %v740
      %v1772 = vunpack.c.l.b16 %v741
      %v1773 = vunpack.c.h.b16 %v741
      %v1774 = vunpack.c.l.b16 %v742
      %v1775 = vunpack.c.h.b16 %v742
      %v1776 = vunpack.c.l.b16 %v743
      %v1777 = vunpack.c.h.b16 %v743
      %v1778 = vunpack.c.l.b16 %v744
      %v1779 = vunpack.c.h.b16 %v744
      %v1780 = vunpack.c.l.b16 %v745
      %v1781 = vunpack.c.h.b16 %v745
      %v1782 = vunpack.c.l.b16 %v746
      %v1783 = vunpack.c.h.b16 %v746
      %v1784 = vunpack.c.l.b16 %v747
      %v1785 = vunpack.c.h.b16 %v747
      %v1786 = vunpack.c.l.b16 %v748
      %v1787 = vunpack.c.h.b16 %v748
      %v1788 = vunpack.c.l.b16 %v749
      %v1789 = vunpack.c.h.b16 %v749
      %v1790 = vunpack.c.l.b16 %v750
      %v1791 = vunpack.c.h.b16 %v750
      %v1792 = vunpack.c.l.b16 %v751
      %v1793 = vunpack.c.h.b16 %v751
      %v1794 = vpack.c.b16 %v1110, %v1106
      %v1795 = vpack.c.b16 %v1111, %v1107
      %v1796 = vpack.c.b16 %v1112, %v1108
      %v1797 = vpack.c.b16 %v1113, %v1109
      %v1798 = vpack.c.b16 %v1118, %v1114
      %v1799 = vpack.c.b16 %v1119, %v1115
      %v1800 = vpack.c.b16 %v1120, %v1116
      %v1801 = vpack.c.b16 %v1121, %v1117
      %v1802 = vpack.c.b16 %v1126, %v1122
      %v1803 = vpack.c.b16 %v1127, %v1123
      %v1804 = vpack.c.b16 %v1128, %v1124
      %v1805 = vpack.c.b16 %v1129, %v1125
      %v1806 = vpack.c.b16 %v1134, %v1130
      %v1807 = vpack.c.b16 %v1135, %v1131
      %v1808 = vpack.c.b16 %v1136, %v1132
      %v1809 = vpack.c.b16 %v1137, %v1133
      %v1810 = vpack.c.b16 %v1142, %v1138
      %v1811 = vpack.c.b16 %v1143, %v1139
      %v1812 = vpack.c.b16 %v1144, %v1140
      %v1813 = vpack.c.b16 %v1145, %v1141
      %v1814 = vpack.c.b16 %v1150, %v1146
      %v1815 = vpack.c.b16 %v1151, %v1147
      %v1816 = vpack.c.b16 %v1152, %v1148
      %v1817 = vpack.c.b16 %v1153, %v1149
      %v1818 = vpack.c.b16 %v1158, %v1154
      %v1819 = vpack.c.b16 %v1159, %v1155
      %v1820 = vpack.c.b16 %v1160, %v1156
      %v1821 = vpack.c.b16 %v1161, %v1157
      %v1822 = vpack.c.b16 %v1166, %v1162
      %v1823 = vpack.c.b16 %v1167, %v1163
      %v1824 = vpack.c.b16 %v1168, %v1164
      %v1825 = vpack.c.b16 %v1169, %v1165
      %v1826 = vpack.c.b16 %v1174, %v1170
      %v1827 = vpack.c.b16 %v1175, %v1171
      %v1828 = vpack.c.b16 %v1176, %v1172
      %v1829 = vpack.c.b16 %v1177, %v1173
      %v1830 = vpack.c.b16 %v1182, %v1178
      %v1831 = vpack.c.b16 %v1183, %v1179
      %v1832 = vpack.c.b16 %v1184, %v1180
      %v1833 = vpack.c.b16 %v1185, %v1181
      %v1834 = vpack.c.b16 %v1190, %v1186
      %v1835 = vpack.c.b16 %v1191, %v1187
      %v1836 = vpack.c.b16 %v1192, %v1188
      %v1837 = vpack.c.b16 %v1193, %v1189
      %v1838 = vpack.c.b16 %v1198, %v1194
      %v1839 = vpack.c.b16 %v1199, %v1195
      %v1840 = vpack.c.b16 %v1200, %v1196
      %v1841 = vpack.c.b16 %v1201, %v1197
      %v1842 = vpack.c.b16 %v1206, %v1202
      %v1843 = vpack.c.b16 %v1207, %v1203
      %v1844 = vpack.c.b16 %v1208, %v1204
      %v1845 = vpack.c.b16 %v1209, %v1205
      %v1846 = vpack.c.b16 %v1214, %v1210
      %v1847 = vpack.c.b16 %v1215, %v1211
      %v1848 = vpack.c.b16 %v1216, %v1212
      %v1849 = vpack.c.b16 %v1217, %v1213
      %v1850 = vpack.c.b16 %v1222, %v1218
      %v1851 = vpack.c.b16 %v1223, %v1219
      %v1852 = vpack.c.b16 %v1224, %v1220
      %v1853 = vpack.c.b16 %v1225, %v1221
      %v1854 = vpack.c.b16 %v1230, %v1226
      %v1855 = vpack.c.b16 %v1231, %v1227
      %v1856 = vpack.c.b16 %v1232, %v1228
      %v1857 = vpack.c.b16 %v1233, %v1229
      %v1858 = vpack.c.b16 %v1238, %v1234
      %v1859 = vpack.c.b16 %v1239, %v1235
      %v1860 = vpack.c.b16 %v1240, %v1236
      %v1861 = vpack.c.b16 %v1241, %v1237
      %v1862 = vpack.c.b16 %v1246, %v1242
      %v1863 = vpack.c.b16 %v1247, %v1243
      %v1864 = vpack.c.b16 %v1248, %v1244
      %v1865 = vpack.c.b16 %v1249, %v1245
      %v1866 = vpack.c.b16 %v1254, %v1250
      %v1867 = vpack.c.b16 %v1255, %v1251
      %v1868 = vpack.c.b16 %v1256, %v1252
      %v1869 = vpack.c.b16 %v1257, %v1253
      %v1870 = vpack.c.b16 %v1262, %v1258
      %v1871 = vpack.c.b16 %v1263, %v1259
      %v1872 = vpack.c.b16 %v1264, %v1260
      %v1873 = vpack.c.b16 %v1265, %v1261
      %v1874 = vpack.c.b16 %v1270, %v1266
      %v1875 = vpack.c.b16 %v1271, %v1267
      %v1876 = vpack.c.b16 %v1272, %v1268
      %v1877 = vpack.c.b16 %v1273, %v1269
      %v1878 = vpack.c.b16 %v1278, %v1274
      %v1879 = vpack.c.b16 %v1279, %v1275
      %v1880 = vpack.c.b16 %v1280, %v1276
      %v1881 = vpack.c.b16 %v1281, %v1277
      %v1882 = vpack.c.b16 %v1286, %v1282
      %v1883 = vpack.c.b16 %v1287, %v1283
      %v1884 = vpack.c.b16 %v1288, %v1284
      %v1885 = vpack.c.b16 %v1289, %v1285
      %v1886 = vpack.c.b16 %v1294, %v1290
      %v1887 = vpack.c.b16 %v1295, %v1291
      %v1888 = vpack.c.b16 %v1296, %v1292
      %v1889 = vpack.c.b16 %v1297, %v1293
      %v1890 = vpack.c.b16 %v1302, %v1298
      %v1891 = vpack.c.b16 %v1303, %v1299
      %v1892 = vpack.c.b16 %v1304, %v1300
      %v1893 = vpack.c.b16 %v1305, %v1301
      %v1894 = vpack.c.b16 %v1310, %v1306
      %v1895 = vpack.c.b16 %v1311, %v1307
      %v1896 = vpack.c.b16 %v1312, %v1308
      %v1897 = vpack.c.b16 %v1313, %v1309
      %v1898 = vpack.c.b16 %v1318, %v1314
      %v1899 = vpack.c.b16 %v1319, %v1315
      %v1900 = vpack.c.b16 %v1320, %v1316
      %v1901 = vpack.c.b16 %v1321, %v1317
      %v1902 = vpack.c.b16 %v1326, %v1322
      %v1903 = vpack.c.b16 %v1327, %v1323
      %v1904 = vpack.c.b16 %v1328, %v1324
      %v1905 = vpack.c.b16 %v1329, %v1325
      %v1906 = vpack.c.b16 %v1334, %v1330
      %v1907 = vpack.c.b16 %v1335, %v1331
      %v1908 = vpack.c.b16 %v1336, %v1332
      %v1909 = vpack.c.b16 %v1337, %v1333
      %v1910 = vpack.c.b16 %v1342, %v1338
      %v1911 = vpack.c.b16 %v1343, %v1339
      %v1912 = vpack.c.b16 %v1344, %v1340
      %v1913 = vpack.c.b16 %v1345, %v1341
      %v1914 = vpack.c.b16 %v1350, %v1346
      %v1915 = vpack.c.b16 %v1351, %v1347
      %v1916 = vpack.c.b16 %v1352, %v1348
      %v1917 = vpack.c.b16 %v1353, %v1349
      %v1918 = vpack.c.b16 %v1358, %v1354
      %v1919 = vpack.c.b16 %v1359, %v1355
      %v1920 = vpack.c.b16 %v1360, %v1356
      %v1921 = vpack.c.b16 %v1361, %v1357
      %v1922 = vpack.c.b16 %v1366, %v1362
      %v1923 = vpack.c.b16 %v1367, %v1363
      %v1924 = vpack.c.b16 %v1368, %v1364
      %v1925 = vpack.c.b16 %v1369, %v1365
      %v1926 = vpack.c.b16 %v1374, %v1370
      %v1927 = vpack.c.b16 %v1375, %v1371
      %v1928 = vpack.c.b16 %v1376, %v1372
      %v1929 = vpack.c.b16 %v1377, %v1373
      %v1930 = vpack.c.b16 %v1382, %v1378
      %v1931 = vpack.c.b16 %v1383, %v1379
      %v1932 = vpack.c.b16 %v1384, %v1380
      %v1933 = vpack.c.b16 %v1385, %v1381
      %v1934 = vpack.c.b16 %v1390, %v1386
      %v1935 = vpack.c.b16 %v1391, %v1387
      %v1936 = vpack.c.b16 %v1392, %v1388
      %v1937 = vpack.c.b16 %v1393, %v1389
      %v1938 = vpack.c.b16 %v1398, %v1394
      %v1939 = vpack.c.b16 %v1399, %v1395
      %v1940 = vpack.c.b16 %v1400, %v1396
      %v1941 = vpack.c.b16 %v1401, %v1397
      %v1942 = vpack.c.b16 %v1406, %v1402
      %v1943 = vpack.c.b16 %v1407, %v1403
      %v1944 = vpack.c.b16 %v1408, %v1404
      %v1945 = vpack.c.b16 %v1409, %v1405
      %v1946 = vpack.c.b16 %v1414, %v1410
      %v1947 = vpack.c.b16 %v1415, %v1411
      %v1948 = vpack.c.b16 %v1416, %v1412
      %v1949 = vpack.c.b16 %v1417, %v1413
      %v1950 = vpack.c.b16 %v1422, %v1418
      %v1951 = vpack.c.b16 %v1423, %v1419
      %v1952 = vpack.c.b16 %v1424, %v1420
      %v1953 = vpack.c.b16 %v1425, %v1421
      %v1954 = vpack.c.b16 %v1430, %v1426
      %v1955 = vpack.c.b16 %v1431, %v1427
      %v1956 = vpack.c.b16 %v1432, %v1428
      %v1957 = vpack.c.b16 %v1433, %v1429
      %v1958 = vpack.c.b16 %v1438, %v1434
      %v1959 = vpack.c.b16 %v1439, %v1435
      %v1960 = vpack.c.b16 %v1440, %v1436
      %v1961 = vpack.c.b16 %v1441, %v1437
      %v1962 = vpack.c.b16 %v1446, %v1442
      %v1963 = vpack.c.b16 %v1447, %v1443
      %v1964 = vpack.c.b16 %v1448, %v1444
      %v1965 = vpack.c.b16 %v1449, %v1445
      %v1966 = vpack.c.b16 %v1454, %v1450
      %v1967 = vpack.c.b16 %v1455, %v1451
      %v1968 = vpack.c.b16 %v1456, %v1452
      %v1969 = vpack.c.b16 %v1457, %v1453
      %v1970 = vpack.c.b16 %v1462, %v1458
      %v1971 = vpack.c.b16 %v1463, %v1459
      %v1972 = vpack.c.b16 %v1464, %v1460
      %v1973 = vpack.c.b16 %v1465, %v1461
      %v1974 = vpack.c.b16 %v1470, %v1466
      %v1975 = vpack.c.b16 %v1471, %v1467
      %v1976 = vpack.c.b16 %v1472, %v1468
      %v1977 = vpack.c.b16 %v1473, %v1469
      %v1978 = vpack.c.b16 %v1478, %v1474
      %v1979 = vpack.c.b16 %v1479, %v1475
      %v1980 = vpack.c.b16 %v1480, %v1476
      %v1981 = vpack.c.b16 %v1481, %v1477
      %v1982 = vpack.c.b16 %v1486, %v1482
      %v1983 = vpack.c.b16 %v1487, %v1483
      %v1984 = vpack.c.b16 %v1488, %v1484
      %v1985 = vpack.c.b16 %v1489, %v1485
      %v1986 = vpack.c.b16 %v1494, %v1490
      %v1987 = vpack.c.b16 %v1495, %v1491
      %v1988 = vpack.c.b16 %v1496, %v1492
      %v1989 = vpack.c.b16 %v1497, %v1493
      %v1990 = vpack.c.b16 %v1502, %v1498
      %v1991 = vpack.c.b16 %v1503, %v1499
      %v1992 = vpack.c.b16 %v1504, %v1500
      %v1993 = vpack.c.b16 %v1505, %v1501
      %v1994 = vpack.c.b16 %v1510, %v1506
      %v1995 = vpack.c.b16 %v1511, %v1507
      %v1996 = vpack.c.b16 %v1512, %v1508
      %v1997 = vpack.c.b16 %v1513, %v1509
      %v1998 = vpack.c.b16 %v1518, %v1514
      %v1999 = vpack.c.b16 %v1519, %v1515
      %v2000 = vpack.c.b16 %v1520, %v1516
      %v2001 = vpack.c.b16 %v1521, %v1517
      %v2002 = vpack.c.b16 %v1526, %v1522
      %v2003 = vpack.c.b16 %v1527, %v1523
      %v2004 = vpack.c.b16 %v1528, %v1524
      %v2005 = vpack.c.b16 %v1529, %v1525
      %v2006 = vpack.c.b16 %v1534, %v1530
      %v2007 = vpack.c.b16 %v1535, %v1531
      %v2008 = vpack.c.b16 %v1536, %v1532
      %v2009 = vpack.c.b16 %v1537, %v1533
      %v2010 = vpack.c.b16 %v1542, %v1538
      %v2011 = vpack.c.b16 %v1543, %v1539
      %v2012 = vpack.c.b16 %v1544, %v1540
      %v2013 = vpack.c.b16 %v1545, %v1541
      %v2014 = vpack.c.b16 %v1550, %v1546
      %v2015 = vpack.c.b16 %v1551, %v1547
      %v2016 = vpack.c.b16 %v1552, %v1548
      %v2017 = vpack.c.b16 %v1553, %v1549
      %v2018 = vpack.c.b16 %v1558, %v1554
      %v2019 = vpack.c.b16 %v1559, %v1555
      %v2020 = vpack.c.b16 %v1560, %v1556
      %v2021 = vpack.c.b16 %v1561, %v1557
      %v2022 = vpack.c.b16 %v1566, %v1562
      %v2023 = vpack.c.b16 %v1567, %v1563
      %v2024 = vpack.c.b16 %v1568, %v1564
      %v2025 = vpack.c.b16 %v1569, %v1565
      %v2026 = vpack.c.b16 %v1574, %v1570
      %v2027 = vpack.c.b16 %v1575, %v1571
      %v2028 = vpack.c.b16 %v1576, %v1572
      %v2029 = vpack.c.b16 %v1577, %v1573
      %v2030 = vpack.c.b16 %v1582, %v1578
      %v2031 = vpack.c.b16 %v1583, %v1579
      %v2032 = vpack.c.b16 %v1584, %v1580
      %v2033 = vpack.c.b16 %v1585, %v1581
      %v2034 = vpack.c.b16 %v1590, %v1586
      %v2035 = vpack.c.b16 %v1591, %v1587
      %v2036 = vpack.c.b16 %v1592, %v1588
      %v2037 = vpack.c.b16 %v1593, %v1589
      %v2038 = vpack.c.b16 %v1598, %v1594
      %v2039 = vpack.c.b16 %v1599, %v1595
      %v2040 = vpack.c.b16 %v1600, %v1596
      %v2041 = vpack.c.b16 %v1601, %v1597
      %v2042 = vpack.c.b16 %v1606, %v1602
      %v2043 = vpack.c.b16 %v1607, %v1603
      %v2044 = vpack.c.b16 %v1608, %v1604
      %v2045 = vpack.c.b16 %v1609, %v1605
      %v2046 = vpack.c.b16 %v1614, %v1610
      %v2047 = vpack.c.b16 %v1615, %v1611
      %v2048 = vpack.c.b16 %v1616, %v1612
      %v2049 = vpack.c.b16 %v1617, %v1613
      %v2050 = vpack.c.b16 %v1622, %v1618
      %v2051 = vpack.c.b16 %v1623, %v1619
      %v2052 = vpack.c.b16 %v1624, %v1620
      %v2053 = vpack.c.b16 %v1625, %v1621
      %v2054 = vpack.c.b16 %v1630, %v1626
      %v2055 = vpack.c.b16 %v1631, %v1627
      %v2056 = vpack.c.b16 %v1632, %v1628
      %v2057 = vpack.c.b16 %v1633, %v1629
      %v2058 = vpack.c.b16 %v1638, %v1634
      %v2059 = vpack.c.b16 %v1639, %v1635
      %v2060 = vpack.c.b16 %v1640, %v1636
      %v2061 = vpack.c.b16 %v1641, %v1637
      %v2062 = vpack.c.b16 %v1646, %v1642
      %v2063 = vpack.c.b16 %v1647, %v1643
      %v2064 = vpack.c.b16 %v1648, %v1644
      %v2065 = vpack.c.b16 %v1649, %v1645
      %v2066 = vpack.c.b16 %v1654, %v1650
      %v2067 = vpack.c.b16 %v1655, %v1651
      %v2068 = vpack.c.b16 %v1656, %v1652
      %v2069 = vpack.c.b16 %v1657, %v1653
      %v2070 = vpack.c.b16 %v1662, %v1658
      %v2071 = vpack.c.b16 %v1663, %v1659
      %v2072 = vpack.c.b16 %v1664, %v1660
      %v2073 = vpack.c.b16 %v1665, %v1661
      %v2074 = vpack.c.b16 %v1670, %v1666
      %v2075 = vpack.c.b16 %v1671, %v1667
      %v2076 = vpack.c.b16 %v1672, %v1668
      %v2077 = vpack.c.b16 %v1673, %v1669
      %v2078 = vpack.c.b16 %v1678, %v1674
      %v2079 = vpack.c.b16 %v1679, %v1675
      %v2080 = vpack.c.b16 %v1680, %v1676
      %v2081 = vpack.c.b16 %v1681, %v1677
      %v2082 = vpack.c.b16 %v1686, %v1682
      %v2083 = vpack.c.b16 %v1687, %v1683
      %v2084 = vpack.c.b16 %v1688, %v1684
      %v2085 = vpack.c.b16 %v1689, %v1685
      %v2086 = vpack.c.b16 %v1694, %v1690
      %v2087 = vpack.c.b16 %v1695, %v1691
      %v2088 = vpack.c.b16 %v1696, %v1692
      %v2089 = vpack.c.b16 %v1697, %v1693
      %v2090 = vpack.c.b16 %v1702, %v1698
      %v2091 = vpack.c.b16 %v1703, %v1699
      %v2092 = vpack.c.b16 %v1704, %v1700
      %v2093 = vpack.c.b16 %v1705, %v1701
      %v2094 = vpack.c.b16 %v1710, %v1706
      %v2095 = vpack.c.b16 %v1711, %v1707
      %v2096 = vpack.c.b16 %v1712, %v1708
      %v2097 = vpack.c.b16 %v1713, %v1709
      %v2098 = vpack.c.b16 %v1718, %v1714
      %v2099 = vpack.c.b16 %v1719, %v1715
      %v2100 = vpack.c.b16 %v1720, %v1716
      %v2101 = vpack.c.b16 %v1721, %v1717
      %v2102 = vpack.c.b16 %v1726, %v1722
      %v2103 = vpack.c.b16 %v1727, %v1723
      %v2104 = vpack.c.b16 %v1728, %v1724
      %v2105 = vpack.c.b16 %v1729, %v1725
      %v2106 = vpack.c.b16 %v1734, %v1730
      %v2107 = vpack.c.b16 %v1735, %v1731
      %v2108 = vpack.c.b16 %v1736, %v1732
      %v2109 = vpack.c.b16 %v1737, %v1733
      %v2110 = vpack.c.b16 %v1742, %v1738
      %v2111 = vpack.c.b16 %v1743, %v1739
      %v2112 = vpack.c.b16 %v1744, %v1740
      %v2113 = vpack.c.b16 %v1745, %v1741
      %v2114 = vpack.c.b16 %v1750, %v1746
      %v2115 = vpack.c.b16 %v1751, %v1747
      %v2116 = vpack.c.b16 %v1752, %v1748
      %v2117 = vpack.c.b16 %v1753, %v1749
      %v2118 = vpack.c.b16 %v1758, %v1754
      %v2119 = vpack.c.b16 %v1759, %v1755
      %v2120 = vpack.c.b16 %v1760, %v1756
      %v2121 = vpack.c.b16 %v1761, %v1757
      %v2122 = vpack.c.b16 %v1766, %v1762
      %v2123 = vpack.c.b16 %v1767, %v1763
      %v2124 = vpack.c.b16 %v1768, %v1764
      %v2125 = vpack.c.b16 %v1769, %v1765
      %v2126 = vpack.c.b16 %v1774, %v1770
      %v2127 = vpack.c.b16 %v1775, %v1771
      %v2128 = vpack.c.b16 %v1776, %v1772
      %v2129 = vpack.c.b16 %v1777, %v1773
      %v2130 = vpack.c.b16 %v1782, %v1778
      %v2131 = vpack.c.b16 %v1783, %v1779
      %v2132 = vpack.c.b16 %v1784, %v1780
      %v2133 = vpack.c.b16 %v1785, %v1781
      %v2134 = vpack.c.b16 %v1790, %v1786
      %v2135 = vpack.c.b16 %v1791, %v1787
      %v2136 = vpack.c.b16 %v1792, %v1788
      %v2137 = vpack.c.b16 %v1793, %v1789
      %vm2482 = vcmask 785408
      %v2484 = vsel %vm2482, %v396, 0
      %v2487 = vsel %vm2482, %v407, 0
      %2489 = vmatpush.bf16.msra.mxu0 %v1822
      %2490 = vmatpush.bf16.msra.mxu0 %v1818
      %2491 = vmatpush.bf16.msra.mxu0 %v1814
      %2492 = vmatpush.bf16.msra.mxu0 %v1810
      %2493 = vmatpush.bf16.msra.mxu0 %v1806
      %2494 = vmatpush.bf16.msra.mxu0 %v1802
      %2495 = vmatpush.bf16.msra.mxu0 %v1798
      %2496 = vmatpush.bf16.msra.mxu0 %v1794
      %2497 = vmatmul.bf16.gmra.mxu0 %v386
      %v2498 = vpop.f32.mrf.mxu0
      %v2499 = vadd.f32 %v754, %v2498
      %v2500 = vpop.f32.mrf.mxu0
      %v2501 = vadd.f32 %v754, %v2500
      %2502 = vmatmul.bf16.gmra.mxu0 %v397
      %v2503 = vpop.f32.mrf.mxu0
      %v2504 = vadd.f32 %v754, %v2503
      %v2505 = vpop.f32.mrf.mxu0
      %v2506 = vadd.f32 %v754, %v2505
      %2507 = vdwg.mxu0
      %2508 = vmatpush.bf16.msra.mxu0 %v1854
      %2509 = vmatpush.bf16.msra.mxu0 %v1850
      %2510 = vmatpush.bf16.msra.mxu0 %v1846
      %2511 = vmatpush.bf16.msra.mxu0 %v1842
      %2512 = vmatpush.bf16.msra.mxu0 %v1838
      %2513 = vmatpush.bf16.msra.mxu0 %v1834
      %2514 = vmatpush.bf16.msra.mxu0 %v1830
      %2515 = vmatpush.bf16.msra.mxu0 %v1826
      %2516 = vmatmul.bf16.gmra.mxu0 %v387
      %v2517 = vpop.f32.mrf.mxu0
      %v2518 = vadd.f32 %v2499, %v2517
      %v2519 = vpop.f32.mrf.mxu0
      %v2520 = vadd.f32 %v2501, %v2519
      %2521 = vmatmul.bf16.gmra.mxu0 %v398
      %v2522 = vpop.f32.mrf.mxu0
      %v2523 = vadd.f32 %v2504, %v2522
      %v2524 = vpop.f32.mrf.mxu0
      %v2525 = vadd.f32 %v2506, %v2524
      %2526 = vdwg.mxu0
      %2527 = vmatpush.bf16.msra.mxu0 %v1886
      %2528 = vmatpush.bf16.msra.mxu0 %v1882
      %2529 = vmatpush.bf16.msra.mxu0 %v1878
      %2530 = vmatpush.bf16.msra.mxu0 %v1874
      %2531 = vmatpush.bf16.msra.mxu0 %v1870
      %2532 = vmatpush.bf16.msra.mxu0 %v1866
      %2533 = vmatpush.bf16.msra.mxu0 %v1862
      %2534 = vmatpush.bf16.msra.mxu0 %v1858
      %2535 = vmatmul.bf16.gmra.mxu0 %v388
      %v2536 = vpop.f32.mrf.mxu0
      %v2537 = vadd.f32 %v2518, %v2536
      %v2538 = vpop.f32.mrf.mxu0
      %v2539 = vadd.f32 %v2520, %v2538
      %2540 = vmatmul.bf16.gmra.mxu0 %v399
      %v2541 = vpop.f32.mrf.mxu0
      %v2542 = vadd.f32 %v2523, %v2541
      %v2543 = vpop.f32.mrf.mxu0
      %v2544 = vadd.f32 %v2525, %v2543
      %2545 = vdwg.mxu0
      %2546 = vmatpush.bf16.msra.mxu0 %v1918
      %2547 = vmatpush.bf16.msra.mxu0 %v1914
      %2548 = vmatpush.bf16.msra.mxu0 %v1910
      %2549 = vmatpush.bf16.msra.mxu0 %v1906
      %2550 = vmatpush.bf16.msra.mxu0 %v1902
      %2551 = vmatpush.bf16.msra.mxu0 %v1898
      %2552 = vmatpush.bf16.msra.mxu0 %v1894
      %2553 = vmatpush.bf16.msra.mxu0 %v1890
      %2554 = vmatmul.bf16.gmra.mxu0 %v389
      %v2555 = vpop.f32.mrf.mxu0
      %v2556 = vadd.f32 %v2537, %v2555
      %v2557 = vpop.f32.mrf.mxu0
      %v2558 = vadd.f32 %v2539, %v2557
      %2559 = vmatmul.bf16.gmra.mxu0 %v400
      %v2560 = vpop.f32.mrf.mxu0
      %v2561 = vadd.f32 %v2542, %v2560
      %v2562 = vpop.f32.mrf.mxu0
      %v2563 = vadd.f32 %v2544, %v2562
      %2564 = vdwg.mxu0
      %2565 = vmatpush.bf16.msra.mxu0 %v1950
      %2566 = vmatpush.bf16.msra.mxu0 %v1946
      %2567 = vmatpush.bf16.msra.mxu0 %v1942
      %2568 = vmatpush.bf16.msra.mxu0 %v1938
      %2569 = vmatpush.bf16.msra.mxu0 %v1934
      %2570 = vmatpush.bf16.msra.mxu0 %v1930
      %2571 = vmatpush.bf16.msra.mxu0 %v1926
      %2572 = vmatpush.bf16.msra.mxu0 %v1922
      %2573 = vmatmul.bf16.gmra.mxu0 %v390
      %v2574 = vpop.f32.mrf.mxu0
      %v2575 = vadd.f32 %v2556, %v2574
      %v2576 = vpop.f32.mrf.mxu0
      %v2577 = vadd.f32 %v2558, %v2576
      %2578 = vmatmul.bf16.gmra.mxu0 %v401
      %v2579 = vpop.f32.mrf.mxu0
      %v2580 = vadd.f32 %v2561, %v2579
      %v2581 = vpop.f32.mrf.mxu0
      %v2582 = vadd.f32 %v2563, %v2581
      %2583 = vdwg.mxu0
      %2584 = vmatpush.bf16.msra.mxu0 %v1982
      %2585 = vmatpush.bf16.msra.mxu0 %v1978
      %2586 = vmatpush.bf16.msra.mxu0 %v1974
      %2587 = vmatpush.bf16.msra.mxu0 %v1970
      %2588 = vmatpush.bf16.msra.mxu0 %v1966
      %2589 = vmatpush.bf16.msra.mxu0 %v1962
      %2590 = vmatpush.bf16.msra.mxu0 %v1958
      %2591 = vmatpush.bf16.msra.mxu0 %v1954
      %2592 = vmatmul.bf16.gmra.mxu0 %v391
      %v2593 = vpop.f32.mrf.mxu0
      %v2594 = vadd.f32 %v2575, %v2593
      %v2595 = vpop.f32.mrf.mxu0
      %v2596 = vadd.f32 %v2577, %v2595
      %2597 = vmatmul.bf16.gmra.mxu0 %v402
      %v2598 = vpop.f32.mrf.mxu0
      %v2599 = vadd.f32 %v2580, %v2598
      %v2600 = vpop.f32.mrf.mxu0
      %v2601 = vadd.f32 %v2582, %v2600
      %2602 = vdwg.mxu0
      %2603 = vmatpush.bf16.msra.mxu0 %v2014
      %2604 = vmatpush.bf16.msra.mxu0 %v2010
      %2605 = vmatpush.bf16.msra.mxu0 %v2006
      %2606 = vmatpush.bf16.msra.mxu0 %v2002
      %2607 = vmatpush.bf16.msra.mxu0 %v1998
      %2608 = vmatpush.bf16.msra.mxu0 %v1994
      %2609 = vmatpush.bf16.msra.mxu0 %v1990
      %2610 = vmatpush.bf16.msra.mxu0 %v1986
      %2611 = vmatmul.bf16.gmra.mxu0 %v392
      %v2612 = vpop.f32.mrf.mxu0
      %v2613 = vadd.f32 %v2594, %v2612
      %v2614 = vpop.f32.mrf.mxu0
      %v2615 = vadd.f32 %v2596, %v2614
      %2616 = vmatmul.bf16.gmra.mxu0 %v403
      %v2617 = vpop.f32.mrf.mxu0
      %v2618 = vadd.f32 %v2599, %v2617
      %v2619 = vpop.f32.mrf.mxu0
      %v2620 = vadd.f32 %v2601, %v2619
      %2621 = vdwg.mxu0
      %2622 = vmatpush.bf16.msra.mxu0 %v2046
      %2623 = vmatpush.bf16.msra.mxu0 %v2042
      %2624 = vmatpush.bf16.msra.mxu0 %v2038
      %2625 = vmatpush.bf16.msra.mxu0 %v2034
      %2626 = vmatpush.bf16.msra.mxu0 %v2030
      %2627 = vmatpush.bf16.msra.mxu0 %v2026
      %2628 = vmatpush.bf16.msra.mxu0 %v2022
      %2629 = vmatpush.bf16.msra.mxu0 %v2018
      %2630 = vmatmul.bf16.gmra.mxu0 %v393
      %v2631 = vpop.f32.mrf.mxu0
      %v2632 = vadd.f32 %v2613, %v2631
      %v2633 = vpop.f32.mrf.mxu0
      %v2634 = vadd.f32 %v2615, %v2633
      %2635 = vmatmul.bf16.gmra.mxu0 %v404
      %v2636 = vpop.f32.mrf.mxu0
      %v2637 = vadd.f32 %v2618, %v2636
      %v2638 = vpop.f32.mrf.mxu0
      %v2639 = vadd.f32 %v2620, %v2638
      %2640 = vdwg.mxu0
      %2641 = vmatpush.bf16.msra.mxu0 %v2078
      %2642 = vmatpush.bf16.msra.mxu0 %v2074
      %2643 = vmatpush.bf16.msra.mxu0 %v2070
      %2644 = vmatpush.bf16.msra.mxu0 %v2066
      %2645 = vmatpush.bf16.msra.mxu0 %v2062
      %2646 = vmatpush.bf16.msra.mxu0 %v2058
      %2647 = vmatpush.bf16.msra.mxu0 %v2054
      %2648 = vmatpush.bf16.msra.mxu0 %v2050
      %2649 = vmatmul.bf16.gmra.mxu0 %v394
      %v2650 = vpop.f32.mrf.mxu0
      %v2651 = vadd.f32 %v2632, %v2650
      %v2652 = vpop.f32.mrf.mxu0
      %v2653 = vadd.f32 %v2634, %v2652
      %2654 = vmatmul.bf16.gmra.mxu0 %v405
      %v2655 = vpop.f32.mrf.mxu0
      %v2656 = vadd.f32 %v2637, %v2655
      %v2657 = vpop.f32.mrf.mxu0
      %v2658 = vadd.f32 %v2639, %v2657
      %2659 = vdwg.mxu0
      %2660 = vmatpush.bf16.msra.mxu0 %v2110
      %2661 = vmatpush.bf16.msra.mxu0 %v2106
      %2662 = vmatpush.bf16.msra.mxu0 %v2102
      %2663 = vmatpush.bf16.msra.mxu0 %v2098
      %2664 = vmatpush.bf16.msra.mxu0 %v2094
      %2665 = vmatpush.bf16.msra.mxu0 %v2090
      %2666 = vmatpush.bf16.msra.mxu0 %v2086
      %2667 = vmatpush.bf16.msra.mxu0 %v2082
      %2668 = vmatmul.bf16.gmra.mxu0 %v395
      %v2669 = vpop.f32.mrf.mxu0
      %v2670 = vadd.f32 %v2651, %v2669
      %v2671 = vpop.f32.mrf.mxu0
      %v2672 = vadd.f32 %v2653, %v2671
      %2673 = vmatmul.bf16.gmra.mxu0 %v406
      %v2674 = vpop.f32.mrf.mxu0
      %v2675 = vadd.f32 %v2656, %v2674
      %v2676 = vpop.f32.mrf.mxu0
      %v2677 = vadd.f32 %v2658, %v2676
      %2678 = vdwg.mxu0
      %2679 = vmatpush.bf16.msra.mxu0 0
      %2680 = vmatpush.bf16.msra.mxu0 0
      %2681 = vmatpush.bf16.msra.mxu0 %v2134
      %2682 = vmatpush.bf16.msra.mxu0 %v2130
      %2683 = vmatpush.bf16.msra.mxu0 %v2126
      %2684 = vmatpush.bf16.msra.mxu0 %v2122
      %2685 = vmatpush.bf16.msra.mxu0 %v2118
      %2686 = vmatpush.bf16.msra.mxu0 %v2114
      %2687 = vmatmul.bf16.gmra.mxu0 %v2484
      %v2688 = vpop.f32.mrf.mxu0
      %v2689 = vadd.f32 %v2670, %v2688
      %v2690 = vpop.f32.mrf.mxu0
      %v2691 = vadd.f32 %v2672, %v2690
      %2692 = vmatmul.bf16.gmra.mxu0 %v2487
      %v2693 = vpop.f32.mrf.mxu0
      %v2694 = vadd.f32 %v2675, %v2693
      %v2695 = vpop.f32.mrf.mxu0
      %v2696 = vadd.f32 %v2677, %v2695
      %2697 = vdwg.mxu0
      %2698 = vmatpush.bf16.msra.mxu0 %v1823
      %2699 = vmatpush.bf16.msra.mxu0 %v1819
      %2700 = vmatpush.bf16.msra.mxu0 %v1815
      %2701 = vmatpush.bf16.msra.mxu0 %v1811
      %2702 = vmatpush.bf16.msra.mxu0 %v1807
      %2703 = vmatpush.bf16.msra.mxu0 %v1803
      %2704 = vmatpush.bf16.msra.mxu0 %v1799
      %2705 = vmatpush.bf16.msra.mxu0 %v1795
      %2706 = vmatmul.bf16.gmra.mxu0 %v386
      %v2707 = vpop.f32.mrf.mxu0
      %v2708 = vadd.f32 %v755, %v2707
      %v2709 = vpop.f32.mrf.mxu0
      %v2710 = vadd.f32 %v755, %v2709
      %2711 = vmatmul.bf16.gmra.mxu0 %v397
      %v2712 = vpop.f32.mrf.mxu0
      %v2713 = vadd.f32 %v755, %v2712
      %v2714 = vpop.f32.mrf.mxu0
      %v2715 = vadd.f32 %v755, %v2714
      %2716 = vdwg.mxu0
      %2717 = vmatpush.bf16.msra.mxu0 %v1855
      %2718 = vmatpush.bf16.msra.mxu0 %v1851
      %2719 = vmatpush.bf16.msra.mxu0 %v1847
      %2720 = vmatpush.bf16.msra.mxu0 %v1843
      %2721 = vmatpush.bf16.msra.mxu0 %v1839
      %2722 = vmatpush.bf16.msra.mxu0 %v1835
      %2723 = vmatpush.bf16.msra.mxu0 %v1831
      %2724 = vmatpush.bf16.msra.mxu0 %v1827
      %2725 = vmatmul.bf16.gmra.mxu0 %v387
      %v2726 = vpop.f32.mrf.mxu0
      %v2727 = vadd.f32 %v2708, %v2726
      %v2728 = vpop.f32.mrf.mxu0
      %v2729 = vadd.f32 %v2710, %v2728
      %2730 = vmatmul.bf16.gmra.mxu0 %v398
      %v2731 = vpop.f32.mrf.mxu0
      %v2732 = vadd.f32 %v2713, %v2731
      %v2733 = vpop.f32.mrf.mxu0
      %v2734 = vadd.f32 %v2715, %v2733
      %2735 = vdwg.mxu0
      %2736 = vmatpush.bf16.msra.mxu0 %v1887
      %2737 = vmatpush.bf16.msra.mxu0 %v1883
      %2738 = vmatpush.bf16.msra.mxu0 %v1879
      %2739 = vmatpush.bf16.msra.mxu0 %v1875
      %2740 = vmatpush.bf16.msra.mxu0 %v1871
      %2741 = vmatpush.bf16.msra.mxu0 %v1867
      %2742 = vmatpush.bf16.msra.mxu0 %v1863
      %2743 = vmatpush.bf16.msra.mxu0 %v1859
      %2744 = vmatmul.bf16.gmra.mxu0 %v388
      %v2745 = vpop.f32.mrf.mxu0
      %v2746 = vadd.f32 %v2727, %v2745
      %v2747 = vpop.f32.mrf.mxu0
      %v2748 = vadd.f32 %v2729, %v2747
      %2749 = vmatmul.bf16.gmra.mxu0 %v399
      %v2750 = vpop.f32.mrf.mxu0
      %v2751 = vadd.f32 %v2732, %v2750
      %v2752 = vpop.f32.mrf.mxu0
      %v2753 = vadd.f32 %v2734, %v2752
      %2754 = vdwg.mxu0
      %2755 = vmatpush.bf16.msra.mxu0 %v1919
      %2756 = vmatpush.bf16.msra.mxu0 %v1915
      %2757 = vmatpush.bf16.msra.mxu0 %v1911
      %2758 = vmatpush.bf16.msra.mxu0 %v1907
      %2759 = vmatpush.bf16.msra.mxu0 %v1903
      %2760 = vmatpush.bf16.msra.mxu0 %v1899
      %2761 = vmatpush.bf16.msra.mxu0 %v1895
      %2762 = vmatpush.bf16.msra.mxu0 %v1891
      %2763 = vmatmul.bf16.gmra.mxu0 %v389
      %v2764 = vpop.f32.mrf.mxu0
      %v2765 = vadd.f32 %v2746, %v2764
      %v2766 = vpop.f32.mrf.mxu0
      %v2767 = vadd.f32 %v2748, %v2766
      %2768 = vmatmul.bf16.gmra.mxu0 %v400
      %v2769 = vpop.f32.mrf.mxu0
      %v2770 = vadd.f32 %v2751, %v2769
      %v2771 = vpop.f32.mrf.mxu0
      %v2772 = vadd.f32 %v2753, %v2771
      %2773 = vdwg.mxu0
      %2774 = vmatpush.bf16.msra.mxu0 %v1951
      %2775 = vmatpush.bf16.msra.mxu0 %v1947
      %2776 = vmatpush.bf16.msra.mxu0 %v1943
      %2777 = vmatpush.bf16.msra.mxu0 %v1939
      %2778 = vmatpush.bf16.msra.mxu0 %v1935
      %2779 = vmatpush.bf16.msra.mxu0 %v1931
      %2780 = vmatpush.bf16.msra.mxu0 %v1927
      %2781 = vmatpush.bf16.msra.mxu0 %v1923
      %2782 = vmatmul.bf16.gmra.mxu0 %v390
      %v2783 = vpop.f32.mrf.mxu0
      %v2784 = vadd.f32 %v2765, %v2783
      %v2785 = vpop.f32.mrf.mxu0
      %v2786 = vadd.f32 %v2767, %v2785
      %2787 = vmatmul.bf16.gmra.mxu0 %v401
      %v2788 = vpop.f32.mrf.mxu0
      %v2789 = vadd.f32 %v2770, %v2788
      %v2790 = vpop.f32.mrf.mxu0
      %v2791 = vadd.f32 %v2772, %v2790
      %2792 = vdwg.mxu0
      %2793 = vmatpush.bf16.msra.mxu0 %v1983
      %2794 = vmatpush.bf16.msra.mxu0 %v1979
      %2795 = vmatpush.bf16.msra.mxu0 %v1975
      %2796 = vmatpush.bf16.msra.mxu0 %v1971
      %2797 = vmatpush.bf16.msra.mxu0 %v1967
      %2798 = vmatpush.bf16.msra.mxu0 %v1963
      %2799 = vmatpush.bf16.msra.mxu0 %v1959
      %2800 = vmatpush.bf16.msra.mxu0 %v1955
      %2801 = vmatmul.bf16.gmra.mxu0 %v391
      %v2802 = vpop.f32.mrf.mxu0
      %v2803 = vadd.f32 %v2784, %v2802
      %v2804 = vpop.f32.mrf.mxu0
      %v2805 = vadd.f32 %v2786, %v2804
      %2806 = vmatmul.bf16.gmra.mxu0 %v402
      %v2807 = vpop.f32.mrf.mxu0
      %v2808 = vadd.f32 %v2789, %v2807
      %v2809 = vpop.f32.mrf.mxu0
      %v2810 = vadd.f32 %v2791, %v2809
      %2811 = vdwg.mxu0
      %2812 = vmatpush.bf16.msra.mxu0 %v2015
      %2813 = vmatpush.bf16.msra.mxu0 %v2011
      %2814 = vmatpush.bf16.msra.mxu0 %v2007
      %2815 = vmatpush.bf16.msra.mxu0 %v2003
      %2816 = vmatpush.bf16.msra.mxu0 %v1999
      %2817 = vmatpush.bf16.msra.mxu0 %v1995
      %2818 = vmatpush.bf16.msra.mxu0 %v1991
      %2819 = vmatpush.bf16.msra.mxu0 %v1987
      %2820 = vmatmul.bf16.gmra.mxu0 %v392
      %v2821 = vpop.f32.mrf.mxu0
      %v2822 = vadd.f32 %v2803, %v2821
      %v2823 = vpop.f32.mrf.mxu0
      %v2824 = vadd.f32 %v2805, %v2823
      %2825 = vmatmul.bf16.gmra.mxu0 %v403
      %v2826 = vpop.f32.mrf.mxu0
      %v2827 = vadd.f32 %v2808, %v2826
      %v2828 = vpop.f32.mrf.mxu0
      %v2829 = vadd.f32 %v2810, %v2828
      %2830 = vdwg.mxu0
      %2831 = vmatpush.bf16.msra.mxu0 %v2047
      %2832 = vmatpush.bf16.msra.mxu0 %v2043
      %2833 = vmatpush.bf16.msra.mxu0 %v2039
      %2834 = vmatpush.bf16.msra.mxu0 %v2035
      %2835 = vmatpush.bf16.msra.mxu0 %v2031
      %2836 = vmatpush.bf16.msra.mxu0 %v2027
      %2837 = vmatpush.bf16.msra.mxu0 %v2023
      %2838 = vmatpush.bf16.msra.mxu0 %v2019
      %2839 = vmatmul.bf16.gmra.mxu0 %v393
      %v2840 = vpop.f32.mrf.mxu0
      %v2841 = vadd.f32 %v2822, %v2840
      %v2842 = vpop.f32.mrf.mxu0
      %v2843 = vadd.f32 %v2824, %v2842
      %2844 = vmatmul.bf16.gmra.mxu0 %v404
      %v2845 = vpop.f32.mrf.mxu0
      %v2846 = vadd.f32 %v2827, %v2845
      %v2847 = vpop.f32.mrf.mxu0
      %v2848 = vadd.f32 %v2829, %v2847
      %2849 = vdwg.mxu0
      %2850 = vmatpush.bf16.msra.mxu0 %v2079
      %2851 = vmatpush.bf16.msra.mxu0 %v2075
      %2852 = vmatpush.bf16.msra.mxu0 %v2071
      %2853 = vmatpush.bf16.msra.mxu0 %v2067
      %2854 = vmatpush.bf16.msra.mxu0 %v2063
      %2855 = vmatpush.bf16.msra.mxu0 %v2059
      %2856 = vmatpush.bf16.msra.mxu0 %v2055
      %2857 = vmatpush.bf16.msra.mxu0 %v2051
      %2858 = vmatmul.bf16.gmra.mxu0 %v394
      %v2859 = vpop.f32.mrf.mxu0
      %v2860 = vadd.f32 %v2841, %v2859
      %v2861 = vpop.f32.mrf.mxu0
      %v2862 = vadd.f32 %v2843, %v2861
      %2863 = vmatmul.bf16.gmra.mxu0 %v405
      %v2864 = vpop.f32.mrf.mxu0
      %v2865 = vadd.f32 %v2846, %v2864
      %v2866 = vpop.f32.mrf.mxu0
      %v2867 = vadd.f32 %v2848, %v2866
      %2868 = vdwg.mxu0
      %2869 = vmatpush.bf16.msra.mxu0 %v2111
      %2870 = vmatpush.bf16.msra.mxu0 %v2107
      %2871 = vmatpush.bf16.msra.mxu0 %v2103
      %2872 = vmatpush.bf16.msra.mxu0 %v2099
      %2873 = vmatpush.bf16.msra.mxu0 %v2095
      %2874 = vmatpush.bf16.msra.mxu0 %v2091
      %2875 = vmatpush.bf16.msra.mxu0 %v2087
      %2876 = vmatpush.bf16.msra.mxu0 %v2083
      %2877 = vmatmul.bf16.gmra.mxu0 %v395
      %v2878 = vpop.f32.mrf.mxu0
      %v2879 = vadd.f32 %v2860, %v2878
      %v2880 = vpop.f32.mrf.mxu0
      %v2881 = vadd.f32 %v2862, %v2880
      %2882 = vmatmul.bf16.gmra.mxu0 %v406
      %v2883 = vpop.f32.mrf.mxu0
      %v2884 = vadd.f32 %v2865, %v2883
      %v2885 = vpop.f32.mrf.mxu0
      %v2886 = vadd.f32 %v2867, %v2885
      %2887 = vdwg.mxu0
      %2888 = vmatpush.bf16.msra.mxu0 0
      %2889 = vmatpush.bf16.msra.mxu0 0
      %2890 = vmatpush.bf16.msra.mxu0 %v2135
      %2891 = vmatpush.bf16.msra.mxu0 %v2131
      %2892 = vmatpush.bf16.msra.mxu0 %v2127
      %2893 = vmatpush.bf16.msra.mxu0 %v2123
      %2894 = vmatpush.bf16.msra.mxu0 %v2119
      %2895 = vmatpush.bf16.msra.mxu0 %v2115
      %2896 = vmatmul.bf16.gmra.mxu0 %v2484
      %v2897 = vpop.f32.mrf.mxu0
      %v2898 = vadd.f32 %v2879, %v2897
      %v2899 = vpop.f32.mrf.mxu0
      %v2900 = vadd.f32 %v2881, %v2899
      %2901 = vmatmul.bf16.gmra.mxu0 %v2487
      %v2902 = vpop.f32.mrf.mxu0
      %v2903 = vadd.f32 %v2884, %v2902
      %v2904 = vpop.f32.mrf.mxu0
      %v2905 = vadd.f32 %v2886, %v2904
      %2906 = vdwg.mxu0
      %2907 = vmatpush.bf16.msra.mxu0 %v1824
      %2908 = vmatpush.bf16.msra.mxu0 %v1820
      %2909 = vmatpush.bf16.msra.mxu0 %v1816
      %2910 = vmatpush.bf16.msra.mxu0 %v1812
      %2911 = vmatpush.bf16.msra.mxu0 %v1808
      %2912 = vmatpush.bf16.msra.mxu0 %v1804
      %2913 = vmatpush.bf16.msra.mxu0 %v1800
      %2914 = vmatpush.bf16.msra.mxu0 %v1796
      %2915 = vmatmul.bf16.gmra.mxu0 %v386
      %v2916 = vpop.f32.mrf.mxu0
      %v2917 = vadd.f32 %v756, %v2916
      %v2918 = vpop.f32.mrf.mxu0
      %v2919 = vadd.f32 %v756, %v2918
      %2920 = vmatmul.bf16.gmra.mxu0 %v397
      %v2921 = vpop.f32.mrf.mxu0
      %v2922 = vadd.f32 %v756, %v2921
      %v2923 = vpop.f32.mrf.mxu0
      %v2924 = vadd.f32 %v756, %v2923
      %2925 = vdwg.mxu0
      %2926 = vmatpush.bf16.msra.mxu0 %v1856
      %2927 = vmatpush.bf16.msra.mxu0 %v1852
      %2928 = vmatpush.bf16.msra.mxu0 %v1848
      %2929 = vmatpush.bf16.msra.mxu0 %v1844
      %2930 = vmatpush.bf16.msra.mxu0 %v1840
      %2931 = vmatpush.bf16.msra.mxu0 %v1836
      %2932 = vmatpush.bf16.msra.mxu0 %v1832
      %2933 = vmatpush.bf16.msra.mxu0 %v1828
      %2934 = vmatmul.bf16.gmra.mxu0 %v387
      %v2935 = vpop.f32.mrf.mxu0
      %v2936 = vadd.f32 %v2917, %v2935
      %v2937 = vpop.f32.mrf.mxu0
      %v2938 = vadd.f32 %v2919, %v2937
      %2939 = vmatmul.bf16.gmra.mxu0 %v398
      %v2940 = vpop.f32.mrf.mxu0
      %v2941 = vadd.f32 %v2922, %v2940
      %v2942 = vpop.f32.mrf.mxu0
      %v2943 = vadd.f32 %v2924, %v2942
      %2944 = vdwg.mxu0
      %2945 = vmatpush.bf16.msra.mxu0 %v1888
      %2946 = vmatpush.bf16.msra.mxu0 %v1884
      %2947 = vmatpush.bf16.msra.mxu0 %v1880
      %2948 = vmatpush.bf16.msra.mxu0 %v1876
      %2949 = vmatpush.bf16.msra.mxu0 %v1872
      %2950 = vmatpush.bf16.msra.mxu0 %v1868
      %2951 = vmatpush.bf16.msra.mxu0 %v1864
      %2952 = vmatpush.bf16.msra.mxu0 %v1860
      %2953 = vmatmul.bf16.gmra.mxu0 %v388
      %v2954 = vpop.f32.mrf.mxu0
      %v2955 = vadd.f32 %v2936, %v2954
      %v2956 = vpop.f32.mrf.mxu0
      %v2957 = vadd.f32 %v2938, %v2956
      %2958 = vmatmul.bf16.gmra.mxu0 %v399
      %v2959 = vpop.f32.mrf.mxu0
      %v2960 = vadd.f32 %v2941, %v2959
      %v2961 = vpop.f32.mrf.mxu0
      %v2962 = vadd.f32 %v2943, %v2961
      %2963 = vdwg.mxu0
      %2964 = vmatpush.bf16.msra.mxu0 %v1920
      %2965 = vmatpush.bf16.msra.mxu0 %v1916
      %2966 = vmatpush.bf16.msra.mxu0 %v1912
      %2967 = vmatpush.bf16.msra.mxu0 %v1908
      %2968 = vmatpush.bf16.msra.mxu0 %v1904
      %2969 = vmatpush.bf16.msra.mxu0 %v1900
      %2970 = vmatpush.bf16.msra.mxu0 %v1896
      %2971 = vmatpush.bf16.msra.mxu0 %v1892
      %2972 = vmatmul.bf16.gmra.mxu0 %v389
      %v2973 = vpop.f32.mrf.mxu0
      %v2974 = vadd.f32 %v2955, %v2973
      %v2975 = vpop.f32.mrf.mxu0
      %v2976 = vadd.f32 %v2957, %v2975
      %2977 = vmatmul.bf16.gmra.mxu0 %v400
      %v2978 = vpop.f32.mrf.mxu0
      %v2979 = vadd.f32 %v2960, %v2978
      %v2980 = vpop.f32.mrf.mxu0
      %v2981 = vadd.f32 %v2962, %v2980
      %2982 = vdwg.mxu0
      %2983 = vmatpush.bf16.msra.mxu0 %v1952
      %2984 = vmatpush.bf16.msra.mxu0 %v1948
      %2985 = vmatpush.bf16.msra.mxu0 %v1944
      %2986 = vmatpush.bf16.msra.mxu0 %v1940
      %2987 = vmatpush.bf16.msra.mxu0 %v1936
      %2988 = vmatpush.bf16.msra.mxu0 %v1932
      %2989 = vmatpush.bf16.msra.mxu0 %v1928
      %2990 = vmatpush.bf16.msra.mxu0 %v1924
      %2991 = vmatmul.bf16.gmra.mxu0 %v390
      %v2992 = vpop.f32.mrf.mxu0
      %v2993 = vadd.f32 %v2974, %v2992
      %v2994 = vpop.f32.mrf.mxu0
      %v2995 = vadd.f32 %v2976, %v2994
      %2996 = vmatmul.bf16.gmra.mxu0 %v401
      %v2997 = vpop.f32.mrf.mxu0
      %v2998 = vadd.f32 %v2979, %v2997
      %v2999 = vpop.f32.mrf.mxu0
      %v3000 = vadd.f32 %v2981, %v2999
      %3001 = vdwg.mxu0
      %3002 = vmatpush.bf16.msra.mxu0 %v1984
      %3003 = vmatpush.bf16.msra.mxu0 %v1980
      %3004 = vmatpush.bf16.msra.mxu0 %v1976
      %3005 = vmatpush.bf16.msra.mxu0 %v1972
      %3006 = vmatpush.bf16.msra.mxu0 %v1968
      %3007 = vmatpush.bf16.msra.mxu0 %v1964
      %3008 = vmatpush.bf16.msra.mxu0 %v1960
      %3009 = vmatpush.bf16.msra.mxu0 %v1956
      %3010 = vmatmul.bf16.gmra.mxu0 %v391
      %v3011 = vpop.f32.mrf.mxu0
      %v3012 = vadd.f32 %v2993, %v3011
      %v3013 = vpop.f32.mrf.mxu0
      %v3014 = vadd.f32 %v2995, %v3013
      %3015 = vmatmul.bf16.gmra.mxu0 %v402
      %v3016 = vpop.f32.mrf.mxu0
      %v3017 = vadd.f32 %v2998, %v3016
      %v3018 = vpop.f32.mrf.mxu0
      %v3019 = vadd.f32 %v3000, %v3018
      %3020 = vdwg.mxu0
      %3021 = vmatpush.bf16.msra.mxu0 %v2016
      %3022 = vmatpush.bf16.msra.mxu0 %v2012
      %3023 = vmatpush.bf16.msra.mxu0 %v2008
      %3024 = vmatpush.bf16.msra.mxu0 %v2004
      %3025 = vmatpush.bf16.msra.mxu0 %v2000
      %3026 = vmatpush.bf16.msra.mxu0 %v1996
      %3027 = vmatpush.bf16.msra.mxu0 %v1992
      %3028 = vmatpush.bf16.msra.mxu0 %v1988
      %3029 = vmatmul.bf16.gmra.mxu0 %v392
      %v3030 = vpop.f32.mrf.mxu0
      %v3031 = vadd.f32 %v3012, %v3030
      %v3032 = vpop.f32.mrf.mxu0
      %v3033 = vadd.f32 %v3014, %v3032
      %3034 = vmatmul.bf16.gmra.mxu0 %v403
      %v3035 = vpop.f32.mrf.mxu0
      %v3036 = vadd.f32 %v3017, %v3035
      %v3037 = vpop.f32.mrf.mxu0
      %v3038 = vadd.f32 %v3019, %v3037
      %3039 = vdwg.mxu0
      %3040 = vmatpush.bf16.msra.mxu0 %v2048
      %3041 = vmatpush.bf16.msra.mxu0 %v2044
      %3042 = vmatpush.bf16.msra.mxu0 %v2040
      %3043 = vmatpush.bf16.msra.mxu0 %v2036
      %3044 = vmatpush.bf16.msra.mxu0 %v2032
      %3045 = vmatpush.bf16.msra.mxu0 %v2028
      %3046 = vmatpush.bf16.msra.mxu0 %v2024
      %3047 = vmatpush.bf16.msra.mxu0 %v2020
      %3048 = vmatmul.bf16.gmra.mxu0 %v393
      %v3049 = vpop.f32.mrf.mxu0
      %v3050 = vadd.f32 %v3031, %v3049
      %v3051 = vpop.f32.mrf.mxu0
      %v3052 = vadd.f32 %v3033, %v3051
      %3053 = vmatmul.bf16.gmra.mxu0 %v404
      %v3054 = vpop.f32.mrf.mxu0
      %v3055 = vadd.f32 %v3036, %v3054
      %v3056 = vpop.f32.mrf.mxu0
      %v3057 = vadd.f32 %v3038, %v3056
      %3058 = vdwg.mxu0
      %3059 = vmatpush.bf16.msra.mxu0 %v2080
      %3060 = vmatpush.bf16.msra.mxu0 %v2076
      %3061 = vmatpush.bf16.msra.mxu0 %v2072
      %3062 = vmatpush.bf16.msra.mxu0 %v2068
      %3063 = vmatpush.bf16.msra.mxu0 %v2064
      %3064 = vmatpush.bf16.msra.mxu0 %v2060
      %3065 = vmatpush.bf16.msra.mxu0 %v2056
      %3066 = vmatpush.bf16.msra.mxu0 %v2052
      %3067 = vmatmul.bf16.gmra.mxu0 %v394
      %v3068 = vpop.f32.mrf.mxu0
      %v3069 = vadd.f32 %v3050, %v3068
      %v3070 = vpop.f32.mrf.mxu0
      %v3071 = vadd.f32 %v3052, %v3070
      %3072 = vmatmul.bf16.gmra.mxu0 %v405
      %v3073 = vpop.f32.mrf.mxu0
      %v3074 = vadd.f32 %v3055, %v3073
      %v3075 = vpop.f32.mrf.mxu0
      %v3076 = vadd.f32 %v3057, %v3075
      %3077 = vdwg.mxu0
      %3078 = vmatpush.bf16.msra.mxu0 %v2112
      %3079 = vmatpush.bf16.msra.mxu0 %v2108
      %3080 = vmatpush.bf16.msra.mxu0 %v2104
      %3081 = vmatpush.bf16.msra.mxu0 %v2100
      %3082 = vmatpush.bf16.msra.mxu0 %v2096
      %3083 = vmatpush.bf16.msra.mxu0 %v2092
      %3084 = vmatpush.bf16.msra.mxu0 %v2088
      %3085 = vmatpush.bf16.msra.mxu0 %v2084
      %3086 = vmatmul.bf16.gmra.mxu0 %v395
      %v3087 = vpop.f32.mrf.mxu0
      %v3088 = vadd.f32 %v3069, %v3087
      %v3089 = vpop.f32.mrf.mxu0
      %v3090 = vadd.f32 %v3071, %v3089
      %3091 = vmatmul.bf16.gmra.mxu0 %v406
      %v3092 = vpop.f32.mrf.mxu0
      %v3093 = vadd.f32 %v3074, %v3092
      %v3094 = vpop.f32.mrf.mxu0
      %v3095 = vadd.f32 %v3076, %v3094
      %3096 = vdwg.mxu0
      %3097 = vmatpush.bf16.msra.mxu0 0
      %3098 = vmatpush.bf16.msra.mxu0 0
      %3099 = vmatpush.bf16.msra.mxu0 %v2136
      %3100 = vmatpush.bf16.msra.mxu0 %v2132
      %3101 = vmatpush.bf16.msra.mxu0 %v2128
      %3102 = vmatpush.bf16.msra.mxu0 %v2124
      %3103 = vmatpush.bf16.msra.mxu0 %v2120
      %3104 = vmatpush.bf16.msra.mxu0 %v2116
      %3105 = vmatmul.bf16.gmra.mxu0 %v2484
      %v3106 = vpop.f32.mrf.mxu0
      %v3107 = vadd.f32 %v3088, %v3106
      %v3108 = vpop.f32.mrf.mxu0
      %v3109 = vadd.f32 %v3090, %v3108
      %3110 = vmatmul.bf16.gmra.mxu0 %v2487
      %v3111 = vpop.f32.mrf.mxu0
      %v3112 = vadd.f32 %v3093, %v3111
      %v3113 = vpop.f32.mrf.mxu0
      %v3114 = vadd.f32 %v3095, %v3113
      %3115 = vdwg.mxu0
      %3116 = vmatpush.bf16.msra.mxu0 %v1825
      %3117 = vmatpush.bf16.msra.mxu0 %v1821
      %3118 = vmatpush.bf16.msra.mxu0 %v1817
      %3119 = vmatpush.bf16.msra.mxu0 %v1813
      %3120 = vmatpush.bf16.msra.mxu0 %v1809
      %3121 = vmatpush.bf16.msra.mxu0 %v1805
      %3122 = vmatpush.bf16.msra.mxu0 %v1801
      %3123 = vmatpush.bf16.msra.mxu0 %v1797
      %3124 = vmatmul.bf16.gmra.mxu0 %v386
      %v3125 = vpop.f32.mrf.mxu0
      %v3126 = vadd.f32 %v757, %v3125
      %v3127 = vpop.f32.mrf.mxu0
      %v3128 = vadd.f32 %v757, %v3127
      %3129 = vmatmul.bf16.gmra.mxu0 %v397
      %v3130 = vpop.f32.mrf.mxu0
      %v3131 = vadd.f32 %v757, %v3130
      %v3132 = vpop.f32.mrf.mxu0
      %v3133 = vadd.f32 %v757, %v3132
      %3134 = vdwg.mxu0
      %3135 = vmatpush.bf16.msra.mxu0 %v1857
      %3136 = vmatpush.bf16.msra.mxu0 %v1853
      %3137 = vmatpush.bf16.msra.mxu0 %v1849
      %3138 = vmatpush.bf16.msra.mxu0 %v1845
      %3139 = vmatpush.bf16.msra.mxu0 %v1841
      %3140 = vmatpush.bf16.msra.mxu0 %v1837
      %3141 = vmatpush.bf16.msra.mxu0 %v1833
      %3142 = vmatpush.bf16.msra.mxu0 %v1829
      %3143 = vmatmul.bf16.gmra.mxu0 %v387
      %v3144 = vpop.f32.mrf.mxu0
      %v3145 = vadd.f32 %v3126, %v3144
      %v3146 = vpop.f32.mrf.mxu0
      %v3147 = vadd.f32 %v3128, %v3146
      %3148 = vmatmul.bf16.gmra.mxu0 %v398
      %v3149 = vpop.f32.mrf.mxu0
      %v3150 = vadd.f32 %v3131, %v3149
      %v3151 = vpop.f32.mrf.mxu0
      %v3152 = vadd.f32 %v3133, %v3151
      %3153 = vdwg.mxu0
      %3154 = vmatpush.bf16.msra.mxu0 %v1889
      %3155 = vmatpush.bf16.msra.mxu0 %v1885
      %3156 = vmatpush.bf16.msra.mxu0 %v1881
      %3157 = vmatpush.bf16.msra.mxu0 %v1877
      %3158 = vmatpush.bf16.msra.mxu0 %v1873
      %3159 = vmatpush.bf16.msra.mxu0 %v1869
      %3160 = vmatpush.bf16.msra.mxu0 %v1865
      %3161 = vmatpush.bf16.msra.mxu0 %v1861
      %3162 = vmatmul.bf16.gmra.mxu0 %v388
      %v3163 = vpop.f32.mrf.mxu0
      %v3164 = vadd.f32 %v3145, %v3163
      %v3165 = vpop.f32.mrf.mxu0
      %v3166 = vadd.f32 %v3147, %v3165
      %3167 = vmatmul.bf16.gmra.mxu0 %v399
      %v3168 = vpop.f32.mrf.mxu0
      %v3169 = vadd.f32 %v3150, %v3168
      %v3170 = vpop.f32.mrf.mxu0
      %v3171 = vadd.f32 %v3152, %v3170
      %3172 = vdwg.mxu0
      %3173 = vmatpush.bf16.msra.mxu0 %v1921
      %3174 = vmatpush.bf16.msra.mxu0 %v1917
      %3175 = vmatpush.bf16.msra.mxu0 %v1913
      %3176 = vmatpush.bf16.msra.mxu0 %v1909
      %3177 = vmatpush.bf16.msra.mxu0 %v1905
      %3178 = vmatpush.bf16.msra.mxu0 %v1901
      %3179 = vmatpush.bf16.msra.mxu0 %v1897
      %3180 = vmatpush.bf16.msra.mxu0 %v1893
      %3181 = vmatmul.bf16.gmra.mxu0 %v389
      %v3182 = vpop.f32.mrf.mxu0
      %v3183 = vadd.f32 %v3164, %v3182
      %v3184 = vpop.f32.mrf.mxu0
      %v3185 = vadd.f32 %v3166, %v3184
      %3186 = vmatmul.bf16.gmra.mxu0 %v400
      %v3187 = vpop.f32.mrf.mxu0
      %v3188 = vadd.f32 %v3169, %v3187
      %v3189 = vpop.f32.mrf.mxu0
      %v3190 = vadd.f32 %v3171, %v3189
      %3191 = vdwg.mxu0
      %3192 = vmatpush.bf16.msra.mxu0 %v1953
      %3193 = vmatpush.bf16.msra.mxu0 %v1949
      %3194 = vmatpush.bf16.msra.mxu0 %v1945
      %3195 = vmatpush.bf16.msra.mxu0 %v1941
      %3196 = vmatpush.bf16.msra.mxu0 %v1937
      %3197 = vmatpush.bf16.msra.mxu0 %v1933
      %3198 = vmatpush.bf16.msra.mxu0 %v1929
      %3199 = vmatpush.bf16.msra.mxu0 %v1925
      %3200 = vmatmul.bf16.gmra.mxu0 %v390
      %v3201 = vpop.f32.mrf.mxu0
      %v3202 = vadd.f32 %v3183, %v3201
      %v3203 = vpop.f32.mrf.mxu0
      %v3204 = vadd.f32 %v3185, %v3203
      %3205 = vmatmul.bf16.gmra.mxu0 %v401
      %v3206 = vpop.f32.mrf.mxu0
      %v3207 = vadd.f32 %v3188, %v3206
      %v3208 = vpop.f32.mrf.mxu0
      %v3209 = vadd.f32 %v3190, %v3208
      %3210 = vdwg.mxu0
      %3211 = vmatpush.bf16.msra.mxu0 %v1985
      %3212 = vmatpush.bf16.msra.mxu0 %v1981
      %3213 = vmatpush.bf16.msra.mxu0 %v1977
      %3214 = vmatpush.bf16.msra.mxu0 %v1973
      %3215 = vmatpush.bf16.msra.mxu0 %v1969
      %3216 = vmatpush.bf16.msra.mxu0 %v1965
      %3217 = vmatpush.bf16.msra.mxu0 %v1961
      %3218 = vmatpush.bf16.msra.mxu0 %v1957
      %3219 = vmatmul.bf16.gmra.mxu0 %v391
      %v3220 = vpop.f32.mrf.mxu0
      %v3221 = vadd.f32 %v3202, %v3220
      %v3222 = vpop.f32.mrf.mxu0
      %v3223 = vadd.f32 %v3204, %v3222
      %3224 = vmatmul.bf16.gmra.mxu0 %v402
      %v3225 = vpop.f32.mrf.mxu0
      %v3226 = vadd.f32 %v3207, %v3225
      %v3227 = vpop.f32.mrf.mxu0
      %v3228 = vadd.f32 %v3209, %v3227
      %3229 = vdwg.mxu0
      %3230 = vmatpush.bf16.msra.mxu0 %v2017
      %3231 = vmatpush.bf16.msra.mxu0 %v2013
      %3232 = vmatpush.bf16.msra.mxu0 %v2009
      %3233 = vmatpush.bf16.msra.mxu0 %v2005
      %3234 = vmatpush.bf16.msra.mxu0 %v2001
      %3235 = vmatpush.bf16.msra.mxu0 %v1997
      %3236 = vmatpush.bf16.msra.mxu0 %v1993
      %3237 = vmatpush.bf16.msra.mxu0 %v1989
      %3238 = vmatmul.bf16.gmra.mxu0 %v392
      %v3239 = vpop.f32.mrf.mxu0
      %v3240 = vadd.f32 %v3221, %v3239
      %v3241 = vpop.f32.mrf.mxu0
      %v3242 = vadd.f32 %v3223, %v3241
      %3243 = vmatmul.bf16.gmra.mxu0 %v403
      %v3244 = vpop.f32.mrf.mxu0
      %v3245 = vadd.f32 %v3226, %v3244
      %v3246 = vpop.f32.mrf.mxu0
      %v3247 = vadd.f32 %v3228, %v3246
      %3248 = vdwg.mxu0
      %3249 = vmatpush.bf16.msra.mxu0 %v2049
      %3250 = vmatpush.bf16.msra.mxu0 %v2045
      %3251 = vmatpush.bf16.msra.mxu0 %v2041
      %3252 = vmatpush.bf16.msra.mxu0 %v2037
      %3253 = vmatpush.bf16.msra.mxu0 %v2033
      %3254 = vmatpush.bf16.msra.mxu0 %v2029
      %3255 = vmatpush.bf16.msra.mxu0 %v2025
      %3256 = vmatpush.bf16.msra.mxu0 %v2021
      %3257 = vmatmul.bf16.gmra.mxu0 %v393
      %v3258 = vpop.f32.mrf.mxu0
      %v3259 = vadd.f32 %v3240, %v3258
      %v3260 = vpop.f32.mrf.mxu0
      %v3261 = vadd.f32 %v3242, %v3260
      %3262 = vmatmul.bf16.gmra.mxu0 %v404
      %v3263 = vpop.f32.mrf.mxu0
      %v3264 = vadd.f32 %v3245, %v3263
      %v3265 = vpop.f32.mrf.mxu0
      %v3266 = vadd.f32 %v3247, %v3265
      %3267 = vdwg.mxu0
      %3268 = vmatpush.bf16.msra.mxu0 %v2081
      %3269 = vmatpush.bf16.msra.mxu0 %v2077
      %3270 = vmatpush.bf16.msra.mxu0 %v2073
      %3271 = vmatpush.bf16.msra.mxu0 %v2069
      %3272 = vmatpush.bf16.msra.mxu0 %v2065
      %3273 = vmatpush.bf16.msra.mxu0 %v2061
      %3274 = vmatpush.bf16.msra.mxu0 %v2057
      %3275 = vmatpush.bf16.msra.mxu0 %v2053
      %3276 = vmatmul.bf16.gmra.mxu0 %v394
      %v3277 = vpop.f32.mrf.mxu0
      %v3278 = vadd.f32 %v3259, %v3277
      %v3279 = vpop.f32.mrf.mxu0
      %v3280 = vadd.f32 %v3261, %v3279
      %3281 = vmatmul.bf16.gmra.mxu0 %v405
      %v3282 = vpop.f32.mrf.mxu0
      %v3283 = vadd.f32 %v3264, %v3282
      %v3284 = vpop.f32.mrf.mxu0
      %v3285 = vadd.f32 %v3266, %v3284
      %3286 = vdwg.mxu0
      %3287 = vmatpush.bf16.msra.mxu0 %v2113
      %3288 = vmatpush.bf16.msra.mxu0 %v2109
      %3289 = vmatpush.bf16.msra.mxu0 %v2105
      %3290 = vmatpush.bf16.msra.mxu0 %v2101
      %3291 = vmatpush.bf16.msra.mxu0 %v2097
      %3292 = vmatpush.bf16.msra.mxu0 %v2093
      %3293 = vmatpush.bf16.msra.mxu0 %v2089
      %3294 = vmatpush.bf16.msra.mxu0 %v2085
      %3295 = vmatmul.bf16.gmra.mxu0 %v395
      %v3296 = vpop.f32.mrf.mxu0
      %v3297 = vadd.f32 %v3278, %v3296
      %v3298 = vpop.f32.mrf.mxu0
      %v3299 = vadd.f32 %v3280, %v3298
      %3300 = vmatmul.bf16.gmra.mxu0 %v406
      %v3301 = vpop.f32.mrf.mxu0
      %v3302 = vadd.f32 %v3283, %v3301
      %v3303 = vpop.f32.mrf.mxu0
      %v3304 = vadd.f32 %v3285, %v3303
      %3305 = vdwg.mxu0
      %3306 = vmatpush.bf16.msra.mxu0 0
      %3307 = vmatpush.bf16.msra.mxu0 0
      %3308 = vmatpush.bf16.msra.mxu0 %v2137
      %3309 = vmatpush.bf16.msra.mxu0 %v2133
      %3310 = vmatpush.bf16.msra.mxu0 %v2129
      %3311 = vmatpush.bf16.msra.mxu0 %v2125
      %3312 = vmatpush.bf16.msra.mxu0 %v2121
      %3313 = vmatpush.bf16.msra.mxu0 %v2117
      %3314 = vmatmul.bf16.gmra.mxu0 %v2484
      %v3315 = vpop.f32.mrf.mxu0
      %v3316 = vadd.f32 %v3297, %v3315
      %v3317 = vpop.f32.mrf.mxu0
      %v3318 = vadd.f32 %v3299, %v3317
      %3319 = vmatmul.bf16.gmra.mxu0 %v2487
      %v3320 = vpop.f32.mrf.mxu0
      %v3321 = vadd.f32 %v3302, %v3320
      %v3322 = vpop.f32.mrf.mxu0
      %v3323 = vadd.f32 %v3304, %v3322
      %3324 = vdwg.mxu0
      %v3325 = vmax.f32 %v2689, 0.0
      %v3326 = vmax.f32 %v2898, 0.0
      %v3327 = vmax.f32 %v3107, 0.0
      %v3328 = vmax.f32 %v3316, 0.0
      %v3329 = vmax.f32 %v2691, 0.0
      %v3330 = vmax.f32 %v2900, 0.0
      %v3331 = vmax.f32 %v3109, 0.0
      %v3332 = vmax.f32 %v3318, 0.0
      %v3333 = vmax.f32 %v2694, 0.0
      %v3334 = vmax.f32 %v2903, 0.0
      %v3335 = vmax.f32 %v3112, 0.0
      %v3336 = vmax.f32 %v3321, 0.0
      %v3337 = vmax.f32 %v2696, 0.0
      %v3338 = vmax.f32 %v2905, 0.0
      %v3339 = vmax.f32 %v3114, 0.0
      %v3340 = vmax.f32 %v3323, 0.0
      %v3341 = vpack.c.bf16 %v3329, %v3325
      %v3342 = vpack.c.bf16 %v3330, %v3326
      %v3343 = vpack.c.bf16 %v3331, %v3327
      %v3344 = vpack.c.bf16 %v3332, %v3328
      %v3345 = vpack.c.bf16 %v3337, %v3333
      %v3346 = vpack.c.bf16 %v3338, %v3334
      %v3347 = vpack.c.bf16 %v3339, %v3335
      %v3348 = vpack.c.bf16 %v3340, %v3336
      %v3349 = vld [vmem:[%s3] sm:$0xf]
      %v3350 = vld [vmem:[%s3 + $0x4] sm:$0xf]
      %v3351 = vld [vmem:[%s3 + $0x8] sm:$0xf]
      %v3352 = vld [vmem:[%s3 + $0xc] sm:$0xf]
      %v3353 = vld [vmem:[%s3 + $0x10] sm:$0xf]
      %v3354 = vld [vmem:[%s3 + $0x14] sm:$0xf]
      %v3355 = vld [vmem:[%s3 + $0x18] sm:$0xf]
      %v3356 = vld [vmem:[%s3 + $0x1c] sm:$0xf]
      %v3357 = vld [vmem:[%s3 + $0x20] sm:$0xf]
      %v3358 = vld [vmem:[%s3 + $0x24] sm:$0xf]
      %v3359 = vld [vmem:[%s3 + $0x28] sm:$0xf]
      %v3360 = vld [vmem:[%s3 + $0x2c] sm:$0xf]
      %v3361 = vld [vmem:[%s3 + $0x30] sm:$0xf]
      %v3362 = vld [vmem:[%s3 + $0x34] sm:$0xf]
      %v3363 = vld [vmem:[%s3 + $0x38] sm:$0xf]
      %v3364 = vld [vmem:[%s3 + $0x3c] sm:$0xf]
      %v3365 = vld [vmem:[%s3 + $0x40] sm:$0xf]
      %v3366 = vld [vmem:[%s3 + $0x44] sm:$0xf]
      %v3367 = vld [vmem:[%s3 + $0x48] sm:$0xf]
      %v3368 = vld [vmem:[%s3 + $0x4c] sm:$0xf]
      %v3369 = vld [vmem:[%s3 + $0x50] sm:$0xf]
      %v3370 = vld [vmem:[%s3 + $0x54] sm:$0xf]
      %v3371 = vld [vmem:[%s3 + $0x58] sm:$0xf]
      %v3372 = vld [vmem:[%s3 + $0x5c] sm:$0xf]
      %v3373 = vld [vmem:[%s3 + $0x60] sm:$0xf]
      %v3374 = vld [vmem:[%s3 + $0x64] sm:$0xf]
      %v3375 = vld [vmem:[%s3 + $0x68] sm:$0xf]
      %v3376 = vld [vmem:[%s3 + $0x6c] sm:$0xf]
      %v3377 = vld [vmem:[%s3 + $0x70] sm:$0xf]
      %v3378 = vld [vmem:[%s3 + $0x74] sm:$0xf]
      %v3379 = vld [vmem:[%s3 + $0x78] sm:$0xf]
      %v3380 = vld [vmem:[%s3 + $0x7c] sm:$0xf]
      %v3381 = vld [vmem:[%s3 + $0x80] sm:$0xf]
      %v3382 = vld [vmem:[%s3 + $0x84] sm:$0xf]
      %v3383 = vld [vmem:[%s3 + $0x88] sm:$0xf]
      %v3384 = vld [vmem:[%s3 + $0x8c] sm:$0xf]
      %v3385 = vld [vmem:[%s3 + $0x90] sm:$0xf]
      %v3386 = vld [vmem:[%s3 + $0x94] sm:$0xf]
      %v3387 = vld [vmem:[%s3 + $0x98] sm:$0xf]
      %v3388 = vld [vmem:[%s3 + $0x9c] sm:$0xf]
      %v3389 = vld [vmem:[%s3 + $0xa0] sm:$0xf]
      %v3390 = vld [vmem:[%s3 + $0xa4] sm:$0xf]
      %v3391 = vld [vmem:[%s3 + $0xa8] sm:$0xf]
      %v3392 = vld [vmem:[%s3 + $0xac] sm:$0xf]
      %v3393 = vld [vmem:[%s3 + $0xb0] sm:$0xf]
      %v3394 = vld [vmem:[%s3 + $0xb4] sm:$0xf]
      %v3395 = vld [vmem:[%s3 + $0xb8] sm:$0xf]
      %v3396 = vld [vmem:[%s3 + $0xbc] sm:$0xf]
      %v3397 = vld [vmem:[%s3 + $0xc0] sm:$0xf]
      %v3398 = vld [vmem:[%s3 + $0xc4] sm:$0xf]
      %v3399 = vld [vmem:[%s3 + $0xc8] sm:$0xf]
      %v3400 = vld [vmem:[%s3 + $0xcc] sm:$0xf]
      %v3401 = vld [vmem:[%s3 + $0xd0] sm:$0xf]
      %v3402 = vld [vmem:[%s3 + $0xd4] sm:$0xf]
      %v3403 = vld [vmem:[%s3 + $0xd8] sm:$0xf]
      %v3404 = vld [vmem:[%s3 + $0xdc] sm:$0xf]
      %v3405 = vld [vmem:[%s3 + $0xe0] sm:$0xf]
      %v3406 = vld [vmem:[%s3 + $0xe4] sm:$0xf]
      %v3407 = vld [vmem:[%s3 + $0xe8] sm:$0xf]
      %v3408 = vld [vmem:[%s3 + $0xec] sm:$0xf]
      %v3409 = vld [vmem:[%s3 + $0xf0] sm:$0xf]
      %v3410 = vld [vmem:[%s3 + $0xf4] sm:$0xf]
      %v3411 = vld [vmem:[%s3 + $0xf8] sm:$0xf]
      %v3412 = vld [vmem:[%s3 + $0xfc] sm:$0xf]
      %v3413 = vld [vmem:[%s4] sm:$0x1]
      %v3415 = vperm.slane %v3413, 0
      %v3481 = vunpack.c.l.b16 %v3349
      %v3482 = vunpack.c.l.b16 %v3350
      %v3483 = vunpack.c.l.b16 %v3351
      %v3484 = vunpack.c.l.b16 %v3352
      %v3485 = vunpack.c.l.b16 %v3353
      %v3486 = vunpack.c.l.b16 %v3354
      %v3487 = vunpack.c.l.b16 %v3355
      %v3488 = vunpack.c.l.b16 %v3356
      %v3489 = vunpack.c.l.b16 %v3357
      %v3490 = vunpack.c.l.b16 %v3358
      %v3491 = vunpack.c.l.b16 %v3359
      %v3492 = vunpack.c.l.b16 %v3360
      %v3493 = vunpack.c.l.b16 %v3361
      %v3494 = vunpack.c.l.b16 %v3362
      %v3495 = vunpack.c.l.b16 %v3363
      %v3496 = vunpack.c.l.b16 %v3364
      %v3497 = vunpack.c.l.b16 %v3365
      %v3498 = vunpack.c.l.b16 %v3366
      %v3499 = vunpack.c.l.b16 %v3367
      %v3500 = vunpack.c.l.b16 %v3368
      %v3501 = vunpack.c.l.b16 %v3369
      %v3502 = vunpack.c.l.b16 %v3370
      %v3503 = vunpack.c.l.b16 %v3371
      %v3504 = vunpack.c.l.b16 %v3372
      %v3505 = vunpack.c.l.b16 %v3373
      %v3506 = vunpack.c.l.b16 %v3374
      %v3507 = vunpack.c.l.b16 %v3375
      %v3508 = vunpack.c.l.b16 %v3376
      %v3509 = vunpack.c.l.b16 %v3377
      %v3510 = vunpack.c.l.b16 %v3378
      %v3511 = vunpack.c.l.b16 %v3379
      %v3512 = vunpack.c.l.b16 %v3380
      %v3513 = vunpack.c.l.b16 %v3381
      %v3514 = vunpack.c.l.b16 %v3382
      %v3515 = vunpack.c.l.b16 %v3383
      %v3516 = vunpack.c.l.b16 %v3384
      %v3517 = vunpack.c.l.b16 %v3385
      %v3518 = vunpack.c.l.b16 %v3386
      %v3519 = vunpack.c.l.b16 %v3387
      %v3520 = vunpack.c.l.b16 %v3388
      %v3521 = vunpack.c.l.b16 %v3389
      %v3522 = vunpack.c.l.b16 %v3390
      %v3523 = vunpack.c.l.b16 %v3391
      %v3524 = vunpack.c.l.b16 %v3392
      %v3525 = vunpack.c.l.b16 %v3393
      %v3526 = vunpack.c.l.b16 %v3394
      %v3527 = vunpack.c.l.b16 %v3395
      %v3528 = vunpack.c.l.b16 %v3396
      %v3529 = vunpack.c.l.b16 %v3397
      %v3530 = vunpack.c.l.b16 %v3398
      %v3531 = vunpack.c.l.b16 %v3399
      %v3532 = vunpack.c.l.b16 %v3400
      %v3533 = vunpack.c.l.b16 %v3401
      %v3534 = vunpack.c.l.b16 %v3402
      %v3535 = vunpack.c.l.b16 %v3403
      %v3536 = vunpack.c.l.b16 %v3404
      %v3537 = vunpack.c.l.b16 %v3405
      %v3538 = vunpack.c.l.b16 %v3406
      %v3539 = vunpack.c.l.b16 %v3407
      %v3540 = vunpack.c.l.b16 %v3408
      %v3541 = vunpack.c.l.b16 %v3409
      %v3542 = vunpack.c.l.b16 %v3410
      %v3543 = vunpack.c.l.b16 %v3411
      %v3544 = vunpack.c.l.b16 %v3412
      %v3545 = vpack.c.b16 %v3482, %v3481
      %v3546 = vpack.c.b16 %v3484, %v3483
      %v3547 = vpack.c.b16 %v3486, %v3485
      %v3548 = vpack.c.b16 %v3488, %v3487
      %v3549 = vpack.c.b16 %v3490, %v3489
      %v3550 = vpack.c.b16 %v3492, %v3491
      %v3551 = vpack.c.b16 %v3494, %v3493
      %v3552 = vpack.c.b16 %v3496, %v3495
      %v3553 = vpack.c.b16 %v3498, %v3497
      %v3554 = vpack.c.b16 %v3500, %v3499
      %v3555 = vpack.c.b16 %v3502, %v3501
      %v3556 = vpack.c.b16 %v3504, %v3503
      %v3557 = vpack.c.b16 %v3506, %v3505
      %v3558 = vpack.c.b16 %v3508, %v3507
      %v3559 = vpack.c.b16 %v3510, %v3509
      %v3560 = vpack.c.b16 %v3512, %v3511
      %v3561 = vpack.c.b16 %v3514, %v3513
      %v3562 = vpack.c.b16 %v3516, %v3515
      %v3563 = vpack.c.b16 %v3518, %v3517
      %v3564 = vpack.c.b16 %v3520, %v3519
      %v3565 = vpack.c.b16 %v3522, %v3521
      %v3566 = vpack.c.b16 %v3524, %v3523
      %v3567 = vpack.c.b16 %v3526, %v3525
      %v3568 = vpack.c.b16 %v3528, %v3527
      %v3569 = vpack.c.b16 %v3530, %v3529
      %v3570 = vpack.c.b16 %v3532, %v3531
      %v3571 = vpack.c.b16 %v3534, %v3533
      %v3572 = vpack.c.b16 %v3536, %v3535
      %v3573 = vpack.c.b16 %v3538, %v3537
      %v3574 = vpack.c.b16 %v3540, %v3539
      %v3575 = vpack.c.b16 %v3542, %v3541
      %v3576 = vpack.c.b16 %v3544, %v3543
      %3609 = vmatpush.bf16.msra.mxu0 %v3552
      %3610 = vmatpush.bf16.msra.mxu0 %v3551
      %3611 = vmatpush.bf16.msra.mxu0 %v3550
      %3612 = vmatpush.bf16.msra.mxu0 %v3549
      %3613 = vmatpush.bf16.msra.mxu0 %v3548
      %3614 = vmatpush.bf16.msra.mxu0 %v3547
      %3615 = vmatpush.bf16.msra.mxu0 %v3546
      %3616 = vmatpush.bf16.msra.mxu0 %v3545
      %3617 = vmatmul.bf16.gmra.mxu0 %v3341
      %v3618 = vpop.f32.mrf.mxu0
      %v3619 = vadd.f32 %v3415, %v3618
      %v3620 = vpop.f32.mrf.mxu0
      %v3621 = vadd.f32 %v3415, %v3620
      %3622 = vmatmul.bf16.gmra.mxu0 %v3345
      %v3623 = vpop.f32.mrf.mxu0
      %v3624 = vadd.f32 %v3415, %v3623
      %v3625 = vpop.f32.mrf.mxu0
      %v3626 = vadd.f32 %v3415, %v3625
      %3627 = vdwg.mxu0
      %3628 = vmatpush.bf16.msra.mxu0 %v3560
      %3629 = vmatpush.bf16.msra.mxu0 %v3559
      %3630 = vmatpush.bf16.msra.mxu0 %v3558
      %3631 = vmatpush.bf16.msra.mxu0 %v3557
      %3632 = vmatpush.bf16.msra.mxu0 %v3556
      %3633 = vmatpush.bf16.msra.mxu0 %v3555
      %3634 = vmatpush.bf16.msra.mxu0 %v3554
      %3635 = vmatpush.bf16.msra.mxu0 %v3553
      %3636 = vmatmul.bf16.gmra.mxu0 %v3342
      %v3637 = vpop.f32.mrf.mxu0
      %v3638 = vadd.f32 %v3619, %v3637
      %v3639 = vpop.f32.mrf.mxu0
      %v3640 = vadd.f32 %v3621, %v3639
      %3641 = vmatmul.bf16.gmra.mxu0 %v3346
      %v3642 = vpop.f32.mrf.mxu0
      %v3643 = vadd.f32 %v3624, %v3642
      %v3644 = vpop.f32.mrf.mxu0
      %v3645 = vadd.f32 %v3626, %v3644
      %3646 = vdwg.mxu0
      %3647 = vmatpush.bf16.msra.mxu0 %v3568
      %3648 = vmatpush.bf16.msra.mxu0 %v3567
      %3649 = vmatpush.bf16.msra.mxu0 %v3566
      %3650 = vmatpush.bf16.msra.mxu0 %v3565
      %3651 = vmatpush.bf16.msra.mxu0 %v3564
      %3652 = vmatpush.bf16.msra.mxu0 %v3563
      %3653 = vmatpush.bf16.msra.mxu0 %v3562
      %3654 = vmatpush.bf16.msra.mxu0 %v3561
      %3655 = vmatmul.bf16.gmra.mxu0 %v3343
      %v3656 = vpop.f32.mrf.mxu0
      %v3657 = vadd.f32 %v3638, %v3656
      %v3658 = vpop.f32.mrf.mxu0
      %v3659 = vadd.f32 %v3640, %v3658
      %3660 = vmatmul.bf16.gmra.mxu0 %v3347
      %v3661 = vpop.f32.mrf.mxu0
      %v3662 = vadd.f32 %v3643, %v3661
      %v3663 = vpop.f32.mrf.mxu0
      %v3664 = vadd.f32 %v3645, %v3663
      %3665 = vdwg.mxu0
      %3666 = vmatpush.bf16.msra.mxu0 %v3576
      %3667 = vmatpush.bf16.msra.mxu0 %v3575
      %3668 = vmatpush.bf16.msra.mxu0 %v3574
      %3669 = vmatpush.bf16.msra.mxu0 %v3573
      %3670 = vmatpush.bf16.msra.mxu0 %v3572
      %3671 = vmatpush.bf16.msra.mxu0 %v3571
      %3672 = vmatpush.bf16.msra.mxu0 %v3570
      %3673 = vmatpush.bf16.msra.mxu0 %v3569
      %3674 = vmatmul.bf16.gmra.mxu0 %v3344
      %v3675 = vpop.f32.mrf.mxu0
      %v3676 = vadd.f32 %v3657, %v3675
      %v3677 = vpop.f32.mrf.mxu0
      %v3678 = vadd.f32 %v3659, %v3677
      %3679 = vmatmul.bf16.gmra.mxu0 %v3348
      %v3680 = vpop.f32.mrf.mxu0
      %v3681 = vadd.f32 %v3662, %v3680
      %v3682 = vpop.f32.mrf.mxu0
      %v3683 = vadd.f32 %v3664, %v3682
      %3684 = vdwg.mxu0
      %v3685 = vpack.c.bf16 %v3678, %v3676
      %v3686 = vpack.c.bf16 %v3683, %v3681
      %v3687 = vld [vmem:[%s5] sm:$0xff]
      %v3688 = vld [vmem:[%s5 + $0x8] sm:$0xff]
      %v3689 = vld [vmem:[%s5 + $0x10] sm:$0xff]
      %v3690 = vld [vmem:[%s5 + $0x18] sm:$0xff]
      %v3691 = vld [vmem:[%s5 + $0x20] sm:$0xff]
      %v3692 = vld [vmem:[%s5 + $0x28] sm:$0xff]
      %v3693 = vld [vmem:[%s5 + $0x30] sm:$0xff]
      %v3694 = vld [vmem:[%s5 + $0x38] sm:$0xff]
      %v3695 = vld [vmem:[%s5 + $0x40] sm:$0xff]
      %v3696 = vld [vmem:[%s5 + $0x48] sm:$0xff]
      %v3697 = vld [vmem:[%s5 + $0x50] sm:$0xff]
      %v3698 = vld [vmem:[%s5 + $0x58] sm:$0xff]
      %v3699 = vld [vmem:[%s5 + $0x60] sm:$0xff]
      %v3700 = vld [vmem:[%s5 + $0x68] sm:$0xff]
      %v3701 = vld [vmem:[%s5 + $0x70] sm:$0xff]
      %v3702 = vld [vmem:[%s5 + $0x78] sm:$0xff]
      %v3703 = vld [vmem:[%s5 + $0x80] sm:$0xff]
      %v3704 = vld [vmem:[%s5 + $0x88] sm:$0xff]
      %v3705 = vld [vmem:[%s5 + $0x90] sm:$0xff]
      %v3706 = vld [vmem:[%s5 + $0x98] sm:$0xff]
      %v3707 = vld [vmem:[%s5 + $0xa0] sm:$0xff]
      %v3708 = vld [vmem:[%s5 + $0xa8] sm:$0xff]
      %v3709 = vld [vmem:[%s5 + $0xb0] sm:$0xff]
      %v3710 = vld [vmem:[%s5 + $0xb8] sm:$0xff]
      %v3711 = vld [vmem:[%s5 + $0xc0] sm:$0xff]
      %v3712 = vld [vmem:[%s5 + $0xc8] sm:$0xff]
      %v3713 = vld [vmem:[%s5 + $0xd0] sm:$0xff]
      %v3714 = vld [vmem:[%s5 + $0xd8] sm:$0xff]
      %v3715 = vld [vmem:[%s5 + $0xe0] sm:$0xff]
      %v3716 = vld [vmem:[%s5 + $0xe8] sm:$0xff]
      %v3717 = vld [vmem:[%s5 + $0xf0] sm:$0xff]
      %v3718 = vld [vmem:[%s5 + $0xf8] sm:$0xff]
      %v3719 = vld [vmem:[%s6] sm:$0xf]
      %v3721 = vperm.slane %v3719, 0
      %v3722 = vperm.slane %v3719, 1
      %v3723 = vperm.slane %v3719, 2
      %v3724 = vperm.slane %v3719, 3
      %v3761 = vunpack.c.l.b16 %v3687
      %v3762 = vunpack.c.h.b16 %v3687
      %v3763 = vunpack.c.l.b16 %v3688
      %v3764 = vunpack.c.h.b16 %v3688
      %v3765 = vunpack.c.l.b16 %v3689
      %v3766 = vunpack.c.h.b16 %v3689
      %v3767 = vunpack.c.l.b16 %v3690
      %v3768 = vunpack.c.h.b16 %v3690
      %v3769 = vunpack.c.l.b16 %v3691
      %v3770 = vunpack.c.h.b16 %v3691
      %v3771 = vunpack.c.l.b16 %v3692
      %v3772 = vunpack.c.h.b16 %v3692
      %v3773 = vunpack.c.l.b16 %v3693
      %v3774 = vunpack.c.h.b16 %v3693
      %v3775 = vunpack.c.l.b16 %v3694
      %v3776 = vunpack.c.h.b16 %v3694
      %v3777 = vunpack.c.l.b16 %v3695
      %v3778 = vunpack.c.h.b16 %v3695
      %v3779 = vunpack.c.l.b16 %v3696
      %v3780 = vunpack.c.h.b16 %v3696
      %v3781 = vunpack.c.l.b16 %v3697
      %v3782 = vunpack.c.h.b16 %v3697
      %v3783 = vunpack.c.l.b16 %v3698
      %v3784 = vunpack.c.h.b16 %v3698
      %v3785 = vunpack.c.l.b16 %v3699
      %v3786 = vunpack.c.h.b16 %v3699
      %v3787 = vunpack.c.l.b16 %v3700
      %v3788 = vunpack.c.h.b16 %v3700
      %v3789 = vunpack.c.l.b16 %v3701
      %v3790 = vunpack.c.h.b16 %v3701
      %v3791 = vunpack.c.l.b16 %v3702
      %v3792 = vunpack.c.h.b16 %v3702
      %v3793 = vunpack.c.l.b16 %v3703
      %v3794 = vunpack.c.h.b16 %v3703
      %v3795 = vunpack.c.l.b16 %v3704
      %v3796 = vunpack.c.h.b16 %v3704
      %v3797 = vunpack.c.l.b16 %v3705
      %v3798 = vunpack.c.h.b16 %v3705
      %v3799 = vunpack.c.l.b16 %v3706
      %v3800 = vunpack.c.h.b16 %v3706
      %v3801 = vunpack.c.l.b16 %v3707
      %v3802 = vunpack.c.h.b16 %v3707
      %v3803 = vunpack.c.l.b16 %v3708
      %v3804 = vunpack.c.h.b16 %v3708
      %v3805 = vunpack.c.l.b16 %v3709
      %v3806 = vunpack.c.h.b16 %v3709
      %v3807 = vunpack.c.l.b16 %v3710
      %v3808 = vunpack.c.h.b16 %v3710
      %v3809 = vunpack.c.l.b16 %v3711
      %v3810 = vunpack.c.h.b16 %v3711
      %v3811 = vunpack.c.l.b16 %v3712
      %v3812 = vunpack.c.h.b16 %v3712
      %v3813 = vunpack.c.l.b16 %v3713
      %v3814 = vunpack.c.h.b16 %v3713
      %v3815 = vunpack.c.l.b16 %v3714
      %v3816 = vunpack.c.h.b16 %v3714
      %v3817 = vunpack.c.l.b16 %v3715
      %v3818 = vunpack.c.h.b16 %v3715
      %v3819 = vunpack.c.l.b16 %v3716
      %v3820 = vunpack.c.h.b16 %v3716
      %v3821 = vunpack.c.l.b16 %v3717
      %v3822 = vunpack.c.h.b16 %v3717
      %v3823 = vunpack.c.l.b16 %v3718
      %v3824 = vunpack.c.h.b16 %v3718
      %v3825 = vpack.c.b16 %v3765, %v3761
      %v3826 = vpack.c.b16 %v3766, %v3762
      %v3827 = vpack.c.b16 %v3767, %v3763
      %v3828 = vpack.c.b16 %v3768, %v3764
      %v3829 = vpack.c.b16 %v3773, %v3769
      %v3830 = vpack.c.b16 %v3774, %v3770
      %v3831 = vpack.c.b16 %v3775, %v3771
      %v3832 = vpack.c.b16 %v3776, %v3772
      %v3833 = vpack.c.b16 %v3781, %v3777
      %v3834 = vpack.c.b16 %v3782, %v3778
      %v3835 = vpack.c.b16 %v3783, %v3779
      %v3836 = vpack.c.b16 %v3784, %v3780
      %v3837 = vpack.c.b16 %v3789, %v3785
      %v3838 = vpack.c.b16 %v3790, %v3786
      %v3839 = vpack.c.b16 %v3791, %v3787
      %v3840 = vpack.c.b16 %v3792, %v3788
      %v3841 = vpack.c.b16 %v3797, %v3793
      %v3842 = vpack.c.b16 %v3798, %v3794
      %v3843 = vpack.c.b16 %v3799, %v3795
      %v3844 = vpack.c.b16 %v3800, %v3796
      %v3845 = vpack.c.b16 %v3805, %v3801
      %v3846 = vpack.c.b16 %v3806, %v3802
      %v3847 = vpack.c.b16 %v3807, %v3803
      %v3848 = vpack.c.b16 %v3808, %v3804
      %v3849 = vpack.c.b16 %v3813, %v3809
      %v3850 = vpack.c.b16 %v3814, %v3810
      %v3851 = vpack.c.b16 %v3815, %v3811
      %v3852 = vpack.c.b16 %v3816, %v3812
      %v3853 = vpack.c.b16 %v3821, %v3817
      %v3854 = vpack.c.b16 %v3822, %v3818
      %v3855 = vpack.c.b16 %v3823, %v3819
      %v3856 = vpack.c.b16 %v3824, %v3820
      %3889 = vmatpush.bf16.msra.mxu0 %v3853
      %3890 = vmatpush.bf16.msra.mxu0 %v3849
      %3891 = vmatpush.bf16.msra.mxu0 %v3845
      %3892 = vmatpush.bf16.msra.mxu0 %v3841
      %3893 = vmatpush.bf16.msra.mxu0 %v3837
      %3894 = vmatpush.bf16.msra.mxu0 %v3833
      %3895 = vmatpush.bf16.msra.mxu0 %v3829
      %3896 = vmatpush.bf16.msra.mxu0 %v3825
      %3897 = vmatmul.bf16.gmra.mxu0 %v3685
      %v3898 = vpop.f32.mrf.mxu0
      %v3899 = vadd.f32 %v3721, %v3898
      %v3900 = vpop.f32.mrf.mxu0
      %v3901 = vadd.f32 %v3721, %v3900
      %3902 = vmatmul.bf16.gmra.mxu0 %v3686
      %v3903 = vpop.f32.mrf.mxu0
      %v3904 = vadd.f32 %v3721, %v3903
      %v3905 = vpop.f32.mrf.mxu0
      %v3906 = vadd.f32 %v3721, %v3905
      %3907 = vdwg.mxu0
      %3908 = vmatpush.bf16.msra.mxu0 %v3854
      %3909 = vmatpush.bf16.msra.mxu0 %v3850
      %3910 = vmatpush.bf16.msra.mxu0 %v3846
      %3911 = vmatpush.bf16.msra.mxu0 %v3842
      %3912 = vmatpush.bf16.msra.mxu0 %v3838
      %3913 = vmatpush.bf16.msra.mxu0 %v3834
      %3914 = vmatpush.bf16.msra.mxu0 %v3830
      %3915 = vmatpush.bf16.msra.mxu0 %v3826
      %3916 = vmatmul.bf16.gmra.mxu0 %v3685
      %v3917 = vpop.f32.mrf.mxu0
      %v3918 = vadd.f32 %v3722, %v3917
      %v3919 = vpop.f32.mrf.mxu0
      %v3920 = vadd.f32 %v3722, %v3919
      %3921 = vmatmul.bf16.gmra.mxu0 %v3686
      %v3922 = vpop.f32.mrf.mxu0
      %v3923 = vadd.f32 %v3722, %v3922
      %v3924 = vpop.f32.mrf.mxu0
      %v3925 = vadd.f32 %v3722, %v3924
      %3926 = vdwg.mxu0
      %3927 = vmatpush.bf16.msra.mxu0 %v3855
      %3928 = vmatpush.bf16.msra.mxu0 %v3851
      %3929 = vmatpush.bf16.msra.mxu0 %v3847
      %3930 = vmatpush.bf16.msra.mxu0 %v3843
      %3931 = vmatpush.bf16.msra.mxu0 %v3839
      %3932 = vmatpush.bf16.msra.mxu0 %v3835
      %3933 = vmatpush.bf16.msra.mxu0 %v3831
      %3934 = vmatpush.bf16.msra.mxu0 %v3827
      %3935 = vmatmul.bf16.gmra.mxu0 %v3685
      %v3936 = vpop.f32.mrf.mxu0
      %v3937 = vadd.f32 %v3723, %v3936
      %v3938 = vpop.f32.mrf.mxu0
      %v3939 = vadd.f32 %v3723, %v3938
      %3940 = vmatmul.bf16.gmra.mxu0 %v3686
      %v3941 = vpop.f32.mrf.mxu0
      %v3942 = vadd.f32 %v3723, %v3941
      %v3943 = vpop.f32.mrf.mxu0
      %v3944 = vadd.f32 %v3723, %v3943
      %3945 = vdwg.mxu0
      %3946 = vmatpush.bf16.msra.mxu0 %v3856
      %3947 = vmatpush.bf16.msra.mxu0 %v3852
      %3948 = vmatpush.bf16.msra.mxu0 %v3848
      %3949 = vmatpush.bf16.msra.mxu0 %v3844
      %3950 = vmatpush.bf16.msra.mxu0 %v3840
      %3951 = vmatpush.bf16.msra.mxu0 %v3836
      %3952 = vmatpush.bf16.msra.mxu0 %v3832
      %3953 = vmatpush.bf16.msra.mxu0 %v3828
      %3954 = vmatmul.bf16.gmra.mxu0 %v3685
      %v3955 = vpop.f32.mrf.mxu0
      %v3956 = vadd.f32 %v3724, %v3955
      %v3957 = vpop.f32.mrf.mxu0
      %v3958 = vadd.f32 %v3724, %v3957
      %3959 = vmatmul.bf16.gmra.mxu0 %v3686
      %v3960 = vpop.f32.mrf.mxu0
      %v3961 = vadd.f32 %v3724, %v3960
      %v3962 = vpop.f32.mrf.mxu0
      %v3963 = vadd.f32 %v3724, %v3962
      %3964 = vdwg.mxu0
      %v3965 = vmax.f32 %v3899, 0.0
      %v3966 = vmax.f32 %v3918, 0.0
      %v3967 = vmax.f32 %v3937, 0.0
      %v3968 = vmax.f32 %v3956, 0.0
      %v3969 = vmax.f32 %v3901, 0.0
      %v3970 = vmax.f32 %v3920, 0.0
      %v3971 = vmax.f32 %v3939, 0.0
      %v3972 = vmax.f32 %v3958, 0.0
      %v3973 = vmax.f32 %v3904, 0.0
      %v3974 = vmax.f32 %v3923, 0.0
      %v3975 = vmax.f32 %v3942, 0.0
      %v3976 = vmax.f32 %v3961, 0.0
      %v3977 = vmax.f32 %v3906, 0.0
      %v3978 = vmax.f32 %v3925, 0.0
      %v3979 = vmax.f32 %v3944, 0.0
      %v3980 = vmax.f32 %v3963, 0.0
      %v3981 = vpack.c.bf16 %v3969, %v3965
      %v3982 = vpack.c.bf16 %v3970, %v3966
      %v3983 = vpack.c.bf16 %v3971, %v3967
      %v3984 = vpack.c.bf16 %v3972, %v3968
      %v3985 = vpack.c.bf16 %v3977, %v3973
      %v3986 = vpack.c.bf16 %v3978, %v3974
      %v3987 = vpack.c.bf16 %v3979, %v3975
      %v3988 = vpack.c.bf16 %v3980, %v3976
      %v3989 = vld [vmem:[%s7] sm:$0xff]
      %v3990 = vld [vmem:[%s7 + $0x8] sm:$0xff]
      %v3991 = vld [vmem:[%s7 + $0x10] sm:$0xff]
      %v3992 = vld [vmem:[%s7 + $0x18] sm:$0xff]
      %v3993 = vld [vmem:[%s7 + $0x20] sm:$0xff]
      %v3994 = vld [vmem:[%s7 + $0x28] sm:$0xf]
      %v3995 = vld [vmem:[%s7 + $0x2c] sm:$0xff]
      %v3996 = vld [vmem:[%s7 + $0x34] sm:$0xff]
      %v3997 = vld [vmem:[%s7 + $0x3c] sm:$0xff]
      %v3998 = vld [vmem:[%s7 + $0x44] sm:$0xff]
      %v3999 = vld [vmem:[%s7 + $0x4c] sm:$0xff]
      %v4000 = vld [vmem:[%s7 + $0x54] sm:$0xf]
      %v4001 = vld [vmem:[%s7 + $0x58] sm:$0xff]
      %v4002 = vld [vmem:[%s7 + $0x60] sm:$0xff]
      %v4003 = vld [vmem:[%s7 + $0x68] sm:$0xff]
      %v4004 = vld [vmem:[%s7 + $0x70] sm:$0xff]
      %v4005 = vld [vmem:[%s7 + $0x78] sm:$0xff]
      %v4006 = vld [vmem:[%s7 + $0x80] sm:$0xf]
      %v4007 = vld [vmem:[%s7 + $0x84] sm:$0xff]
      %v4008 = vld [vmem:[%s7 + $0x8c] sm:$0xff]
      %v4009 = vld [vmem:[%s7 + $0x94] sm:$0xff]
      %v4010 = vld [vmem:[%s7 + $0x9c] sm:$0xff]
      %v4011 = vld [vmem:[%s7 + $0xa4] sm:$0xff]
      %v4012 = vld [vmem:[%s7 + $0xac] sm:$0xf]
      %v4013 = vld [vmem:[%s7 + $0xb0] sm:$0xff]
      %v4014 = vld [vmem:[%s7 + $0xb8] sm:$0xff]
      %v4015 = vld [vmem:[%s7 + $0xc0] sm:$0xff]
      %v4016 = vld [vmem:[%s7 + $0xc8] sm:$0xff]
      %v4017 = vld [vmem:[%s7 + $0xd0] sm:$0xff]
      %v4018 = vld [vmem:[%s7 + $0xd8] sm:$0xf]
      %v4019 = vld [vmem:[%s7 + $0xdc] sm:$0xff]
      %v4020 = vld [vmem:[%s7 + $0xe4] sm:$0xff]
      %v4021 = vld [vmem:[%s7 + $0xec] sm:$0xff]
      %v4022 = vld [vmem:[%s7 + $0xf4] sm:$0xff]
      %v4023 = vld [vmem:[%s7 + $0xfc] sm:$0xff]
      %v4024 = vld [vmem:[%s7 + $0x104] sm:$0xf]
      %v4025 = vld [vmem:[%s7 + $0x108] sm:$0xff]
      %v4026 = vld [vmem:[%s7 + $0x110] sm:$0xff]
      %v4027 = vld [vmem:[%s7 + $0x118] sm:$0xff]
      %v4028 = vld [vmem:[%s7 + $0x120] sm:$0xff]
      %v4029 = vld [vmem:[%s7 + $0x128] sm:$0xff]
      %v4030 = vld [vmem:[%s7 + $0x130] sm:$0xf]
      %v4031 = vld [vmem:[%s7 + $0x134] sm:$0xff]
      %v4032 = vld [vmem:[%s7 + $0x13c] sm:$0xff]
      %v4033 = vld [vmem:[%s7 + $0x144] sm:$0xff]
      %v4034 = vld [vmem:[%s7 + $0x14c] sm:$0xff]
      %v4035 = vld [vmem:[%s7 + $0x154] sm:$0xff]
      %v4036 = vld [vmem:[%s7 + $0x15c] sm:$0xf]
      %v4037 = vld [vmem:[%s7 + $0x160] sm:$0xff]
      %v4038 = vld [vmem:[%s7 + $0x168] sm:$0xff]
      %v4039 = vld [vmem:[%s7 + $0x170] sm:$0xff]
      %v4040 = vld [vmem:[%s7 + $0x178] sm:$0xff]
      %v4041 = vld [vmem:[%s7 + $0x180] sm:$0xff]
      %v4042 = vld [vmem:[%s7 + $0x188] sm:$0xf]
      %v4043 = vld [vmem:[%s7 + $0x18c] sm:$0xff]
      %v4044 = vld [vmem:[%s7 + $0x194] sm:$0xff]
      %v4045 = vld [vmem:[%s7 + $0x19c] sm:$0xff]
      %v4046 = vld [vmem:[%s7 + $0x1a4] sm:$0xff]
      %v4047 = vld [vmem:[%s7 + $0x1ac] sm:$0xff]
      %v4048 = vld [vmem:[%s7 + $0x1b4] sm:$0xf]
      %v4049 = vld [vmem:[%s7 + $0x1b8] sm:$0xff]
      %v4050 = vld [vmem:[%s7 + $0x1c0] sm:$0xff]
      %v4051 = vld [vmem:[%s7 + $0x1c8] sm:$0xff]
      %v4052 = vld [vmem:[%s7 + $0x1d0] sm:$0xff]
      %v4053 = vld [vmem:[%s7 + $0x1d8] sm:$0xff]
      %v4054 = vld [vmem:[%s7 + $0x1e0] sm:$0xf]
      %v4055 = vld [vmem:[%s7 + $0x1e4] sm:$0xff]
      %v4056 = vld [vmem:[%s7 + $0x1ec] sm:$0xff]
      %v4057 = vld [vmem:[%s7 + $0x1f4] sm:$0xff]
      %v4058 = vld [vmem:[%s7 + $0x1fc] sm:$0xff]
      %v4059 = vld [vmem:[%s7 + $0x204] sm:$0xff]
      %v4060 = vld [vmem:[%s7 + $0x20c] sm:$0xf]
      %v4061 = vld [vmem:[%s7 + $0x210] sm:$0xff]
      %v4062 = vld [vmem:[%s7 + $0x218] sm:$0xff]
      %v4063 = vld [vmem:[%s7 + $0x220] sm:$0xff]
      %v4064 = vld [vmem:[%s7 + $0x228] sm:$0xff]
      %v4065 = vld [vmem:[%s7 + $0x230] sm:$0xff]
      %v4066 = vld [vmem:[%s7 + $0x238] sm:$0xf]
      %v4067 = vld [vmem:[%s7 + $0x23c] sm:$0xff]
      %v4068 = vld [vmem:[%s7 + $0x244] sm:$0xff]
      %v4069 = vld [vmem:[%s7 + $0x24c] sm:$0xff]
      %v4070 = vld [vmem:[%s7 + $0x254] sm:$0xff]
      %v4071 = vld [vmem:[%s7 + $0x25c] sm:$0xff]
      %v4072 = vld [vmem:[%s7 + $0x264] sm:$0xf]
      %v4073 = vld [vmem:[%s7 + $0x268] sm:$0xff]
      %v4074 = vld [vmem:[%s7 + $0x270] sm:$0xff]
      %v4075 = vld [vmem:[%s7 + $0x278] sm:$0xff]
      %v4076 = vld [vmem:[%s7 + $0x280] sm:$0xff]
      %v4077 = vld [vmem:[%s7 + $0x288] sm:$0xff]
      %v4078 = vld [vmem:[%s7 + $0x290] sm:$0xf]
      %v4079 = vld [vmem:[%s7 + $0x294] sm:$0xff]
      %v4080 = vld [vmem:[%s7 + $0x29c] sm:$0xff]
      %v4081 = vld [vmem:[%s7 + $0x2a4] sm:$0xff]
      %v4082 = vld [vmem:[%s7 + $0x2ac] sm:$0xff]
      %v4083 = vld [vmem:[%s7 + $0x2b4] sm:$0xff]
      %v4084 = vld [vmem:[%s7 + $0x2bc] sm:$0xf]
      %v4085 = vld [vmem:[%s7 + $0x2c0] sm:$0xff]
      %v4086 = vld [vmem:[%s7 + $0x2c8] sm:$0xff]
      %v4087 = vld [vmem:[%s7 + $0x2d0] sm:$0xff]
      %v4088 = vld [vmem:[%s7 + $0x2d8] sm:$0xff]
      %v4089 = vld [vmem:[%s7 + $0x2e0] sm:$0xff]
      %v4090 = vld [vmem:[%s7 + $0x2e8] sm:$0xf]
      %v4091 = vld [vmem:[%s7 + $0x2ec] sm:$0xff]
      %v4092 = vld [vmem:[%s7 + $0x2f4] sm:$0xff]
      %v4093 = vld [vmem:[%s7 + $0x2fc] sm:$0xff]
      %v4094 = vld [vmem:[%s7 + $0x304] sm:$0xff]
      %v4095 = vld [vmem:[%s7 + $0x30c] sm:$0xff]
      %v4096 = vld [vmem:[%s7 + $0x314] sm:$0xf]
      %v4097 = vld [vmem:[%s7 + $0x318] sm:$0xff]
      %v4098 = vld [vmem:[%s7 + $0x320] sm:$0xff]
      %v4099 = vld [vmem:[%s7 + $0x328] sm:$0xff]
      %v4100 = vld [vmem:[%s7 + $0x330] sm:$0xff]
      %v4101 = vld [vmem:[%s7 + $0x338] sm:$0xff]
      %v4102 = vld [vmem:[%s7 + $0x340] sm:$0xf]
      %v4103 = vld [vmem:[%s7 + $0x344] sm:$0xff]
      %v4104 = vld [vmem:[%s7 + $0x34c] sm:$0xff]
      %v4105 = vld [vmem:[%s7 + $0x354] sm:$0xff]
      %v4106 = vld [vmem:[%s7 + $0x35c] sm:$0xff]
      %v4107 = vld [vmem:[%s7 + $0x364] sm:$0xff]
      %v4108 = vld [vmem:[%s7 + $0x36c] sm:$0xf]
      %v4109 = vld [vmem:[%s7 + $0x370] sm:$0xff]
      %v4110 = vld [vmem:[%s7 + $0x378] sm:$0xff]
      %v4111 = vld [vmem:[%s7 + $0x380] sm:$0xff]
      %v4112 = vld [vmem:[%s7 + $0x388] sm:$0xff]
      %v4113 = vld [vmem:[%s7 + $0x390] sm:$0xff]
      %v4114 = vld [vmem:[%s7 + $0x398] sm:$0xf]
      %v4115 = vld [vmem:[%s7 + $0x39c] sm:$0xff]
      %v4116 = vld [vmem:[%s7 + $0x3a4] sm:$0xff]
      %v4117 = vld [vmem:[%s7 + $0x3ac] sm:$0xff]
      %v4118 = vld [vmem:[%s7 + $0x3b4] sm:$0xff]
      %v4119 = vld [vmem:[%s7 + $0x3bc] sm:$0xff]
      %v4120 = vld [vmem:[%s7 + $0x3c4] sm:$0xf]
      %v4121 = vld [vmem:[%s7 + $0x3c8] sm:$0xff]
      %v4122 = vld [vmem:[%s7 + $0x3d0] sm:$0xff]
      %v4123 = vld [vmem:[%s7 + $0x3d8] sm:$0xff]
      %v4124 = vld [vmem:[%s7 + $0x3e0] sm:$0xff]
      %v4125 = vld [vmem:[%s7 + $0x3e8] sm:$0xff]
      %v4126 = vld [vmem:[%s7 + $0x3f0] sm:$0xf]
      %v4127 = vld [vmem:[%s7 + $0x3f4] sm:$0xff]
      %v4128 = vld [vmem:[%s7 + $0x3fc] sm:$0xff]
      %v4129 = vld [vmem:[%s7 + $0x404] sm:$0xff]
      %v4130 = vld [vmem:[%s7 + $0x40c] sm:$0xff]
      %v4131 = vld [vmem:[%s7 + $0x414] sm:$0xff]
      %v4132 = vld [vmem:[%s7 + $0x41c] sm:$0xf]
      %v4133 = vld [vmem:[%s7 + $0x420] sm:$0xff]
      %v4134 = vld [vmem:[%s7 + $0x428] sm:$0xff]
      %v4135 = vld [vmem:[%s7 + $0x430] sm:$0xff]
      %v4136 = vld [vmem:[%s7 + $0x438] sm:$0xff]
      %v4137 = vld [vmem:[%s7 + $0x440] sm:$0xff]
      %v4138 = vld [vmem:[%s7 + $0x448] sm:$0xf]
      %v4139 = vld [vmem:[%s7 + $0x44c] sm:$0xff]
      %v4140 = vld [vmem:[%s7 + $0x454] sm:$0xff]
      %v4141 = vld [vmem:[%s7 + $0x45c] sm:$0xff]
      %v4142 = vld [vmem:[%s7 + $0x464] sm:$0xff]
      %v4143 = vld [vmem:[%s7 + $0x46c] sm:$0xff]
      %v4144 = vld [vmem:[%s7 + $0x474] sm:$0xf]
      %v4145 = vld [vmem:[%s7 + $0x478] sm:$0xff]
      %v4146 = vld [vmem:[%s7 + $0x480] sm:$0xff]
      %v4147 = vld [vmem:[%s7 + $0x488] sm:$0xff]
      %v4148 = vld [vmem:[%s7 + $0x490] sm:$0xff]
      %v4149 = vld [vmem:[%s7 + $0x498] sm:$0xff]
      %v4150 = vld [vmem:[%s7 + $0x4a0] sm:$0xf]
      %v4151 = vld [vmem:[%s7 + $0x4a4] sm:$0xff]
      %v4152 = vld [vmem:[%s7 + $0x4ac] sm:$0xff]
      %v4153 = vld [vmem:[%s7 + $0x4b4] sm:$0xff]
      %v4154 = vld [vmem:[%s7 + $0x4bc] sm:$0xff]
      %v4155 = vld [vmem:[%s7 + $0x4c4] sm:$0xff]
      %v4156 = vld [vmem:[%s7 + $0x4cc] sm:$0xf]
      %v4157 = vld [vmem:[%s7 + $0x4d0] sm:$0xff]
      %v4158 = vld [vmem:[%s7 + $0x4d8] sm:$0xff]
      %v4159 = vld [vmem:[%s7 + $0x4e0] sm:$0xff]
      %v4160 = vld [vmem:[%s7 + $0x4e8] sm:$0xff]
      %v4161 = vld [vmem:[%s7 + $0x4f0] sm:$0xff]
      %v4162 = vld [vmem:[%s7 + $0x4f8] sm:$0xf]
      %v4163 = vld [vmem:[%s7 + $0x4fc] sm:$0xff]
      %v4164 = vld [vmem:[%s7 + $0x504] sm:$0xff]
      %v4165 = vld [vmem:[%s7 + $0x50c] sm:$0xff]
      %v4166 = vld [vmem:[%s7 + $0x514] sm:$0xff]
      %v4167 = vld [vmem:[%s7 + $0x51c] sm:$0xff]
      %v4168 = vld [vmem:[%s7 + $0x524] sm:$0xf]
      %v4169 = vld [vmem:[%s7 + $0x528] sm:$0xff]
      %v4170 = vld [vmem:[%s7 + $0x530] sm:$0xff]
      %v4171 = vld [vmem:[%s7 + $0x538] sm:$0xff]
      %v4172 = vld [vmem:[%s7 + $0x540] sm:$0xff]
      %v4173 = vld [vmem:[%s7 + $0x548] sm:$0xff]
      %v4174 = vld [vmem:[%s7 + $0x550] sm:$0xf]
      %v4175 = vld [vmem:[%s7 + $0x554] sm:$0xff]
      %v4176 = vld [vmem:[%s7 + $0x55c] sm:$0xff]
      %v4177 = vld [vmem:[%s7 + $0x564] sm:$0xff]
      %v4178 = vld [vmem:[%s7 + $0x56c] sm:$0xff]
      %v4179 = vld [vmem:[%s7 + $0x574] sm:$0xff]
      %v4180 = vld [vmem:[%s7 + $0x57c] sm:$0xf]
      %v4181 = vld [vmem:[%s7 + $0x580] sm:$0xff]
      %v4182 = vld [vmem:[%s7 + $0x588] sm:$0xff]
      %v4183 = vld [vmem:[%s7 + $0x590] sm:$0xff]
      %v4184 = vld [vmem:[%s7 + $0x598] sm:$0xff]
      %v4185 = vld [vmem:[%s7 + $0x5a0] sm:$0xff]
      %v4186 = vld [vmem:[%s7 + $0x5a8] sm:$0xf]
      %v4187 = vld [vmem:[%s7 + $0x5ac] sm:$0xff]
      %v4188 = vld [vmem:[%s7 + $0x5b4] sm:$0xff]
      %v4189 = vld [vmem:[%s7 + $0x5bc] sm:$0xff]
      %v4190 = vld [vmem:[%s7 + $0x5c4] sm:$0xff]
      %v4191 = vld [vmem:[%s7 + $0x5cc] sm:$0xff]
      %v4192 = vld [vmem:[%s7 + $0x5d4] sm:$0xf]
      %v4193 = vld [vmem:[%s7 + $0x5d8] sm:$0xff]
      %v4194 = vld [vmem:[%s7 + $0x5e0] sm:$0xff]
      %v4195 = vld [vmem:[%s7 + $0x5e8] sm:$0xff]
      %v4196 = vld [vmem:[%s7 + $0x5f0] sm:$0xff]
      %v4197 = vld [vmem:[%s7 + $0x5f8] sm:$0xff]
      %v4198 = vld [vmem:[%s7 + $0x600] sm:$0xf]
      %v4199 = vld [vmem:[%s7 + $0x604] sm:$0xff]
      %v4200 = vld [vmem:[%s7 + $0x60c] sm:$0xff]
      %v4201 = vld [vmem:[%s7 + $0x614] sm:$0xff]
      %v4202 = vld [vmem:[%s7 + $0x61c] sm:$0xff]
      %v4203 = vld [vmem:[%s7 + $0x624] sm:$0xff]
      %v4204 = vld [vmem:[%s7 + $0x62c] sm:$0xf]
      %v4205 = vld [vmem:[%s7 + $0x630] sm:$0xff]
      %v4206 = vld [vmem:[%s7 + $0x638] sm:$0xff]
      %v4207 = vld [vmem:[%s7 + $0x640] sm:$0xff]
      %v4208 = vld [vmem:[%s7 + $0x648] sm:$0xff]
      %v4209 = vld [vmem:[%s7 + $0x650] sm:$0xff]
      %v4210 = vld [vmem:[%s7 + $0x658] sm:$0xf]
      %v4211 = vld [vmem:[%s7 + $0x65c] sm:$0xff]
      %v4212 = vld [vmem:[%s7 + $0x664] sm:$0xff]
      %v4213 = vld [vmem:[%s7 + $0x66c] sm:$0xff]
      %v4214 = vld [vmem:[%s7 + $0x674] sm:$0xff]
      %v4215 = vld [vmem:[%s7 + $0x67c] sm:$0xff]
      %v4216 = vld [vmem:[%s7 + $0x684] sm:$0xf]
      %v4217 = vld [vmem:[%s7 + $0x688] sm:$0xff]
      %v4218 = vld [vmem:[%s7 + $0x690] sm:$0xff]
      %v4219 = vld [vmem:[%s7 + $0x698] sm:$0xff]
      %v4220 = vld [vmem:[%s7 + $0x6a0] sm:$0xff]
      %v4221 = vld [vmem:[%s7 + $0x6a8] sm:$0xff]
      %v4222 = vld [vmem:[%s7 + $0x6b0] sm:$0xf]
      %v4223 = vld [vmem:[%s7 + $0x6b4] sm:$0xff]
      %v4224 = vld [vmem:[%s7 + $0x6bc] sm:$0xff]
      %v4225 = vld [vmem:[%s7 + $0x6c4] sm:$0xff]
      %v4226 = vld [vmem:[%s7 + $0x6cc] sm:$0xff]
      %v4227 = vld [vmem:[%s7 + $0x6d4] sm:$0xff]
      %v4228 = vld [vmem:[%s7 + $0x6dc] sm:$0xf]
      %v4229 = vld [vmem:[%s7 + $0x6e0] sm:$0xff]
      %v4230 = vld [vmem:[%s7 + $0x6e8] sm:$0xff]
      %v4231 = vld [vmem:[%s7 + $0x6f0] sm:$0xff]
      %v4232 = vld [vmem:[%s7 + $0x6f8] sm:$0xff]
      %v4233 = vld [vmem:[%s7 + $0x700] sm:$0xff]
      %v4234 = vld [vmem:[%s7 + $0x708] sm:$0xf]
      %v4235 = vld [vmem:[%s7 + $0x70c] sm:$0xff]
      %v4236 = vld [vmem:[%s7 + $0x714] sm:$0xff]
      %v4237 = vld [vmem:[%s7 + $0x71c] sm:$0xff]
      %v4238 = vld [vmem:[%s7 + $0x724] sm:$0xff]
      %v4239 = vld [vmem:[%s7 + $0x72c] sm:$0xff]
      %v4240 = vld [vmem:[%s7 + $0x734] sm:$0xf]
      %v4241 = vld [vmem:[%s7 + $0x738] sm:$0xff]
      %v4242 = vld [vmem:[%s7 + $0x740] sm:$0xff]
      %v4243 = vld [vmem:[%s7 + $0x748] sm:$0xff]
      %v4244 = vld [vmem:[%s7 + $0x750] sm:$0xff]
      %v4245 = vld [vmem:[%s7 + $0x758] sm:$0xff]
      %v4246 = vld [vmem:[%s7 + $0x760] sm:$0xf]
      %v4247 = vld [vmem:[%s7 + $0x764] sm:$0xff]
      %v4248 = vld [vmem:[%s7 + $0x76c] sm:$0xff]
      %v4249 = vld [vmem:[%s7 + $0x774] sm:$0xff]
      %v4250 = vld [vmem:[%s7 + $0x77c] sm:$0xff]
      %v4251 = vld [vmem:[%s7 + $0x784] sm:$0xff]
      %v4252 = vld [vmem:[%s7 + $0x78c] sm:$0xf]
      %v4253 = vld [vmem:[%s7 + $0x790] sm:$0xff]
      %v4254 = vld [vmem:[%s7 + $0x798] sm:$0xff]
      %v4255 = vld [vmem:[%s7 + $0x7a0] sm:$0xff]
      %v4256 = vld [vmem:[%s7 + $0x7a8] sm:$0xff]
      %v4257 = vld [vmem:[%s7 + $0x7b0] sm:$0xff]
      %v4258 = vld [vmem:[%s7 + $0x7b8] sm:$0xf]
      %v4259 = vld [vmem:[%s7 + $0x7bc] sm:$0xff]
      %v4260 = vld [vmem:[%s7 + $0x7c4] sm:$0xff]
      %v4261 = vld [vmem:[%s7 + $0x7cc] sm:$0xff]
      %v4262 = vld [vmem:[%s7 + $0x7d4] sm:$0xff]
      %v4263 = vld [vmem:[%s7 + $0x7dc] sm:$0xff]
      %v4264 = vld [vmem:[%s7 + $0x7e4] sm:$0xf]
      %v4265 = vld [vmem:[%s7 + $0x7e8] sm:$0xff]
      %v4266 = vld [vmem:[%s7 + $0x7f0] sm:$0xff]
      %v4267 = vld [vmem:[%s7 + $0x7f8] sm:$0xff]
      %v4268 = vld [vmem:[%s7 + $0x800] sm:$0xff]
      %v4269 = vld [vmem:[%s7 + $0x808] sm:$0xff]
      %v4270 = vld [vmem:[%s7 + $0x810] sm:$0xf]
      %v4271 = vld [vmem:[%s7 + $0x814] sm:$0xff]
      %v4272 = vld [vmem:[%s7 + $0x81c] sm:$0xff]
      %v4273 = vld [vmem:[%s7 + $0x824] sm:$0xff]
      %v4274 = vld [vmem:[%s7 + $0x82c] sm:$0xff]
      %v4275 = vld [vmem:[%s7 + $0x834] sm:$0xff]
      %v4276 = vld [vmem:[%s7 + $0x83c] sm:$0xf]
      %v4277 = vld [vmem:[%s7 + $0x840] sm:$0xff]
      %v4278 = vld [vmem:[%s7 + $0x848] sm:$0xff]
      %v4279 = vld [vmem:[%s7 + $0x850] sm:$0xff]
      %v4280 = vld [vmem:[%s7 + $0x858] sm:$0xff]
      %v4281 = vld [vmem:[%s7 + $0x860] sm:$0xff]
      %v4282 = vld [vmem:[%s7 + $0x868] sm:$0xf]
      %v4283 = vld [vmem:[%s7 + $0x86c] sm:$0xff]
      %v4284 = vld [vmem:[%s7 + $0x874] sm:$0xff]
      %v4285 = vld [vmem:[%s7 + $0x87c] sm:$0xff]
      %v4286 = vld [vmem:[%s7 + $0x884] sm:$0xff]
      %v4287 = vld [vmem:[%s7 + $0x88c] sm:$0xff]
      %v4288 = vld [vmem:[%s7 + $0x894] sm:$0xf]
      %v4289 = vld [vmem:[%s7 + $0x898] sm:$0xff]
      %v4290 = vld [vmem:[%s7 + $0x8a0] sm:$0xff]
      %v4291 = vld [vmem:[%s7 + $0x8a8] sm:$0xff]
      %v4292 = vld [vmem:[%s7 + $0x8b0] sm:$0xff]
      %v4293 = vld [vmem:[%s7 + $0x8b8] sm:$0xff]
      %v4294 = vld [vmem:[%s7 + $0x8c0] sm:$0xf]
      %v4295 = vld [vmem:[%s7 + $0x8c4] sm:$0xff]
      %v4296 = vld [vmem:[%s7 + $0x8cc] sm:$0xff]
      %v4297 = vld [vmem:[%s7 + $0x8d4] sm:$0xff]
      %v4298 = vld [vmem:[%s7 + $0x8dc] sm:$0xff]
      %v4299 = vld [vmem:[%s7 + $0x8e4] sm:$0xff]
      %v4300 = vld [vmem:[%s7 + $0x8ec] sm:$0xf]
      %v4301 = vld [vmem:[%s7 + $0x8f0] sm:$0xff]
      %v4302 = vld [vmem:[%s7 + $0x8f8] sm:$0xff]
      %v4303 = vld [vmem:[%s7 + $0x900] sm:$0xff]
      %v4304 = vld [vmem:[%s7 + $0x908] sm:$0xff]
      %v4305 = vld [vmem:[%s7 + $0x910] sm:$0xff]
      %v4306 = vld [vmem:[%s7 + $0x918] sm:$0xf]
      %v4307 = vld [vmem:[%s7 + $0x91c] sm:$0xff]
      %v4308 = vld [vmem:[%s7 + $0x924] sm:$0xff]
      %v4309 = vld [vmem:[%s7 + $0x92c] sm:$0xff]
      %v4310 = vld [vmem:[%s7 + $0x934] sm:$0xff]
      %v4311 = vld [vmem:[%s7 + $0x93c] sm:$0xff]
      %v4312 = vld [vmem:[%s7 + $0x944] sm:$0xf]
      %v4313 = vld [vmem:[%s7 + $0x948] sm:$0xff]
      %v4314 = vld [vmem:[%s7 + $0x950] sm:$0xff]
      %v4315 = vld [vmem:[%s7 + $0x958] sm:$0xff]
      %v4316 = vld [vmem:[%s7 + $0x960] sm:$0xff]
      %v4317 = vld [vmem:[%s7 + $0x968] sm:$0xff]
      %v4318 = vld [vmem:[%s7 + $0x970] sm:$0xf]
      %v4319 = vld [vmem:[%s7 + $0x974] sm:$0xff]
      %v4320 = vld [vmem:[%s7 + $0x97c] sm:$0xff]
      %v4321 = vld [vmem:[%s7 + $0x984] sm:$0xff]
      %v4322 = vld [vmem:[%s7 + $0x98c] sm:$0xff]
      %v4323 = vld [vmem:[%s7 + $0x994] sm:$0xff]
      %v4324 = vld [vmem:[%s7 + $0x99c] sm:$0xf]
      %v4325 = vld [vmem:[%s7 + $0x9a0] sm:$0xff]
      %v4326 = vld [vmem:[%s7 + $0x9a8] sm:$0xff]
      %v4327 = vld [vmem:[%s7 + $0x9b0] sm:$0xff]
      %v4328 = vld [vmem:[%s7 + $0x9b8] sm:$0xff]
      %v4329 = vld [vmem:[%s7 + $0x9c0] sm:$0xff]
      %v4330 = vld [vmem:[%s7 + $0x9c8] sm:$0xf]
      %v4331 = vld [vmem:[%s7 + $0x9cc] sm:$0xff]
      %v4332 = vld [vmem:[%s7 + $0x9d4] sm:$0xff]
      %v4333 = vld [vmem:[%s7 + $0x9dc] sm:$0xff]
      %v4334 = vld [vmem:[%s7 + $0x9e4] sm:$0xff]
      %v4335 = vld [vmem:[%s7 + $0x9ec] sm:$0xff]
      %v4336 = vld [vmem:[%s7 + $0x9f4] sm:$0xf]
      %v4337 = vld [vmem:[%s7 + $0x9f8] sm:$0xff]
      %v4338 = vld [vmem:[%s7 + $0xa00] sm:$0xff]
      %v4339 = vld [vmem:[%s7 + $0xa08] sm:$0xff]
      %v4340 = vld [vmem:[%s7 + $0xa10] sm:$0xff]
      %v4341 = vld [vmem:[%s7 + $0xa18] sm:$0xff]
      %v4342 = vld [vmem:[%s7 + $0xa20] sm:$0xf]
      %v4343 = vld [vmem:[%s7 + $0xa24] sm:$0xff]
      %v4344 = vld [vmem:[%s7 + $0xa2c] sm:$0xff]
      %v4345 = vld [vmem:[%s7 + $0xa34] sm:$0xff]
      %v4346 = vld [vmem:[%s7 + $0xa3c] sm:$0xff]
      %v4347 = vld [vmem:[%s7 + $0xa44] sm:$0xff]
      %v4348 = vld [vmem:[%s7 + $0xa4c] sm:$0xf]
      %v4349 = vld [vmem:[%s7 + $0xa50] sm:$0xff]
      %v4350 = vld [vmem:[%s7 + $0xa58] sm:$0xff]
      %v4351 = vld [vmem:[%s7 + $0xa60] sm:$0xff]
      %v4352 = vld [vmem:[%s7 + $0xa68] sm:$0xff]
      %v4353 = vld [vmem:[%s7 + $0xa70] sm:$0xff]
      %v4354 = vld [vmem:[%s7 + $0xa78] sm:$0xf]
      %v4355 = vld [vmem:[%s7 + $0xa7c] sm:$0xff]
      %v4356 = vld [vmem:[%s7 + $0xa84] sm:$0xff]
      %v4357 = vld [vmem:[%s7 + $0xa8c] sm:$0xff]
      %v4358 = vld [vmem:[%s7 + $0xa94] sm:$0xff]
      %v4359 = vld [vmem:[%s7 + $0xa9c] sm:$0xff]
      %v4360 = vld [vmem:[%s7 + $0xaa4] sm:$0xf]
      %v4361 = vld [vmem:[%s7 + $0xaa8] sm:$0xff]
      %v4362 = vld [vmem:[%s7 + $0xab0] sm:$0xff]
      %v4363 = vld [vmem:[%s7 + $0xab8] sm:$0xff]
      %v4364 = vld [vmem:[%s7 + $0xac0] sm:$0xff]
      %v4365 = vld [vmem:[%s7 + $0xac8] sm:$0xff]
      %v4366 = vld [vmem:[%s7 + $0xad0] sm:$0xf]
      %v4367 = vld [vmem:[%s7 + $0xad4] sm:$0xff]
      %v4368 = vld [vmem:[%s7 + $0xadc] sm:$0xff]
      %v4369 = vld [vmem:[%s7 + $0xae4] sm:$0xff]
      %v4370 = vld [vmem:[%s7 + $0xaec] sm:$0xff]
      %v4371 = vld [vmem:[%s7 + $0xaf4] sm:$0xff]
      %v4372 = vld [vmem:[%s7 + $0xafc] sm:$0xf]
      %v4373 = vld [vmem:[%s8] sm:$0xff]
      %v4374 = vld [vmem:[%s8 + $0x8] sm:$0x7]
      %v4377 = vperm.slane %v4373, 0
      %v4378 = vperm.slane %v4373, 1
      %v4379 = vperm.slane %v4373, 2
      %v4380 = vperm.slane %v4373, 3
      %v4381 = vperm.slane %v4373, 4
      %v4382 = vperm.slane %v4373, 5
      %v4383 = vperm.slane %v4373, 6
      %v4384 = vperm.slane %v4373, 7
      %v4385 = vperm.slane %v4374, 0
      %v4386 = vperm.slane %v4374, 1
      %v4387 = vperm.slane %v4374, 2
      %v4783 = vunpack.c.l.b16 %v3989
      %v4784 = vunpack.c.h.b16 %v3989
      %v4785 = vunpack.c.l.b16 %v3990
      %v4786 = vunpack.c.h.b16 %v3990
      %v4787 = vunpack.c.l.b16 %v3991
      %v4788 = vunpack.c.h.b16 %v3991
      %v4789 = vunpack.c.l.b16 %v3992
      %v4790 = vunpack.c.h.b16 %v3992
      %v4791 = vunpack.c.l.b16 %v3993
      %v4792 = vunpack.c.h.b16 %v3993
      %v4793 = vunpack.c.l.b16 %v3994
      %v4794 = vunpack.c.l.b16 %v3995
      %v4795 = vunpack.c.h.b16 %v3995
      %v4796 = vunpack.c.l.b16 %v3996
      %v4797 = vunpack.c.h.b16 %v3996
      %v4798 = vunpack.c.l.b16 %v3997
      %v4799 = vunpack.c.h.b16 %v3997
      %v4800 = vunpack.c.l.b16 %v3998
      %v4801 = vunpack.c.h.b16 %v3998
      %v4802 = vunpack.c.l.b16 %v3999
      %v4803 = vunpack.c.h.b16 %v3999
      %v4804 = vunpack.c.l.b16 %v4000
      %v4805 = vunpack.c.l.b16 %v4001
      %v4806 = vunpack.c.h.b16 %v4001
      %v4807 = vunpack.c.l.b16 %v4002
      %v4808 = vunpack.c.h.b16 %v4002
      %v4809 = vunpack.c.l.b16 %v4003
      %v4810 = vunpack.c.h.b16 %v4003
      %v4811 = vunpack.c.l.b16 %v4004
      %v4812 = vunpack.c.h.b16 %v4004
      %v4813 = vunpack.c.l.b16 %v4005
      %v4814 = vunpack.c.h.b16 %v4005
      %v4815 = vunpack.c.l.b16 %v4006
      %v4816 = vunpack.c.l.b16 %v4007
      %v4817 = vunpack.c.h.b16 %v4007
      %v4818 = vunpack.c.l.b16 %v4008
      %v4819 = vunpack.c.h.b16 %v4008
      %v4820 = vunpack.c.l.b16 %v4009
      %v4821 = vunpack.c.h.b16 %v4009
      %v4822 = vunpack.c.l.b16 %v4010
      %v4823 = vunpack.c.h.b16 %v4010
      %v4824 = vunpack.c.l.b16 %v4011
      %v4825 = vunpack.c.h.b16 %v4011
      %v4826 = vunpack.c.l.b16 %v4012
      %v4827 = vunpack.c.l.b16 %v4013
      %v4828 = vunpack.c.h.b16 %v4013
      %v4829 = vunpack.c.l.b16 %v4014
      %v4830 = vunpack.c.h.b16 %v4014
      %v4831 = vunpack.c.l.b16 %v4015
      %v4832 = vunpack.c.h.b16 %v4015
      %v4833 = vunpack.c.l.b16 %v4016
      %v4834 = vunpack.c.h.b16 %v4016
      %v4835 = vunpack.c.l.b16 %v4017
      %v4836 = vunpack.c.h.b16 %v4017
      %v4837 = vunpack.c.l.b16 %v4018
      %v4838 = vunpack.c.l.b16 %v4019
      %v4839 = vunpack.c.h.b16 %v4019
      %v4840 = vunpack.c.l.b16 %v4020
      %v4841 = vunpack.c.h.b16 %v4020
      %v4842 = vunpack.c.l.b16 %v4021
      %v4843 = vunpack.c.h.b16 %v4021
      %v4844 = vunpack.c.l.b16 %v4022
      %v4845 = vunpack.c.h.b16 %v4022
      %v4846 = vunpack.c.l.b16 %v4023
      %v4847 = vunpack.c.h.b16 %v4023
      %v4848 = vunpack.c.l.b16 %v4024
      %v4849 = vunpack.c.l.b16 %v4025
      %v4850 = vunpack.c.h.b16 %v4025
      %v4851 = vunpack.c.l.b16 %v4026
      %v4852 = vunpack.c.h.b16 %v4026
      %v4853 = vunpack.c.l.b16 %v4027
      %v4854 = vunpack.c.h.b16 %v4027
      %v4855 = vunpack.c.l.b16 %v4028
      %v4856 = vunpack.c.h.b16 %v4028
      %v4857 = vunpack.c.l.b16 %v4029
      %v4858 = vunpack.c.h.b16 %v4029
      %v4859 = vunpack.c.l.b16 %v4030
      %v4860 = vunpack.c.l.b16 %v4031
      %v4861 = vunpack.c.h.b16 %v4031
      %v4862 = vunpack.c.l.b16 %v4032
      %v4863 = vunpack.c.h.b16 %v4032
      %v4864 = vunpack.c.l.b16 %v4033
      %v4865 = vunpack.c.h.b16 %v4033
      %v4866 = vunpack.c.l.b16 %v4034
      %v4867 = vunpack.c.h.b16 %v4034
      %v4868 = vunpack.c.l.b16 %v4035
      %v4869 = vunpack.c.h.b16 %v4035
      %v4870 = vunpack.c.l.b16 %v4036
      %v4871 = vunpack.c.l.b16 %v4037
      %v4872 = vunpack.c.h.b16 %v4037
      %v4873 = vunpack.c.l.b16 %v4038
      %v4874 = vunpack.c.h.b16 %v4038
      %v4875 = vunpack.c.l.b16 %v4039
      %v4876 = vunpack.c.h.b16 %v4039
      %v4877 = vunpack.c.l.b16 %v4040
      %v4878 = vunpack.c.h.b16 %v4040
      %v4879 = vunpack.c.l.b16 %v4041
      %v4880 = vunpack.c.h.b16 %v4041
      %v4881 = vunpack.c.l.b16 %v4042
      %v4882 = vunpack.c.l.b16 %v4043
      %v4883 = vunpack.c.h.b16 %v4043
      %v4884 = vunpack.c.l.b16 %v4044
      %v4885 = vunpack.c.h.b16 %v4044
      %v4886 = vunpack.c.l.b16 %v4045
      %v4887 = vunpack.c.h.b16 %v4045
      %v4888 = vunpack.c.l.b16 %v4046
      %v4889 = vunpack.c.h.b16 %v4046
      %v4890 = vunpack.c.l.b16 %v4047
      %v4891 = vunpack.c.h.b16 %v4047
      %v4892 = vunpack.c.l.b16 %v4048
      %v4893 = vunpack.c.l.b16 %v4049
      %v4894 = vunpack.c.h.b16 %v4049
      %v4895 = vunpack.c.l.b16 %v4050
      %v4896 = vunpack.c.h.b16 %v4050
      %v4897 = vunpack.c.l.b16 %v4051
      %v4898 = vunpack.c.h.b16 %v4051
      %v4899 = vunpack.c.l.b16 %v4052
      %v4900 = vunpack.c.h.b16 %v4052
      %v4901 = vunpack.c.l.b16 %v4053
      %v4902 = vunpack.c.h.b16 %v4053
      %v4903 = vunpack.c.l.b16 %v4054
      %v4904 = vunpack.c.l.b16 %v4055
      %v4905 = vunpack.c.h.b16 %v4055
      %v4906 = vunpack.c.l.b16 %v4056
      %v4907 = vunpack.c.h.b16 %v4056
      %v4908 = vunpack.c.l.b16 %v4057
      %v4909 = vunpack.c.h.b16 %v4057
      %v4910 = vunpack.c.l.b16 %v4058
      %v4911 = vunpack.c.h.b16 %v4058
      %v4912 = vunpack.c.l.b16 %v4059
      %v4913 = vunpack.c.h.b16 %v4059
      %v4914 = vunpack.c.l.b16 %v4060
      %v4915 = vunpack.c.l.b16 %v4061
      %v4916 = vunpack.c.h.b16 %v4061
      %v4917 = vunpack.c.l.b16 %v4062
      %v4918 = vunpack.c.h.b16 %v4062
      %v4919 = vunpack.c.l.b16 %v4063
      %v4920 = vunpack.c.h.b16 %v4063
      %v4921 = vunpack.c.l.b16 %v4064
      %v4922 = vunpack.c.h.b16 %v4064
      %v4923 = vunpack.c.l.b16 %v4065
      %v4924 = vunpack.c.h.b16 %v4065
      %v4925 = vunpack.c.l.b16 %v4066
      %v4926 = vunpack.c.l.b16 %v4067
      %v4927 = vunpack.c.h.b16 %v4067
      %v4928 = vunpack.c.l.b16 %v4068
      %v4929 = vunpack.c.h.b16 %v4068
      %v4930 = vunpack.c.l.b16 %v4069
      %v4931 = vunpack.c.h.b16 %v4069
      %v4932 = vunpack.c.l.b16 %v4070
      %v4933 = vunpack.c.h.b16 %v4070
      %v4934 = vunpack.c.l.b16 %v4071
      %v4935 = vunpack.c.h.b16 %v4071
      %v4936 = vunpack.c.l.b16 %v4072
      %v4937 = vunpack.c.l.b16 %v4073
      %v4938 = vunpack.c.h.b16 %v4073
      %v4939 = vunpack.c.l.b16 %v4074
      %v4940 = vunpack.c.h.b16 %v4074
      %v4941 = vunpack.c.l.b16 %v4075
      %v4942 = vunpack.c.h.b16 %v4075
      %v4943 = vunpack.c.l.b16 %v4076
      %v4944 = vunpack.c.h.b16 %v4076
      %v4945 = vunpack.c.l.b16 %v4077
      %v4946 = vunpack.c.h.b16 %v4077
      %v4947 = vunpack.c.l.b16 %v4078
      %v4948 = vunpack.c.l.b16 %v4079
      %v4949 = vunpack.c.h.b16 %v4079
      %v4950 = vunpack.c.l.b16 %v4080
      %v4951 = vunpack.c.h.b16 %v4080
      %v4952 = vunpack.c.l.b16 %v4081
      %v4953 = vunpack.c.h.b16 %v4081
      %v4954 = vunpack.c.l.b16 %v4082
      %v4955 = vunpack.c.h.b16 %v4082
      %v4956 = vunpack.c.l.b16 %v4083
      %v4957 = vunpack.c.h.b16 %v4083
      %v4958 = vunpack.c.l.b16 %v4084
      %v4959 = vunpack.c.l.b16 %v4085
      %v4960 = vunpack.c.h.b16 %v4085
      %v4961 = vunpack.c.l.b16 %v4086
      %v4962 = vunpack.c.h.b16 %v4086
      %v4963 = vunpack.c.l.b16 %v4087
      %v4964 = vunpack.c.h.b16 %v4087
      %v4965 = vunpack.c.l.b16 %v4088
      %v4966 = vunpack.c.h.b16 %v4088
      %v4967 = vunpack.c.l.b16 %v4089
      %v4968 = vunpack.c.h.b16 %v4089
      %v4969 = vunpack.c.l.b16 %v4090
      %v4970 = vunpack.c.l.b16 %v4091
      %v4971 = vunpack.c.h.b16 %v4091
      %v4972 = vunpack.c.l.b16 %v4092
      %v4973 = vunpack.c.h.b16 %v4092
      %v4974 = vunpack.c.l.b16 %v4093
      %v4975 = vunpack.c.h.b16 %v4093
      %v4976 = vunpack.c.l.b16 %v4094
      %v4977 = vunpack.c.h.b16 %v4094
      %v4978 = vunpack.c.l.b16 %v4095
      %v4979 = vunpack.c.h.b16 %v4095
      %v4980 = vunpack.c.l.b16 %v4096
      %v4981 = vunpack.c.l.b16 %v4097
      %v4982 = vunpack.c.h.b16 %v4097
      %v4983 = vunpack.c.l.b16 %v4098
      %v4984 = vunpack.c.h.b16 %v4098
      %v4985 = vunpack.c.l.b16 %v4099
      %v4986 = vunpack.c.h.b16 %v4099
      %v4987 = vunpack.c.l.b16 %v4100
      %v4988 = vunpack.c.h.b16 %v4100
      %v4989 = vunpack.c.l.b16 %v4101
      %v4990 = vunpack.c.h.b16 %v4101
      %v4991 = vunpack.c.l.b16 %v4102
      %v4992 = vunpack.c.l.b16 %v4103
      %v4993 = vunpack.c.h.b16 %v4103
      %v4994 = vunpack.c.l.b16 %v4104
      %v4995 = vunpack.c.h.b16 %v4104
      %v4996 = vunpack.c.l.b16 %v4105
      %v4997 = vunpack.c.h.b16 %v4105
      %v4998 = vunpack.c.l.b16 %v4106
      %v4999 = vunpack.c.h.b16 %v4106
      %v5000 = vunpack.c.l.b16 %v4107
      %v5001 = vunpack.c.h.b16 %v4107
      %v5002 = vunpack.c.l.b16 %v4108
      %v5003 = vunpack.c.l.b16 %v4109
      %v5004 = vunpack.c.h.b16 %v4109
      %v5005 = vunpack.c.l.b16 %v4110
      %v5006 = vunpack.c.h.b16 %v4110
      %v5007 = vunpack.c.l.b16 %v4111
      %v5008 = vunpack.c.h.b16 %v4111
      %v5009 = vunpack.c.l.b16 %v4112
      %v5010 = vunpack.c.h.b16 %v4112
      %v5011 = vunpack.c.l.b16 %v4113
      %v5012 = vunpack.c.h.b16 %v4113
      %v5013 = vunpack.c.l.b16 %v4114
      %v5014 = vunpack.c.l.b16 %v4115
      %v5015 = vunpack.c.h.b16 %v4115
      %v5016 = vunpack.c.l.b16 %v4116
      %v5017 = vunpack.c.h.b16 %v4116
      %v5018 = vunpack.c.l.b16 %v4117
      %v5019 = vunpack.c.h.b16 %v4117
      %v5020 = vunpack.c.l.b16 %v4118
      %v5021 = vunpack.c.h.b16 %v4118
      %v5022 = vunpack.c.l.b16 %v4119
      %v5023 = vunpack.c.h.b16 %v4119
      %v5024 = vunpack.c.l.b16 %v4120
      %v5025 = vunpack.c.l.b16 %v4121
      %v5026 = vunpack.c.h.b16 %v4121
      %v5027 = vunpack.c.l.b16 %v4122
      %v5028 = vunpack.c.h.b16 %v4122
      %v5029 = vunpack.c.l.b16 %v4123
      %v5030 = vunpack.c.h.b16 %v4123
      %v5031 = vunpack.c.l.b16 %v4124
      %v5032 = vunpack.c.h.b16 %v4124
      %v5033 = vunpack.c.l.b16 %v4125
      %v5034 = vunpack.c.h.b16 %v4125
      %v5035 = vunpack.c.l.b16 %v4126
      %v5036 = vunpack.c.l.b16 %v4127
      %v5037 = vunpack.c.h.b16 %v4127
      %v5038 = vunpack.c.l.b16 %v4128
      %v5039 = vunpack.c.h.b16 %v4128
      %v5040 = vunpack.c.l.b16 %v4129
      %v5041 = vunpack.c.h.b16 %v4129
      %v5042 = vunpack.c.l.b16 %v4130
      %v5043 = vunpack.c.h.b16 %v4130
      %v5044 = vunpack.c.l.b16 %v4131
      %v5045 = vunpack.c.h.b16 %v4131
      %v5046 = vunpack.c.l.b16 %v4132
      %v5047 = vunpack.c.l.b16 %v4133
      %v5048 = vunpack.c.h.b16 %v4133
      %v5049 = vunpack.c.l.b16 %v4134
      %v5050 = vunpack.c.h.b16 %v4134
      %v5051 = vunpack.c.l.b16 %v4135
      %v5052 = vunpack.c.h.b16 %v4135
      %v5053 = vunpack.c.l.b16 %v4136
      %v5054 = vunpack.c.h.b16 %v4136
      %v5055 = vunpack.c.l.b16 %v4137
      %v5056 = vunpack.c.h.b16 %v4137
      %v5057 = vunpack.c.l.b16 %v4138
      %v5058 = vunpack.c.l.b16 %v4139
      %v5059 = vunpack.c.h.b16 %v4139
      %v5060 = vunpack.c.l.b16 %v4140
      %v5061 = vunpack.c.h.b16 %v4140
      %v5062 = vunpack.c.l.b16 %v4141
      %v5063 = vunpack.c.h.b16 %v4141
      %v5064 = vunpack.c.l.b16 %v4142
      %v5065 = vunpack.c.h.b16 %v4142
      %v5066 = vunpack.c.l.b16 %v4143
      %v5067 = vunpack.c.h.b16 %v4143
      %v5068 = vunpack.c.l.b16 %v4144
      %v5069 = vunpack.c.l.b16 %v4145
      %v5070 = vunpack.c.h.b16 %v4145
      %v5071 = vunpack.c.l.b16 %v4146
      %v5072 = vunpack.c.h.b16 %v4146
      %v5073 = vunpack.c.l.b16 %v4147
      %v5074 = vunpack.c.h.b16 %v4147
      %v5075 = vunpack.c.l.b16 %v4148
      %v5076 = vunpack.c.h.b16 %v4148
      %v5077 = vunpack.c.l.b16 %v4149
      %v5078 = vunpack.c.h.b16 %v4149
      %v5079 = vunpack.c.l.b16 %v4150
      %v5080 = vunpack.c.l.b16 %v4151
      %v5081 = vunpack.c.h.b16 %v4151
      %v5082 = vunpack.c.l.b16 %v4152
      %v5083 = vunpack.c.h.b16 %v4152
      %v5084 = vunpack.c.l.b16 %v4153
      %v5085 = vunpack.c.h.b16 %v4153
      %v5086 = vunpack.c.l.b16 %v4154
      %v5087 = vunpack.c.h.b16 %v4154
      %v5088 = vunpack.c.l.b16 %v4155
      %v5089 = vunpack.c.h.b16 %v4155
      %v5090 = vunpack.c.l.b16 %v4156
      %v5091 = vunpack.c.l.b16 %v4157
      %v5092 = vunpack.c.h.b16 %v4157
      %v5093 = vunpack.c.l.b16 %v4158
      %v5094 = vunpack.c.h.b16 %v4158
      %v5095 = vunpack.c.l.b16 %v4159
      %v5096 = vunpack.c.h.b16 %v4159
      %v5097 = vunpack.c.l.b16 %v4160
      %v5098 = vunpack.c.h.b16 %v4160
      %v5099 = vunpack.c.l.b16 %v4161
      %v5100 = vunpack.c.h.b16 %v4161
      %v5101 = vunpack.c.l.b16 %v4162
      %v5102 = vunpack.c.l.b16 %v4163
      %v5103 = vunpack.c.h.b16 %v4163
      %v5104 = vunpack.c.l.b16 %v4164
      %v5105 = vunpack.c.h.b16 %v4164
      %v5106 = vunpack.c.l.b16 %v4165
      %v5107 = vunpack.c.h.b16 %v4165
      %v5108 = vunpack.c.l.b16 %v4166
      %v5109 = vunpack.c.h.b16 %v4166
      %v5110 = vunpack.c.l.b16 %v4167
      %v5111 = vunpack.c.h.b16 %v4167
      %v5112 = vunpack.c.l.b16 %v4168
      %v5113 = vunpack.c.l.b16 %v4169
      %v5114 = vunpack.c.h.b16 %v4169
      %v5115 = vunpack.c.l.b16 %v4170
      %v5116 = vunpack.c.h.b16 %v4170
      %v5117 = vunpack.c.l.b16 %v4171
      %v5118 = vunpack.c.h.b16 %v4171
      %v5119 = vunpack.c.l.b16 %v4172
      %v5120 = vunpack.c.h.b16 %v4172
      %v5121 = vunpack.c.l.b16 %v4173
      %v5122 = vunpack.c.h.b16 %v4173
      %v5123 = vunpack.c.l.b16 %v4174
      %v5124 = vunpack.c.l.b16 %v4175
      %v5125 = vunpack.c.h.b16 %v4175
      %v5126 = vunpack.c.l.b16 %v4176
      %v5127 = vunpack.c.h.b16 %v4176
      %v5128 = vunpack.c.l.b16 %v4177
      %v5129 = vunpack.c.h.b16 %v4177
      %v5130 = vunpack.c.l.b16 %v4178
      %v5131 = vunpack.c.h.b16 %v4178
      %v5132 = vunpack.c.l.b16 %v4179
      %v5133 = vunpack.c.h.b16 %v4179
      %v5134 = vunpack.c.l.b16 %v4180
      %v5135 = vunpack.c.l.b16 %v4181
      %v5136 = vunpack.c.h.b16 %v4181
      %v5137 = vunpack.c.l.b16 %v4182
      %v5138 = vunpack.c.h.b16 %v4182
      %v5139 = vunpack.c.l.b16 %v4183
      %v5140 = vunpack.c.h.b16 %v4183
      %v5141 = vunpack.c.l.b16 %v4184
      %v5142 = vunpack.c.h.b16 %v4184
      %v5143 = vunpack.c.l.b16 %v4185
      %v5144 = vunpack.c.h.b16 %v4185
      %v5145 = vunpack.c.l.b16 %v4186
      %v5146 = vunpack.c.l.b16 %v4187
      %v5147 = vunpack.c.h.b16 %v4187
      %v5148 = vunpack.c.l.b16 %v4188
      %v5149 = vunpack.c.h.b16 %v4188
      %v5150 = vunpack.c.l.b16 %v4189
      %v5151 = vunpack.c.h.b16 %v4189
      %v5152 = vunpack.c.l.b16 %v4190
      %v5153 = vunpack.c.h.b16 %v4190
      %v5154 = vunpack.c.l.b16 %v4191
      %v5155 = vunpack.c.h.b16 %v4191
      %v5156 = vunpack.c.l.b16 %v4192
      %v5157 = vunpack.c.l.b16 %v4193
      %v5158 = vunpack.c.h.b16 %v4193
      %v5159 = vunpack.c.l.b16 %v4194
      %v5160 = vunpack.c.h.b16 %v4194
      %v5161 = vunpack.c.l.b16 %v4195
      %v5162 = vunpack.c.h.b16 %v4195
      %v5163 = vunpack.c.l.b16 %v4196
      %v5164 = vunpack.c.h.b16 %v4196
      %v5165 = vunpack.c.l.b16 %v4197
      %v5166 = vunpack.c.h.b16 %v4197
      %v5167 = vunpack.c.l.b16 %v4198
      %v5168 = vunpack.c.l.b16 %v4199
      %v5169 = vunpack.c.h.b16 %v4199
      %v5170 = vunpack.c.l.b16 %v4200
      %v5171 = vunpack.c.h.b16 %v4200
      %v5172 = vunpack.c.l.b16 %v4201
      %v5173 = vunpack.c.h.b16 %v4201
      %v5174 = vunpack.c.l.b16 %v4202
      %v5175 = vunpack.c.h.b16 %v4202
      %v5176 = vunpack.c.l.b16 %v4203
      %v5177 = vunpack.c.h.b16 %v4203
      %v5178 = vunpack.c.l.b16 %v4204
      %v5179 = vunpack.c.l.b16 %v4205
      %v5180 = vunpack.c.h.b16 %v4205
      %v5181 = vunpack.c.l.b16 %v4206
      %v5182 = vunpack.c.h.b16 %v4206
      %v5183 = vunpack.c.l.b16 %v4207
      %v5184 = vunpack.c.h.b16 %v4207
      %v5185 = vunpack.c.l.b16 %v4208
      %v5186 = vunpack.c.h.b16 %v4208
      %v5187 = vunpack.c.l.b16 %v4209
      %v5188 = vunpack.c.h.b16 %v4209
      %v5189 = vunpack.c.l.b16 %v4210
      %v5190 = vunpack.c.l.b16 %v4211
      %v5191 = vunpack.c.h.b16 %v4211
      %v5192 = vunpack.c.l.b16 %v4212
      %v5193 = vunpack.c.h.b16 %v4212
      %v5194 = vunpack.c.l.b16 %v4213
      %v5195 = vunpack.c.h.b16 %v4213
      %v5196 = vunpack.c.l.b16 %v4214
      %v5197 = vunpack.c.h.b16 %v4214
      %v5198 = vunpack.c.l.b16 %v4215
      %v5199 = vunpack.c.h.b16 %v4215
      %v5200 = vunpack.c.l.b16 %v4216
      %v5201 = vunpack.c.l.b16 %v4217
      %v5202 = vunpack.c.h.b16 %v4217
      %v5203 = vunpack.c.l.b16 %v4218
      %v5204 = vunpack.c.h.b16 %v4218
      %v5205 = vunpack.c.l.b16 %v4219
      %v5206 = vunpack.c.h.b16 %v4219
      %v5207 = vunpack.c.l.b16 %v4220
      %v5208 = vunpack.c.h.b16 %v4220
      %v5209 = vunpack.c.l.b16 %v4221
      %v5210 = vunpack.c.h.b16 %v4221
      %v5211 = vunpack.c.l.b16 %v4222
      %v5212 = vunpack.c.l.b16 %v4223
      %v5213 = vunpack.c.h.b16 %v4223
      %v5214 = vunpack.c.l.b16 %v4224
      %v5215 = vunpack.c.h.b16 %v4224
      %v5216 = vunpack.c.l.b16 %v4225
      %v5217 = vunpack.c.h.b16 %v4225
      %v5218 = vunpack.c.l.b16 %v4226
      %v5219 = vunpack.c.h.b16 %v4226
      %v5220 = vunpack.c.l.b16 %v4227
      %v5221 = vunpack.c.h.b16 %v4227
      %v5222 = vunpack.c.l.b16 %v4228
      %v5223 = vunpack.c.l.b16 %v4229
      %v5224 = vunpack.c.h.b16 %v4229
      %v5225 = vunpack.c.l.b16 %v4230
      %v5226 = vunpack.c.h.b16 %v4230
      %v5227 = vunpack.c.l.b16 %v4231
      %v5228 = vunpack.c.h.b16 %v4231
      %v5229 = vunpack.c.l.b16 %v4232
      %v5230 = vunpack.c.h.b16 %v4232
      %v5231 = vunpack.c.l.b16 %v4233
      %v5232 = vunpack.c.h.b16 %v4233
      %v5233 = vunpack.c.l.b16 %v4234
      %v5234 = vunpack.c.l.b16 %v4235
      %v5235 = vunpack.c.h.b16 %v4235
      %v5236 = vunpack.c.l.b16 %v4236
      %v5237 = vunpack.c.h.b16 %v4236
      %v5238 = vunpack.c.l.b16 %v4237
      %v5239 = vunpack.c.h.b16 %v4237
      %v5240 = vunpack.c.l.b16 %v4238
      %v5241 = vunpack.c.h.b16 %v4238
      %v5242 = vunpack.c.l.b16 %v4239
      %v5243 = vunpack.c.h.b16 %v4239
      %v5244 = vunpack.c.l.b16 %v4240
      %v5245 = vunpack.c.l.b16 %v4241
      %v5246 = vunpack.c.h.b16 %v4241
      %v5247 = vunpack.c.l.b16 %v4242
      %v5248 = vunpack.c.h.b16 %v4242
      %v5249 = vunpack.c.l.b16 %v4243
      %v5250 = vunpack.c.h.b16 %v4243
      %v5251 = vunpack.c.l.b16 %v4244
      %v5252 = vunpack.c.h.b16 %v4244
      %v5253 = vunpack.c.l.b16 %v4245
      %v5254 = vunpack.c.h.b16 %v4245
      %v5255 = vunpack.c.l.b16 %v4246
      %v5256 = vunpack.c.l.b16 %v4247
      %v5257 = vunpack.c.h.b16 %v4247
      %v5258 = vunpack.c.l.b16 %v4248
      %v5259 = vunpack.c.h.b16 %v4248
      %v5260 = vunpack.c.l.b16 %v4249
      %v5261 = vunpack.c.h.b16 %v4249
      %v5262 = vunpack.c.l.b16 %v4250
      %v5263 = vunpack.c.h.b16 %v4250
      %v5264 = vunpack.c.l.b16 %v4251
      %v5265 = vunpack.c.h.b16 %v4251
      %v5266 = vunpack.c.l.b16 %v4252
      %v5267 = vunpack.c.l.b16 %v4253
      %v5268 = vunpack.c.h.b16 %v4253
      %v5269 = vunpack.c.l.b16 %v4254
      %v5270 = vunpack.c.h.b16 %v4254
      %v5271 = vunpack.c.l.b16 %v4255
      %v5272 = vunpack.c.h.b16 %v4255
      %v5273 = vunpack.c.l.b16 %v4256
      %v5274 = vunpack.c.h.b16 %v4256
      %v5275 = vunpack.c.l.b16 %v4257
      %v5276 = vunpack.c.h.b16 %v4257
      %v5277 = vunpack.c.l.b16 %v4258
      %v5278 = vunpack.c.l.b16 %v4259
      %v5279 = vunpack.c.h.b16 %v4259
      %v5280 = vunpack.c.l.b16 %v4260
      %v5281 = vunpack.c.h.b16 %v4260
      %v5282 = vunpack.c.l.b16 %v4261
      %v5283 = vunpack.c.h.b16 %v4261
      %v5284 = vunpack.c.l.b16 %v4262
      %v5285 = vunpack.c.h.b16 %v4262
      %v5286 = vunpack.c.l.b16 %v4263
      %v5287 = vunpack.c.h.b16 %v4263
      %v5288 = vunpack.c.l.b16 %v4264
      %v5289 = vunpack.c.l.b16 %v4265
      %v5290 = vunpack.c.h.b16 %v4265
      %v5291 = vunpack.c.l.b16 %v4266
      %v5292 = vunpack.c.h.b16 %v4266
      %v5293 = vunpack.c.l.b16 %v4267
      %v5294 = vunpack.c.h.b16 %v4267
      %v5295 = vunpack.c.l.b16 %v4268
      %v5296 = vunpack.c.h.b16 %v4268
      %v5297 = vunpack.c.l.b16 %v4269
      %v5298 = vunpack.c.h.b16 %v4269
      %v5299 = vunpack.c.l.b16 %v4270
      %v5300 = vunpack.c.l.b16 %v4271
      %v5301 = vunpack.c.h.b16 %v4271
      %v5302 = vunpack.c.l.b16 %v4272
      %v5303 = vunpack.c.h.b16 %v4272
      %v5304 = vunpack.c.l.b16 %v4273
      %v5305 = vunpack.c.h.b16 %v4273
      %v5306 = vunpack.c.l.b16 %v4274
      %v5307 = vunpack.c.h.b16 %v4274
      %v5308 = vunpack.c.l.b16 %v4275
      %v5309 = vunpack.c.h.b16 %v4275
      %v5310 = vunpack.c.l.b16 %v4276
      %v5311 = vunpack.c.l.b16 %v4277
      %v5312 = vunpack.c.h.b16 %v4277
      %v5313 = vunpack.c.l.b16 %v4278
      %v5314 = vunpack.c.h.b16 %v4278
      %v5315 = vunpack.c.l.b16 %v4279
      %v5316 = vunpack.c.h.b16 %v4279
      %v5317 = vunpack.c.l.b16 %v4280
      %v5318 = vunpack.c.h.b16 %v4280
      %v5319 = vunpack.c.l.b16 %v4281
      %v5320 = vunpack.c.h.b16 %v4281
      %v5321 = vunpack.c.l.b16 %v4282
      %v5322 = vunpack.c.l.b16 %v4283
      %v5323 = vunpack.c.h.b16 %v4283
      %v5324 = vunpack.c.l.b16 %v4284
      %v5325 = vunpack.c.h.b16 %v4284
      %v5326 = vunpack.c.l.b16 %v4285
      %v5327 = vunpack.c.h.b16 %v4285
      %v5328 = vunpack.c.l.b16 %v4286
      %v5329 = vunpack.c.h.b16 %v4286
      %v5330 = vunpack.c.l.b16 %v4287
      %v5331 = vunpack.c.h.b16 %v4287
      %v5332 = vunpack.c.l.b16 %v4288
      %v5333 = vunpack.c.l.b16 %v4289
      %v5334 = vunpack.c.h.b16 %v4289
      %v5335 = vunpack.c.l.b16 %v4290
      %v5336 = vunpack.c.h.b16 %v4290
      %v5337 = vunpack.c.l.b16 %v4291
      %v5338 = vunpack.c.h.b16 %v4291
      %v5339 = vunpack.c.l.b16 %v4292
      %v5340 = vunpack.c.h.b16 %v4292
      %v5341 = vunpack.c.l.b16 %v4293
      %v5342 = vunpack.c.h.b16 %v4293
      %v5343 = vunpack.c.l.b16 %v4294
      %v5344 = vunpack.c.l.b16 %v4295
      %v5345 = vunpack.c.h.b16 %v4295
      %v5346 = vunpack.c.l.b16 %v4296
      %v5347 = vunpack.c.h.b16 %v4296
      %v5348 = vunpack.c.l.b16 %v4297
      %v5349 = vunpack.c.h.b16 %v4297
      %v5350 = vunpack.c.l.b16 %v4298
      %v5351 = vunpack.c.h.b16 %v4298
      %v5352 = vunpack.c.l.b16 %v4299
      %v5353 = vunpack.c.h.b16 %v4299
      %v5354 = vunpack.c.l.b16 %v4300
      %v5355 = vunpack.c.l.b16 %v4301
      %v5356 = vunpack.c.h.b16 %v4301
      %v5357 = vunpack.c.l.b16 %v4302
      %v5358 = vunpack.c.h.b16 %v4302
      %v5359 = vunpack.c.l.b16 %v4303
      %v5360 = vunpack.c.h.b16 %v4303
      %v5361 = vunpack.c.l.b16 %v4304
      %v5362 = vunpack.c.h.b16 %v4304
      %v5363 = vunpack.c.l.b16 %v4305
      %v5364 = vunpack.c.h.b16 %v4305
      %v5365 = vunpack.c.l.b16 %v4306
      %v5366 = vunpack.c.l.b16 %v4307
      %v5367 = vunpack.c.h.b16 %v4307
      %v5368 = vunpack.c.l.b16 %v4308
      %v5369 = vunpack.c.h.b16 %v4308
      %v5370 = vunpack.c.l.b16 %v4309
      %v5371 = vunpack.c.h.b16 %v4309
      %v5372 = vunpack.c.l.b16 %v4310
      %v5373 = vunpack.c.h.b16 %v4310
      %v5374 = vunpack.c.l.b16 %v4311
      %v5375 = vunpack.c.h.b16 %v4311
      %v5376 = vunpack.c.l.b16 %v4312
      %v5377 = vunpack.c.l.b16 %v4313
      %v5378 = vunpack.c.h.b16 %v4313
      %v5379 = vunpack.c.l.b16 %v4314
      %v5380 = vunpack.c.h.b16 %v4314
      %v5381 = vunpack.c.l.b16 %v4315
      %v5382 = vunpack.c.h.b16 %v4315
      %v5383 = vunpack.c.l.b16 %v4316
      %v5384 = vunpack.c.h.b16 %v4316
      %v5385 = vunpack.c.l.b16 %v4317
      %v5386 = vunpack.c.h.b16 %v4317
      %v5387 = vunpack.c.l.b16 %v4318
      %v5388 = vunpack.c.l.b16 %v4319
      %v5389 = vunpack.c.h.b16 %v4319
      %v5390 = vunpack.c.l.b16 %v4320
      %v5391 = vunpack.c.h.b16 %v4320
      %v5392 = vunpack.c.l.b16 %v4321
      %v5393 = vunpack.c.h.b16 %v4321
      %v5394 = vunpack.c.l.b16 %v4322
      %v5395 = vunpack.c.h.b16 %v4322
      %v5396 = vunpack.c.l.b16 %v4323
      %v5397 = vunpack.c.h.b16 %v4323
      %v5398 = vunpack.c.l.b16 %v4324
      %v5399 = vunpack.c.l.b16 %v4325
      %v5400 = vunpack.c.h.b16 %v4325
      %v5401 = vunpack.c.l.b16 %v4326
      %v5402 = vunpack.c.h.b16 %v4326
      %v5403 = vunpack.c.l.b16 %v4327
      %v5404 = vunpack.c.h.b16 %v4327
      %v5405 = vunpack.c.l.b16 %v4328
      %v5406 = vunpack.c.h.b16 %v4328
      %v5407 = vunpack.c.l.b16 %v4329
      %v5408 = vunpack.c.h.b16 %v4329
      %v5409 = vunpack.c.l.b16 %v4330
      %v5410 = vunpack.c.l.b16 %v4331
      %v5411 = vunpack.c.h.b16 %v4331
      %v5412 = vunpack.c.l.b16 %v4332
      %v5413 = vunpack.c.h.b16 %v4332
      %v5414 = vunpack.c.l.b16 %v4333
      %v5415 = vunpack.c.h.b16 %v4333
      %v5416 = vunpack.c.l.b16 %v4334
      %v5417 = vunpack.c.h.b16 %v4334
      %v5418 = vunpack.c.l.b16 %v4335
      %v5419 = vunpack.c.h.b16 %v4335
      %v5420 = vunpack.c.l.b16 %v4336
      %v5421 = vunpack.c.l.b16 %v4337
      %v5422 = vunpack.c.h.b16 %v4337
      %v5423 = vunpack.c.l.b16 %v4338
      %v5424 = vunpack.c.h.b16 %v4338
      %v5425 = vunpack.c.l.b16 %v4339
      %v5426 = vunpack.c.h.b16 %v4339
      %v5427 = vunpack.c.l.b16 %v4340
      %v5428 = vunpack.c.h.b16 %v4340
      %v5429 = vunpack.c.l.b16 %v4341
      %v5430 = vunpack.c.h.b16 %v4341
      %v5431 = vunpack.c.l.b16 %v4342
      %v5432 = vunpack.c.l.b16 %v4343
      %v5433 = vunpack.c.h.b16 %v4343
      %v5434 = vunpack.c.l.b16 %v4344
      %v5435 = vunpack.c.h.b16 %v4344
      %v5436 = vunpack.c.l.b16 %v4345
      %v5437 = vunpack.c.h.b16 %v4345
      %v5438 = vunpack.c.l.b16 %v4346
      %v5439 = vunpack.c.h.b16 %v4346
      %v5440 = vunpack.c.l.b16 %v4347
      %v5441 = vunpack.c.h.b16 %v4347
      %v5442 = vunpack.c.l.b16 %v4348
      %v5443 = vunpack.c.l.b16 %v4349
      %v5444 = vunpack.c.h.b16 %v4349
      %v5445 = vunpack.c.l.b16 %v4350
      %v5446 = vunpack.c.h.b16 %v4350
      %v5447 = vunpack.c.l.b16 %v4351
      %v5448 = vunpack.c.h.b16 %v4351
      %v5449 = vunpack.c.l.b16 %v4352
      %v5450 = vunpack.c.h.b16 %v4352
      %v5451 = vunpack.c.l.b16 %v4353
      %v5452 = vunpack.c.h.b16 %v4353
      %v5453 = vunpack.c.l.b16 %v4354
      %v5454 = vunpack.c.l.b16 %v4355
      %v5455 = vunpack.c.h.b16 %v4355
      %v5456 = vunpack.c.l.b16 %v4356
      %v5457 = vunpack.c.h.b16 %v4356
      %v5458 = vunpack.c.l.b16 %v4357
      %v5459 = vunpack.c.h.b16 %v4357
      %v5460 = vunpack.c.l.b16 %v4358
      %v5461 = vunpack.c.h.b16 %v4358
      %v5462 = vunpack.c.l.b16 %v4359
      %v5463 = vunpack.c.h.b16 %v4359
      %v5464 = vunpack.c.l.b16 %v4360
      %v5465 = vunpack.c.l.b16 %v4361
      %v5466 = vunpack.c.h.b16 %v4361
      %v5467 = vunpack.c.l.b16 %v4362
      %v5468 = vunpack.c.h.b16 %v4362
      %v5469 = vunpack.c.l.b16 %v4363
      %v5470 = vunpack.c.h.b16 %v4363
      %v5471 = vunpack.c.l.b16 %v4364
      %v5472 = vunpack.c.h.b16 %v4364
      %v5473 = vunpack.c.l.b16 %v4365
      %v5474 = vunpack.c.h.b16 %v4365
      %v5475 = vunpack.c.l.b16 %v4366
      %v5476 = vunpack.c.l.b16 %v4367
      %v5477 = vunpack.c.h.b16 %v4367
      %v5478 = vunpack.c.l.b16 %v4368
      %v5479 = vunpack.c.h.b16 %v4368
      %v5480 = vunpack.c.l.b16 %v4369
      %v5481 = vunpack.c.h.b16 %v4369
      %v5482 = vunpack.c.l.b16 %v4370
      %v5483 = vunpack.c.h.b16 %v4370
      %v5484 = vunpack.c.l.b16 %v4371
      %v5485 = vunpack.c.h.b16 %v4371
      %v5486 = vunpack.c.l.b16 %v4372
      %v5487 = vpack.c.b16 %v4794, %v4783
      %v5488 = vpack.c.b16 %v4795, %v4784
      %v5489 = vpack.c.b16 %v4796, %v4785
      %v5490 = vpack.c.b16 %v4797, %v4786
      %v5491 = vpack.c.b16 %v4798, %v4787
      %v5492 = vpack.c.b16 %v4799, %v4788
      %v5493 = vpack.c.b16 %v4800, %v4789
      %v5494 = vpack.c.b16 %v4801, %v4790
      %v5495 = vpack.c.b16 %v4802, %v4791
      %v5496 = vpack.c.b16 %v4803, %v4792
      %v5497 = vpack.c.b16 %v4804, %v4793
      %v5498 = vpack.c.b16 %v4816, %v4805
      %v5499 = vpack.c.b16 %v4817, %v4806
      %v5500 = vpack.c.b16 %v4818, %v4807
      %v5501 = vpack.c.b16 %v4819, %v4808
      %v5502 = vpack.c.b16 %v4820, %v4809
      %v5503 = vpack.c.b16 %v4821, %v4810
      %v5504 = vpack.c.b16 %v4822, %v4811
      %v5505 = vpack.c.b16 %v4823, %v4812
      %v5506 = vpack.c.b16 %v4824, %v4813
      %v5507 = vpack.c.b16 %v4825, %v4814
      %v5508 = vpack.c.b16 %v4826, %v4815
      %v5509 = vpack.c.b16 %v4838, %v4827
      %v5510 = vpack.c.b16 %v4839, %v4828
      %v5511 = vpack.c.b16 %v4840, %v4829
      %v5512 = vpack.c.b16 %v4841, %v4830
      %v5513 = vpack.c.b16 %v4842, %v4831
      %v5514 = vpack.c.b16 %v4843, %v4832
      %v5515 = vpack.c.b16 %v4844, %v4833
      %v5516 = vpack.c.b16 %v4845, %v4834
      %v5517 = vpack.c.b16 %v4846, %v4835
      %v5518 = vpack.c.b16 %v4847, %v4836
      %v5519 = vpack.c.b16 %v4848, %v4837
      %v5520 = vpack.c.b16 %v4860, %v4849
      %v5521 = vpack.c.b16 %v4861, %v4850
      %v5522 = vpack.c.b16 %v4862, %v4851
      %v5523 = vpack.c.b16 %v4863, %v4852
      %v5524 = vpack.c.b16 %v4864, %v4853
      %v5525 = vpack.c.b16 %v4865, %v4854
      %v5526 = vpack.c.b16 %v4866, %v4855
      %v5527 = vpack.c.b16 %v4867, %v4856
      %v5528 = vpack.c.b16 %v4868, %v4857
      %v5529 = vpack.c.b16 %v4869, %v4858
      %v5530 = vpack.c.b16 %v4870, %v4859
      %v5531 = vpack.c.b16 %v4882, %v4871
      %v5532 = vpack.c.b16 %v4883, %v4872
      %v5533 = vpack.c.b16 %v4884, %v4873
      %v5534 = vpack.c.b16 %v4885, %v4874
      %v5535 = vpack.c.b16 %v4886, %v4875
      %v5536 = vpack.c.b16 %v4887, %v4876
      %v5537 = vpack.c.b16 %v4888, %v4877
      %v5538 = vpack.c.b16 %v4889, %v4878
      %v5539 = vpack.c.b16 %v4890, %v4879
      %v5540 = vpack.c.b16 %v4891, %v4880
      %v5541 = vpack.c.b16 %v4892, %v4881
      %v5542 = vpack.c.b16 %v4904, %v4893
      %v5543 = vpack.c.b16 %v4905, %v4894
      %v5544 = vpack.c.b16 %v4906, %v4895
      %v5545 = vpack.c.b16 %v4907, %v4896
      %v5546 = vpack.c.b16 %v4908, %v4897
      %v5547 = vpack.c.b16 %v4909, %v4898
      %v5548 = vpack.c.b16 %v4910, %v4899
      %v5549 = vpack.c.b16 %v4911, %v4900
      %v5550 = vpack.c.b16 %v4912, %v4901
      %v5551 = vpack.c.b16 %v4913, %v4902
      %v5552 = vpack.c.b16 %v4914, %v4903
      %v5553 = vpack.c.b16 %v4926, %v4915
      %v5554 = vpack.c.b16 %v4927, %v4916
      %v5555 = vpack.c.b16 %v4928, %v4917
      %v5556 = vpack.c.b16 %v4929, %v4918
      %v5557 = vpack.c.b16 %v4930, %v4919
      %v5558 = vpack.c.b16 %v4931, %v4920
      %v5559 = vpack.c.b16 %v4932, %v4921
      %v5560 = vpack.c.b16 %v4933, %v4922
      %v5561 = vpack.c.b16 %v4934, %v4923
      %v5562 = vpack.c.b16 %v4935, %v4924
      %v5563 = vpack.c.b16 %v4936, %v4925
      %v5564 = vpack.c.b16 %v4948, %v4937
      %v5565 = vpack.c.b16 %v4949, %v4938
      %v5566 = vpack.c.b16 %v4950, %v4939
      %v5567 = vpack.c.b16 %v4951, %v4940
      %v5568 = vpack.c.b16 %v4952, %v4941
      %v5569 = vpack.c.b16 %v4953, %v4942
      %v5570 = vpack.c.b16 %v4954, %v4943
      %v5571 = vpack.c.b16 %v4955, %v4944
      %v5572 = vpack.c.b16 %v4956, %v4945
      %v5573 = vpack.c.b16 %v4957, %v4946
      %v5574 = vpack.c.b16 %v4958, %v4947
      %v5575 = vpack.c.b16 %v4970, %v4959
      %v5576 = vpack.c.b16 %v4971, %v4960
      %v5577 = vpack.c.b16 %v4972, %v4961
      %v5578 = vpack.c.b16 %v4973, %v4962
      %v5579 = vpack.c.b16 %v4974, %v4963
      %v5580 = vpack.c.b16 %v4975, %v4964
      %v5581 = vpack.c.b16 %v4976, %v4965
      %v5582 = vpack.c.b16 %v4977, %v4966
      %v5583 = vpack.c.b16 %v4978, %v4967
      %v5584 = vpack.c.b16 %v4979, %v4968
      %v5585 = vpack.c.b16 %v4980, %v4969
      %v5586 = vpack.c.b16 %v4992, %v4981
      %v5587 = vpack.c.b16 %v4993, %v4982
      %v5588 = vpack.c.b16 %v4994, %v4983
      %v5589 = vpack.c.b16 %v4995, %v4984
      %v5590 = vpack.c.b16 %v4996, %v4985
      %v5591 = vpack.c.b16 %v4997, %v4986
      %v5592 = vpack.c.b16 %v4998, %v4987
      %v5593 = vpack.c.b16 %v4999, %v4988
      %v5594 = vpack.c.b16 %v5000, %v4989
      %v5595 = vpack.c.b16 %v5001, %v4990
      %v5596 = vpack.c.b16 %v5002, %v4991
      %v5597 = vpack.c.b16 %v5014, %v5003
      %v5598 = vpack.c.b16 %v5015, %v5004
      %v5599 = vpack.c.b16 %v5016, %v5005
      %v5600 = vpack.c.b16 %v5017, %v5006
      %v5601 = vpack.c.b16 %v5018, %v5007
      %v5602 = vpack.c.b16 %v5019, %v5008
      %v5603 = vpack.c.b16 %v5020, %v5009
      %v5604 = vpack.c.b16 %v5021, %v5010
      %v5605 = vpack.c.b16 %v5022, %v5011
      %v5606 = vpack.c.b16 %v5023, %v5012
      %v5607 = vpack.c.b16 %v5024, %v5013
      %v5608 = vpack.c.b16 %v5036, %v5025
      %v5609 = vpack.c.b16 %v5037, %v5026
      %v5610 = vpack.c.b16 %v5038, %v5027
      %v5611 = vpack.c.b16 %v5039, %v5028
      %v5612 = vpack.c.b16 %v5040, %v5029
      %v5613 = vpack.c.b16 %v5041, %v5030
      %v5614 = vpack.c.b16 %v5042, %v5031
      %v5615 = vpack.c.b16 %v5043, %v5032
      %v5616 = vpack.c.b16 %v5044, %v5033
      %v5617 = vpack.c.b16 %v5045, %v5034
      %v5618 = vpack.c.b16 %v5046, %v5035
      %v5619 = vpack.c.b16 %v5058, %v5047
      %v5620 = vpack.c.b16 %v5059, %v5048
      %v5621 = vpack.c.b16 %v5060, %v5049
      %v5622 = vpack.c.b16 %v5061, %v5050
      %v5623 = vpack.c.b16 %v5062, %v5051
      %v5624 = vpack.c.b16 %v5063, %v5052
      %v5625 = vpack.c.b16 %v5064, %v5053
      %v5626 = vpack.c.b16 %v5065, %v5054
      %v5627 = vpack.c.b16 %v5066, %v5055
      %v5628 = vpack.c.b16 %v5067, %v5056
      %v5629 = vpack.c.b16 %v5068, %v5057
      %v5630 = vpack.c.b16 %v5080, %v5069
      %v5631 = vpack.c.b16 %v5081, %v5070
      %v5632 = vpack.c.b16 %v5082, %v5071
      %v5633 = vpack.c.b16 %v5083, %v5072
      %v5634 = vpack.c.b16 %v5084, %v5073
      %v5635 = vpack.c.b16 %v5085, %v5074
      %v5636 = vpack.c.b16 %v5086, %v5075
      %v5637 = vpack.c.b16 %v5087, %v5076
      %v5638 = vpack.c.b16 %v5088, %v5077
      %v5639 = vpack.c.b16 %v5089, %v5078
      %v5640 = vpack.c.b16 %v5090, %v5079
      %v5641 = vpack.c.b16 %v5102, %v5091
      %v5642 = vpack.c.b16 %v5103, %v5092
      %v5643 = vpack.c.b16 %v5104, %v5093
      %v5644 = vpack.c.b16 %v5105, %v5094
      %v5645 = vpack.c.b16 %v5106, %v5095
      %v5646 = vpack.c.b16 %v5107, %v5096
      %v5647 = vpack.c.b16 %v5108, %v5097
      %v5648 = vpack.c.b16 %v5109, %v5098
      %v5649 = vpack.c.b16 %v5110, %v5099
      %v5650 = vpack.c.b16 %v5111, %v5100
      %v5651 = vpack.c.b16 %v5112, %v5101
      %v5652 = vpack.c.b16 %v5124, %v5113
      %v5653 = vpack.c.b16 %v5125, %v5114
      %v5654 = vpack.c.b16 %v5126, %v5115
      %v5655 = vpack.c.b16 %v5127, %v5116
      %v5656 = vpack.c.b16 %v5128, %v5117
      %v5657 = vpack.c.b16 %v5129, %v5118
      %v5658 = vpack.c.b16 %v5130, %v5119
      %v5659 = vpack.c.b16 %v5131, %v5120
      %v5660 = vpack.c.b16 %v5132, %v5121
      %v5661 = vpack.c.b16 %v5133, %v5122
      %v5662 = vpack.c.b16 %v5134, %v5123
      %v5663 = vpack.c.b16 %v5146, %v5135
      %v5664 = vpack.c.b16 %v5147, %v5136
      %v5665 = vpack.c.b16 %v5148, %v5137
      %v5666 = vpack.c.b16 %v5149, %v5138
      %v5667 = vpack.c.b16 %v5150, %v5139
      %v5668 = vpack.c.b16 %v5151, %v5140
      %v5669 = vpack.c.b16 %v5152, %v5141
      %v5670 = vpack.c.b16 %v5153, %v5142
      %v5671 = vpack.c.b16 %v5154, %v5143
      %v5672 = vpack.c.b16 %v5155, %v5144
      %v5673 = vpack.c.b16 %v5156, %v5145
      %v5674 = vpack.c.b16 %v5168, %v5157
      %v5675 = vpack.c.b16 %v5169, %v5158
      %v5676 = vpack.c.b16 %v5170, %v5159
      %v5677 = vpack.c.b16 %v5171, %v5160
      %v5678 = vpack.c.b16 %v5172, %v5161
      %v5679 = vpack.c.b16 %v5173, %v5162
      %v5680 = vpack.c.b16 %v5174, %v5163
      %v5681 = vpack.c.b16 %v5175, %v5164
      %v5682 = vpack.c.b16 %v5176, %v5165
      %v5683 = vpack.c.b16 %v5177, %v5166
      %v5684 = vpack.c.b16 %v5178, %v5167
      %v5685 = vpack.c.b16 %v5190, %v5179
      %v5686 = vpack.c.b16 %v5191, %v5180
      %v5687 = vpack.c.b16 %v5192, %v5181
      %v5688 = vpack.c.b16 %v5193, %v5182
      %v5689 = vpack.c.b16 %v5194, %v5183
      %v5690 = vpack.c.b16 %v5195, %v5184
      %v5691 = vpack.c.b16 %v5196, %v5185
      %v5692 = vpack.c.b16 %v5197, %v5186
      %v5693 = vpack.c.b16 %v5198, %v5187
      %v5694 = vpack.c.b16 %v5199, %v5188
      %v5695 = vpack.c.b16 %v5200, %v5189
      %v5696 = vpack.c.b16 %v5212, %v5201
      %v5697 = vpack.c.b16 %v5213, %v5202
      %v5698 = vpack.c.b16 %v5214, %v5203
      %v5699 = vpack.c.b16 %v5215, %v5204
      %v5700 = vpack.c.b16 %v5216, %v5205
      %v5701 = vpack.c.b16 %v5217, %v5206
      %v5702 = vpack.c.b16 %v5218, %v5207
      %v5703 = vpack.c.b16 %v5219, %v5208
      %v5704 = vpack.c.b16 %v5220, %v5209
      %v5705 = vpack.c.b16 %v5221, %v5210
      %v5706 = vpack.c.b16 %v5222, %v5211
      %v5707 = vpack.c.b16 %v5234, %v5223
      %v5708 = vpack.c.b16 %v5235, %v5224
      %v5709 = vpack.c.b16 %v5236, %v5225
      %v5710 = vpack.c.b16 %v5237, %v5226
      %v5711 = vpack.c.b16 %v5238, %v5227
      %v5712 = vpack.c.b16 %v5239, %v5228
      %v5713 = vpack.c.b16 %v5240, %v5229
      %v5714 = vpack.c.b16 %v5241, %v5230
      %v5715 = vpack.c.b16 %v5242, %v5231
      %v5716 = vpack.c.b16 %v5243, %v5232
      %v5717 = vpack.c.b16 %v5244, %v5233
      %v5718 = vpack.c.b16 %v5256, %v5245
      %v5719 = vpack.c.b16 %v5257, %v5246
      %v5720 = vpack.c.b16 %v5258, %v5247
      %v5721 = vpack.c.b16 %v5259, %v5248
      %v5722 = vpack.c.b16 %v5260, %v5249
      %v5723 = vpack.c.b16 %v5261, %v5250
      %v5724 = vpack.c.b16 %v5262, %v5251
      %v5725 = vpack.c.b16 %v5263, %v5252
      %v5726 = vpack.c.b16 %v5264, %v5253
      %v5727 = vpack.c.b16 %v5265, %v5254
      %v5728 = vpack.c.b16 %v5266, %v5255
      %v5729 = vpack.c.b16 %v5278, %v5267
      %v5730 = vpack.c.b16 %v5279, %v5268
      %v5731 = vpack.c.b16 %v5280, %v5269
      %v5732 = vpack.c.b16 %v5281, %v5270
      %v5733 = vpack.c.b16 %v5282, %v5271
      %v5734 = vpack.c.b16 %v5283, %v5272
      %v5735 = vpack.c.b16 %v5284, %v5273
      %v5736 = vpack.c.b16 %v5285, %v5274
      %v5737 = vpack.c.b16 %v5286, %v5275
      %v5738 = vpack.c.b16 %v5287, %v5276
      %v5739 = vpack.c.b16 %v5288, %v5277
      %v5740 = vpack.c.b16 %v5300, %v5289
      %v5741 = vpack.c.b16 %v5301, %v5290
      %v5742 = vpack.c.b16 %v5302, %v5291
      %v5743 = vpack.c.b16 %v5303, %v5292
      %v5744 = vpack.c.b16 %v5304, %v5293
      %v5745 = vpack.c.b16 %v5305, %v5294
      %v5746 = vpack.c.b16 %v5306, %v5295
      %v5747 = vpack.c.b16 %v5307, %v5296
      %v5748 = vpack.c.b16 %v5308, %v5297
      %v5749 = vpack.c.b16 %v5309, %v5298
      %v5750 = vpack.c.b16 %v5310, %v5299
      %v5751 = vpack.c.b16 %v5322, %v5311
      %v5752 = vpack.c.b16 %v5323, %v5312
      %v5753 = vpack.c.b16 %v5324, %v5313
      %v5754 = vpack.c.b16 %v5325, %v5314
      %v5755 = vpack.c.b16 %v5326, %v5315
      %v5756 = vpack.c.b16 %v5327, %v5316
      %v5757 = vpack.c.b16 %v5328, %v5317
      %v5758 = vpack.c.b16 %v5329, %v5318
      %v5759 = vpack.c.b16 %v5330, %v5319
      %v5760 = vpack.c.b16 %v5331, %v5320
      %v5761 = vpack.c.b16 %v5332, %v5321
      %v5762 = vpack.c.b16 %v5344, %v5333
      %v5763 = vpack.c.b16 %v5345, %v5334
      %v5764 = vpack.c.b16 %v5346, %v5335
      %v5765 = vpack.c.b16 %v5347, %v5336
      %v5766 = vpack.c.b16 %v5348, %v5337
      %v5767 = vpack.c.b16 %v5349, %v5338
      %v5768 = vpack.c.b16 %v5350, %v5339
      %v5769 = vpack.c.b16 %v5351, %v5340
      %v5770 = vpack.c.b16 %v5352, %v5341
      %v5771 = vpack.c.b16 %v5353, %v5342
      %v5772 = vpack.c.b16 %v5354, %v5343
      %v5773 = vpack.c.b16 %v5366, %v5355
      %v5774 = vpack.c.b16 %v5367, %v5356
      %v5775 = vpack.c.b16 %v5368, %v5357
      %v5776 = vpack.c.b16 %v5369, %v5358
      %v5777 = vpack.c.b16 %v5370, %v5359
      %v5778 = vpack.c.b16 %v5371, %v5360
      %v5779 = vpack.c.b16 %v5372, %v5361
      %v5780 = vpack.c.b16 %v5373, %v5362
      %v5781 = vpack.c.b16 %v5374, %v5363
      %v5782 = vpack.c.b16 %v5375, %v5364
      %v5783 = vpack.c.b16 %v5376, %v5365
      %v5784 = vpack.c.b16 %v5388, %v5377
      %v5785 = vpack.c.b16 %v5389, %v5378
      %v5786 = vpack.c.b16 %v5390, %v5379
      %v5787 = vpack.c.b16 %v5391, %v5380
      %v5788 = vpack.c.b16 %v5392, %v5381
      %v5789 = vpack.c.b16 %v5393, %v5382
      %v5790 = vpack.c.b16 %v5394, %v5383
      %v5791 = vpack.c.b16 %v5395, %v5384
      %v5792 = vpack.c.b16 %v5396, %v5385
      %v5793 = vpack.c.b16 %v5397, %v5386
      %v5794 = vpack.c.b16 %v5398, %v5387
      %v5795 = vpack.c.b16 %v5410, %v5399
      %v5796 = vpack.c.b16 %v5411, %v5400
      %v5797 = vpack.c.b16 %v5412, %v5401
      %v5798 = vpack.c.b16 %v5413, %v5402
      %v5799 = vpack.c.b16 %v5414, %v5403
      %v5800 = vpack.c.b16 %v5415, %v5404
      %v5801 = vpack.c.b16 %v5416, %v5405
      %v5802 = vpack.c.b16 %v5417, %v5406
      %v5803 = vpack.c.b16 %v5418, %v5407
      %v5804 = vpack.c.b16 %v5419, %v5408
      %v5805 = vpack.c.b16 %v5420, %v5409
      %v5806 = vpack.c.b16 %v5432, %v5421
      %v5807 = vpack.c.b16 %v5433, %v5422
      %v5808 = vpack.c.b16 %v5434, %v5423
      %v5809 = vpack.c.b16 %v5435, %v5424
      %v5810 = vpack.c.b16 %v5436, %v5425
      %v5811 = vpack.c.b16 %v5437, %v5426
      %v5812 = vpack.c.b16 %v5438, %v5427
      %v5813 = vpack.c.b16 %v5439, %v5428
      %v5814 = vpack.c.b16 %v5440, %v5429
      %v5815 = vpack.c.b16 %v5441, %v5430
      %v5816 = vpack.c.b16 %v5442, %v5431
      %v5817 = vpack.c.b16 %v5454, %v5443
      %v5818 = vpack.c.b16 %v5455, %v5444
      %v5819 = vpack.c.b16 %v5456, %v5445
      %v5820 = vpack.c.b16 %v5457, %v5446
      %v5821 = vpack.c.b16 %v5458, %v5447
      %v5822 = vpack.c.b16 %v5459, %v5448
      %v5823 = vpack.c.b16 %v5460, %v5449
      %v5824 = vpack.c.b16 %v5461, %v5450
      %v5825 = vpack.c.b16 %v5462, %v5451
      %v5826 = vpack.c.b16 %v5463, %v5452
      %v5827 = vpack.c.b16 %v5464, %v5453
      %v5828 = vpack.c.b16 %v5476, %v5465
      %v5829 = vpack.c.b16 %v5477, %v5466
      %v5830 = vpack.c.b16 %v5478, %v5467
      %v5831 = vpack.c.b16 %v5479, %v5468
      %v5832 = vpack.c.b16 %v5480, %v5469
      %v5833 = vpack.c.b16 %v5481, %v5470
      %v5834 = vpack.c.b16 %v5482, %v5471
      %v5835 = vpack.c.b16 %v5483, %v5472
      %v5836 = vpack.c.b16 %v5484, %v5473
      %v5837 = vpack.c.b16 %v5485, %v5474
      %v5838 = vpack.c.b16 %v5486, %v5475
      %6191 = vmatpush.bf16.msra.mxu0 %v5564
      %6192 = vmatpush.bf16.msra.mxu0 %v5553
      %6193 = vmatpush.bf16.msra.mxu0 %v5542
      %6194 = vmatpush.bf16.msra.mxu0 %v5531
      %6195 = vmatpush.bf16.msra.mxu0 %v5520
      %6196 = vmatpush.bf16.msra.mxu0 %v5509
      %6197 = vmatpush.bf16.msra.mxu0 %v5498
      %6198 = vmatpush.bf16.msra.mxu0 %v5487
      %6199 = vmatmul.bf16.gmra.mxu0 %v3981
      %v6200 = vpop.f32.mrf.mxu0
      %v6201 = vadd.f32 %v4377, %v6200
      %v6202 = vpop.f32.mrf.mxu0
      %v6203 = vadd.f32 %v4377, %v6202
      %6204 = vmatmul.bf16.gmra.mxu0 %v3985
      %v6205 = vpop.f32.mrf.mxu0
      %v6206 = vadd.f32 %v4377, %v6205
      %v6207 = vpop.f32.mrf.mxu0
      %v6208 = vadd.f32 %v4377, %v6207
      %6209 = vdwg.mxu0
      %6210 = vmatpush.bf16.msra.mxu0 %v5652
      %6211 = vmatpush.bf16.msra.mxu0 %v5641
      %6212 = vmatpush.bf16.msra.mxu0 %v5630
      %6213 = vmatpush.bf16.msra.mxu0 %v5619
      %6214 = vmatpush.bf16.msra.mxu0 %v5608
      %6215 = vmatpush.bf16.msra.mxu0 %v5597
      %6216 = vmatpush.bf16.msra.mxu0 %v5586
      %6217 = vmatpush.bf16.msra.mxu0 %v5575
      %6218 = vmatmul.bf16.gmra.mxu0 %v3982
      %v6219 = vpop.f32.mrf.mxu0
      %v6220 = vadd.f32 %v6201, %v6219
      %v6221 = vpop.f32.mrf.mxu0
      %v6222 = vadd.f32 %v6203, %v6221
      %6223 = vmatmul.bf16.gmra.mxu0 %v3986
      %v6224 = vpop.f32.mrf.mxu0
      %v6225 = vadd.f32 %v6206, %v6224
      %v6226 = vpop.f32.mrf.mxu0
      %v6227 = vadd.f32 %v6208, %v6226
      %6228 = vdwg.mxu0
      %6229 = vmatpush.bf16.msra.mxu0 %v5740
      %6230 = vmatpush.bf16.msra.mxu0 %v5729
      %6231 = vmatpush.bf16.msra.mxu0 %v5718
      %6232 = vmatpush.bf16.msra.mxu0 %v5707
      %6233 = vmatpush.bf16.msra.mxu0 %v5696
      %6234 = vmatpush.bf16.msra.mxu0 %v5685
      %6235 = vmatpush.bf16.msra.mxu0 %v5674
      %6236 = vmatpush.bf16.msra.mxu0 %v5663
      %6237 = vmatmul.bf16.gmra.mxu0 %v3983
      %v6238 = vpop.f32.mrf.mxu0
      %v6239 = vadd.f32 %v6220, %v6238
      %v6240 = vpop.f32.mrf.mxu0
      %v6241 = vadd.f32 %v6222, %v6240
      %6242 = vmatmul.bf16.gmra.mxu0 %v3987
      %v6243 = vpop.f32.mrf.mxu0
      %v6244 = vadd.f32 %v6225, %v6243
      %v6245 = vpop.f32.mrf.mxu0
      %v6246 = vadd.f32 %v6227, %v6245
      %6247 = vdwg.mxu0
      %6248 = vmatpush.bf16.msra.mxu0 %v5828
      %6249 = vmatpush.bf16.msra.mxu0 %v5817
      %6250 = vmatpush.bf16.msra.mxu0 %v5806
      %6251 = vmatpush.bf16.msra.mxu0 %v5795
      %6252 = vmatpush.bf16.msra.mxu0 %v5784
      %6253 = vmatpush.bf16.msra.mxu0 %v5773
      %6254 = vmatpush.bf16.msra.mxu0 %v5762
      %6255 = vmatpush.bf16.msra.mxu0 %v5751
      %6256 = vmatmul.bf16.gmra.mxu0 %v3984
      %v6257 = vpop.f32.mrf.mxu0
      %v6258 = vadd.f32 %v6239, %v6257
      %v6259 = vpop.f32.mrf.mxu0
      %v6260 = vadd.f32 %v6241, %v6259
      %6261 = vmatmul.bf16.gmra.mxu0 %v3988
      %v6262 = vpop.f32.mrf.mxu0
      %v6263 = vadd.f32 %v6244, %v6262
      %v6264 = vpop.f32.mrf.mxu0
      %v6265 = vadd.f32 %v6246, %v6264
      %6266 = vdwg.mxu0
      %6267 = vmatpush.bf16.msra.mxu0 %v5565
      %6268 = vmatpush.bf16.msra.mxu0 %v5554
      %6269 = vmatpush.bf16.msra.mxu0 %v5543
      %6270 = vmatpush.bf16.msra.mxu0 %v5532
      %6271 = vmatpush.bf16.msra.mxu0 %v5521
      %6272 = vmatpush.bf16.msra.mxu0 %v5510
      %6273 = vmatpush.bf16.msra.mxu0 %v5499
      %6274 = vmatpush.bf16.msra.mxu0 %v5488
      %6275 = vmatmul.bf16.gmra.mxu0 %v3981
      %v6276 = vpop.f32.mrf.mxu0
      %v6277 = vadd.f32 %v4378, %v6276
      %v6278 = vpop.f32.mrf.mxu0
      %v6279 = vadd.f32 %v4378, %v6278
      %6280 = vmatmul.bf16.gmra.mxu0 %v3985
      %v6281 = vpop.f32.mrf.mxu0
      %v6282 = vadd.f32 %v4378, %v6281
      %v6283 = vpop.f32.mrf.mxu0
      %v6284 = vadd.f32 %v4378, %v6283
      %6285 = vdwg.mxu0
      %6286 = vmatpush.bf16.msra.mxu0 %v5653
      %6287 = vmatpush.bf16.msra.mxu0 %v5642
      %6288 = vmatpush.bf16.msra.mxu0 %v5631
      %6289 = vmatpush.bf16.msra.mxu0 %v5620
      %6290 = vmatpush.bf16.msra.mxu0 %v5609
      %6291 = vmatpush.bf16.msra.mxu0 %v5598
      %6292 = vmatpush.bf16.msra.mxu0 %v5587
      %6293 = vmatpush.bf16.msra.mxu0 %v5576
      %6294 = vmatmul.bf16.gmra.mxu0 %v3982
      %v6295 = vpop.f32.mrf.mxu0
      %v6296 = vadd.f32 %v6277, %v6295
      %v6297 = vpop.f32.mrf.mxu0
      %v6298 = vadd.f32 %v6279, %v6297
      %6299 = vmatmul.bf16.gmra.mxu0 %v3986
      %v6300 = vpop.f32.mrf.mxu0
      %v6301 = vadd.f32 %v6282, %v6300
      %v6302 = vpop.f32.mrf.mxu0
      %v6303 = vadd.f32 %v6284, %v6302
      %6304 = vdwg.mxu0
      %6305 = vmatpush.bf16.msra.mxu0 %v5741
      %6306 = vmatpush.bf16.msra.mxu0 %v5730
      %6307 = vmatpush.bf16.msra.mxu0 %v5719
      %6308 = vmatpush.bf16.msra.mxu0 %v5708
      %6309 = vmatpush.bf16.msra.mxu0 %v5697
      %6310 = vmatpush.bf16.msra.mxu0 %v5686
      %6311 = vmatpush.bf16.msra.mxu0 %v5675
      %6312 = vmatpush.bf16.msra.mxu0 %v5664
      %6313 = vmatmul.bf16.gmra.mxu0 %v3983
      %v6314 = vpop.f32.mrf.mxu0
      %v6315 = vadd.f32 %v6296, %v6314
      %v6316 = vpop.f32.mrf.mxu0
      %v6317 = vadd.f32 %v6298, %v6316
      %6318 = vmatmul.bf16.gmra.mxu0 %v3987
      %v6319 = vpop.f32.mrf.mxu0
      %v6320 = vadd.f32 %v6301, %v6319
      %v6321 = vpop.f32.mrf.mxu0
      %v6322 = vadd.f32 %v6303, %v6321
      %6323 = vdwg.mxu0
      %6324 = vmatpush.bf16.msra.mxu0 %v5829
      %6325 = vmatpush.bf16.msra.mxu0 %v5818
      %6326 = vmatpush.bf16.msra.mxu0 %v5807
      %6327 = vmatpush.bf16.msra.mxu0 %v5796
      %6328 = vmatpush.bf16.msra.mxu0 %v5785
      %6329 = vmatpush.bf16.msra.mxu0 %v5774
      %6330 = vmatpush.bf16.msra.mxu0 %v5763
      %6331 = vmatpush.bf16.msra.mxu0 %v5752
      %6332 = vmatmul.bf16.gmra.mxu0 %v3984
      %v6333 = vpop.f32.mrf.mxu0
      %v6334 = vadd.f32 %v6315, %v6333
      %v6335 = vpop.f32.mrf.mxu0
      %v6336 = vadd.f32 %v6317, %v6335
      %6337 = vmatmul.bf16.gmra.mxu0 %v3988
      %v6338 = vpop.f32.mrf.mxu0
      %v6339 = vadd.f32 %v6320, %v6338
      %v6340 = vpop.f32.mrf.mxu0
      %v6341 = vadd.f32 %v6322, %v6340
      %6342 = vdwg.mxu0
      %6343 = vmatpush.bf16.msra.mxu0 %v5566
      %6344 = vmatpush.bf16.msra.mxu0 %v5555
      %6345 = vmatpush.bf16.msra.mxu0 %v5544
      %6346 = vmatpush.bf16.msra.mxu0 %v5533
      %6347 = vmatpush.bf16.msra.mxu0 %v5522
      %6348 = vmatpush.bf16.msra.mxu0 %v5511
      %6349 = vmatpush.bf16.msra.mxu0 %v5500
      %6350 = vmatpush.bf16.msra.mxu0 %v5489
      %6351 = vmatmul.bf16.gmra.mxu0 %v3981
      %v6352 = vpop.f32.mrf.mxu0
      %v6353 = vadd.f32 %v4379, %v6352
      %v6354 = vpop.f32.mrf.mxu0
      %v6355 = vadd.f32 %v4379, %v6354
      %6356 = vmatmul.bf16.gmra.mxu0 %v3985
      %v6357 = vpop.f32.mrf.mxu0
      %v6358 = vadd.f32 %v4379, %v6357
      %v6359 = vpop.f32.mrf.mxu0
      %v6360 = vadd.f32 %v4379, %v6359
      %6361 = vdwg.mxu0
      %6362 = vmatpush.bf16.msra.mxu0 %v5654
      %6363 = vmatpush.bf16.msra.mxu0 %v5643
      %6364 = vmatpush.bf16.msra.mxu0 %v5632
      %6365 = vmatpush.bf16.msra.mxu0 %v5621
      %6366 = vmatpush.bf16.msra.mxu0 %v5610
      %6367 = vmatpush.bf16.msra.mxu0 %v5599
      %6368 = vmatpush.bf16.msra.mxu0 %v5588
      %6369 = vmatpush.bf16.msra.mxu0 %v5577
      %6370 = vmatmul.bf16.gmra.mxu0 %v3982
      %v6371 = vpop.f32.mrf.mxu0
      %v6372 = vadd.f32 %v6353, %v6371
      %v6373 = vpop.f32.mrf.mxu0
      %v6374 = vadd.f32 %v6355, %v6373
      %6375 = vmatmul.bf16.gmra.mxu0 %v3986
      %v6376 = vpop.f32.mrf.mxu0
      %v6377 = vadd.f32 %v6358, %v6376
      %v6378 = vpop.f32.mrf.mxu0
      %v6379 = vadd.f32 %v6360, %v6378
      %6380 = vdwg.mxu0
      %6381 = vmatpush.bf16.msra.mxu0 %v5742
      %6382 = vmatpush.bf16.msra.mxu0 %v5731
      %6383 = vmatpush.bf16.msra.mxu0 %v5720
      %6384 = vmatpush.bf16.msra.mxu0 %v5709
      %6385 = vmatpush.bf16.msra.mxu0 %v5698
      %6386 = vmatpush.bf16.msra.mxu0 %v5687
      %6387 = vmatpush.bf16.msra.mxu0 %v5676
      %6388 = vmatpush.bf16.msra.mxu0 %v5665
      %6389 = vmatmul.bf16.gmra.mxu0 %v3983
      %v6390 = vpop.f32.mrf.mxu0
      %v6391 = vadd.f32 %v6372, %v6390
      %v6392 = vpop.f32.mrf.mxu0
      %v6393 = vadd.f32 %v6374, %v6392
      %6394 = vmatmul.bf16.gmra.mxu0 %v3987
      %v6395 = vpop.f32.mrf.mxu0
      %v6396 = vadd.f32 %v6377, %v6395
      %v6397 = vpop.f32.mrf.mxu0
      %v6398 = vadd.f32 %v6379, %v6397
      %6399 = vdwg.mxu0
      %6400 = vmatpush.bf16.msra.mxu0 %v5830
      %6401 = vmatpush.bf16.msra.mxu0 %v5819
      %6402 = vmatpush.bf16.msra.mxu0 %v5808
      %6403 = vmatpush.bf16.msra.mxu0 %v5797
      %6404 = vmatpush.bf16.msra.mxu0 %v5786
      %6405 = vmatpush.bf16.msra.mxu0 %v5775
      %6406 = vmatpush.bf16.msra.mxu0 %v5764
      %6407 = vmatpush.bf16.msra.mxu0 %v5753
      %6408 = vmatmul.bf16.gmra.mxu0 %v3984
      %v6409 = vpop.f32.mrf.mxu0
      %v6410 = vadd.f32 %v6391, %v6409
      %v6411 = vpop.f32.mrf.mxu0
      %v6412 = vadd.f32 %v6393, %v6411
      %6413 = vmatmul.bf16.gmra.mxu0 %v3988
      %v6414 = vpop.f32.mrf.mxu0
      %v6415 = vadd.f32 %v6396, %v6414
      %v6416 = vpop.f32.mrf.mxu0
      %v6417 = vadd.f32 %v6398, %v6416
      %6418 = vdwg.mxu0
      %6419 = vmatpush.bf16.msra.mxu0 %v5567
      %6420 = vmatpush.bf16.msra.mxu0 %v5556
      %6421 = vmatpush.bf16.msra.mxu0 %v5545
      %6422 = vmatpush.bf16.msra.mxu0 %v5534
      %6423 = vmatpush.bf16.msra.mxu0 %v5523
      %6424 = vmatpush.bf16.msra.mxu0 %v5512
      %6425 = vmatpush.bf16.msra.mxu0 %v5501
      %6426 = vmatpush.bf16.msra.mxu0 %v5490
      %6427 = vmatmul.bf16.gmra.mxu0 %v3981
      %v6428 = vpop.f32.mrf.mxu0
      %v6429 = vadd.f32 %v4380, %v6428
      %v6430 = vpop.f32.mrf.mxu0
      %v6431 = vadd.f32 %v4380, %v6430
      %6432 = vmatmul.bf16.gmra.mxu0 %v3985
      %v6433 = vpop.f32.mrf.mxu0
      %v6434 = vadd.f32 %v4380, %v6433
      %v6435 = vpop.f32.mrf.mxu0
      %v6436 = vadd.f32 %v4380, %v6435
      %6437 = vdwg.mxu0
      %6438 = vmatpush.bf16.msra.mxu0 %v5655
      %6439 = vmatpush.bf16.msra.mxu0 %v5644
      %6440 = vmatpush.bf16.msra.mxu0 %v5633
      %6441 = vmatpush.bf16.msra.mxu0 %v5622
      %6442 = vmatpush.bf16.msra.mxu0 %v5611
      %6443 = vmatpush.bf16.msra.mxu0 %v5600
      %6444 = vmatpush.bf16.msra.mxu0 %v5589
      %6445 = vmatpush.bf16.msra.mxu0 %v5578
      %6446 = vmatmul.bf16.gmra.mxu0 %v3982
      %v6447 = vpop.f32.mrf.mxu0
      %v6448 = vadd.f32 %v6429, %v6447
      %v6449 = vpop.f32.mrf.mxu0
      %v6450 = vadd.f32 %v6431, %v6449
      %6451 = vmatmul.bf16.gmra.mxu0 %v3986
      %v6452 = vpop.f32.mrf.mxu0
      %v6453 = vadd.f32 %v6434, %v6452
      %v6454 = vpop.f32.mrf.mxu0
      %v6455 = vadd.f32 %v6436, %v6454
      %6456 = vdwg.mxu0
      %6457 = vmatpush.bf16.msra.mxu0 %v5743
      %6458 = vmatpush.bf16.msra.mxu0 %v5732
      %6459 = vmatpush.bf16.msra.mxu0 %v5721
      %6460 = vmatpush.bf16.msra.mxu0 %v5710
      %6461 = vmatpush.bf16.msra.mxu0 %v5699
      %6462 = vmatpush.bf16.msra.mxu0 %v5688
      %6463 = vmatpush.bf16.msra.mxu0 %v5677
      %6464 = vmatpush.bf16.msra.mxu0 %v5666
      %6465 = vmatmul.bf16.gmra.mxu0 %v3983
      %v6466 = vpop.f32.mrf.mxu0
      %v6467 = vadd.f32 %v6448, %v6466
      %v6468 = vpop.f32.mrf.mxu0
      %v6469 = vadd.f32 %v6450, %v6468
      %6470 = vmatmul.bf16.gmra.mxu0 %v3987
      %v6471 = vpop.f32.mrf.mxu0
      %v6472 = vadd.f32 %v6453, %v6471
      %v6473 = vpop.f32.mrf.mxu0
      %v6474 = vadd.f32 %v6455, %v6473
      %6475 = vdwg.mxu0
      %6476 = vmatpush.bf16.msra.mxu0 %v5831
      %6477 = vmatpush.bf16.msra.mxu0 %v5820
      %6478 = vmatpush.bf16.msra.mxu0 %v5809
      %6479 = vmatpush.bf16.msra.mxu0 %v5798
      %6480 = vmatpush.bf16.msra.mxu0 %v5787
      %6481 = vmatpush.bf16.msra.mxu0 %v5776
      %6482 = vmatpush.bf16.msra.mxu0 %v5765
      %6483 = vmatpush.bf16.msra.mxu0 %v5754
      %6484 = vmatmul.bf16.gmra.mxu0 %v3984
      %v6485 = vpop.f32.mrf.mxu0
      %v6486 = vadd.f32 %v6467, %v6485
      %v6487 = vpop.f32.mrf.mxu0
      %v6488 = vadd.f32 %v6469, %v6487
      %6489 = vmatmul.bf16.gmra.mxu0 %v3988
      %v6490 = vpop.f32.mrf.mxu0
      %v6491 = vadd.f32 %v6472, %v6490
      %v6492 = vpop.f32.mrf.mxu0
      %v6493 = vadd.f32 %v6474, %v6492
      %6494 = vdwg.mxu0
      %6495 = vmatpush.bf16.msra.mxu0 %v5568
      %6496 = vmatpush.bf16.msra.mxu0 %v5557
      %6497 = vmatpush.bf16.msra.mxu0 %v5546
      %6498 = vmatpush.bf16.msra.mxu0 %v5535
      %6499 = vmatpush.bf16.msra.mxu0 %v5524
      %6500 = vmatpush.bf16.msra.mxu0 %v5513
      %6501 = vmatpush.bf16.msra.mxu0 %v5502
      %6502 = vmatpush.bf16.msra.mxu0 %v5491
      %6503 = vmatmul.bf16.gmra.mxu0 %v3981
      %v6504 = vpop.f32.mrf.mxu0
      %v6505 = vadd.f32 %v4381, %v6504
      %v6506 = vpop.f32.mrf.mxu0
      %v6507 = vadd.f32 %v4381, %v6506
      %6508 = vmatmul.bf16.gmra.mxu0 %v3985
      %v6509 = vpop.f32.mrf.mxu0
      %v6510 = vadd.f32 %v4381, %v6509
      %v6511 = vpop.f32.mrf.mxu0
      %v6512 = vadd.f32 %v4381, %v6511
      %6513 = vdwg.mxu0
      %6514 = vmatpush.bf16.msra.mxu0 %v5656
      %6515 = vmatpush.bf16.msra.mxu0 %v5645
      %6516 = vmatpush.bf16.msra.mxu0 %v5634
      %6517 = vmatpush.bf16.msra.mxu0 %v5623
      %6518 = vmatpush.bf16.msra.mxu0 %v5612
      %6519 = vmatpush.bf16.msra.mxu0 %v5601
      %6520 = vmatpush.bf16.msra.mxu0 %v5590
      %6521 = vmatpush.bf16.msra.mxu0 %v5579
      %6522 = vmatmul.bf16.gmra.mxu0 %v3982
      %v6523 = vpop.f32.mrf.mxu0
      %v6524 = vadd.f32 %v6505, %v6523
      %v6525 = vpop.f32.mrf.mxu0
      %v6526 = vadd.f32 %v6507, %v6525
      %6527 = vmatmul.bf16.gmra.mxu0 %v3986
      %v6528 = vpop.f32.mrf.mxu0
      %v6529 = vadd.f32 %v6510, %v6528
      %v6530 = vpop.f32.mrf.mxu0
      %v6531 = vadd.f32 %v6512, %v6530
      %6532 = vdwg.mxu0
      %6533 = vmatpush.bf16.msra.mxu0 %v5744
      %6534 = vmatpush.bf16.msra.mxu0 %v5733
      %6535 = vmatpush.bf16.msra.mxu0 %v5722
      %6536 = vmatpush.bf16.msra.mxu0 %v5711
      %6537 = vmatpush.bf16.msra.mxu0 %v5700
      %6538 = vmatpush.bf16.msra.mxu0 %v5689
      %6539 = vmatpush.bf16.msra.mxu0 %v5678
      %6540 = vmatpush.bf16.msra.mxu0 %v5667
      %6541 = vmatmul.bf16.gmra.mxu0 %v3983
      %v6542 = vpop.f32.mrf.mxu0
      %v6543 = vadd.f32 %v6524, %v6542
      %v6544 = vpop.f32.mrf.mxu0
      %v6545 = vadd.f32 %v6526, %v6544
      %6546 = vmatmul.bf16.gmra.mxu0 %v3987
      %v6547 = vpop.f32.mrf.mxu0
      %v6548 = vadd.f32 %v6529, %v6547
      %v6549 = vpop.f32.mrf.mxu0
      %v6550 = vadd.f32 %v6531, %v6549
      %6551 = vdwg.mxu0
      %6552 = vmatpush.bf16.msra.mxu0 %v5832
      %6553 = vmatpush.bf16.msra.mxu0 %v5821
      %6554 = vmatpush.bf16.msra.mxu0 %v5810
      %6555 = vmatpush.bf16.msra.mxu0 %v5799
      %6556 = vmatpush.bf16.msra.mxu0 %v5788
      %6557 = vmatpush.bf16.msra.mxu0 %v5777
      %6558 = vmatpush.bf16.msra.mxu0 %v5766
      %6559 = vmatpush.bf16.msra.mxu0 %v5755
      %6560 = vmatmul.bf16.gmra.mxu0 %v3984
      %v6561 = vpop.f32.mrf.mxu0
      %v6562 = vadd.f32 %v6543, %v6561
      %v6563 = vpop.f32.mrf.mxu0
      %v6564 = vadd.f32 %v6545, %v6563
      %6565 = vmatmul.bf16.gmra.mxu0 %v3988
      %v6566 = vpop.f32.mrf.mxu0
      %v6567 = vadd.f32 %v6548, %v6566
      %v6568 = vpop.f32.mrf.mxu0
      %v6569 = vadd.f32 %v6550, %v6568
      %6570 = vdwg.mxu0
      %6571 = vmatpush.bf16.msra.mxu0 %v5569
      %6572 = vmatpush.bf16.msra.mxu0 %v5558
      %6573 = vmatpush.bf16.msra.mxu0 %v5547
      %6574 = vmatpush.bf16.msra.mxu0 %v5536
      %6575 = vmatpush.bf16.msra.mxu0 %v5525
      %6576 = vmatpush.bf16.msra.mxu0 %v5514
      %6577 = vmatpush.bf16.msra.mxu0 %v5503
      %6578 = vmatpush.bf16.msra.mxu0 %v5492
      %6579 = vmatmul.bf16.gmra.mxu0 %v3981
      %v6580 = vpop.f32.mrf.mxu0
      %v6581 = vadd.f32 %v4382, %v6580
      %v6582 = vpop.f32.mrf.mxu0
      %v6583 = vadd.f32 %v4382, %v6582
      %6584 = vmatmul.bf16.gmra.mxu0 %v3985
      %v6585 = vpop.f32.mrf.mxu0
      %v6586 = vadd.f32 %v4382, %v6585
      %v6587 = vpop.f32.mrf.mxu0
      %v6588 = vadd.f32 %v4382, %v6587
      %6589 = vdwg.mxu0
      %6590 = vmatpush.bf16.msra.mxu0 %v5657
      %6591 = vmatpush.bf16.msra.mxu0 %v5646
      %6592 = vmatpush.bf16.msra.mxu0 %v5635
      %6593 = vmatpush.bf16.msra.mxu0 %v5624
      %6594 = vmatpush.bf16.msra.mxu0 %v5613
      %6595 = vmatpush.bf16.msra.mxu0 %v5602
      %6596 = vmatpush.bf16.msra.mxu0 %v5591
      %6597 = vmatpush.bf16.msra.mxu0 %v5580
      %6598 = vmatmul.bf16.gmra.mxu0 %v3982
      %v6599 = vpop.f32.mrf.mxu0
      %v6600 = vadd.f32 %v6581, %v6599
      %v6601 = vpop.f32.mrf.mxu0
      %v6602 = vadd.f32 %v6583, %v6601
      %6603 = vmatmul.bf16.gmra.mxu0 %v3986
      %v6604 = vpop.f32.mrf.mxu0
      %v6605 = vadd.f32 %v6586, %v6604
      %v6606 = vpop.f32.mrf.mxu0
      %v6607 = vadd.f32 %v6588, %v6606
      %6608 = vdwg.mxu0
      %6609 = vmatpush.bf16.msra.mxu0 %v5745
      %6610 = vmatpush.bf16.msra.mxu0 %v5734
      %6611 = vmatpush.bf16.msra.mxu0 %v5723
      %6612 = vmatpush.bf16.msra.mxu0 %v5712
      %6613 = vmatpush.bf16.msra.mxu0 %v5701
      %6614 = vmatpush.bf16.msra.mxu0 %v5690
      %6615 = vmatpush.bf16.msra.mxu0 %v5679
      %6616 = vmatpush.bf16.msra.mxu0 %v5668
      %6617 = vmatmul.bf16.gmra.mxu0 %v3983
      %v6618 = vpop.f32.mrf.mxu0
      %v6619 = vadd.f32 %v6600, %v6618
      %v6620 = vpop.f32.mrf.mxu0
      %v6621 = vadd.f32 %v6602, %v6620
      %6622 = vmatmul.bf16.gmra.mxu0 %v3987
      %v6623 = vpop.f32.mrf.mxu0
      %v6624 = vadd.f32 %v6605, %v6623
      %v6625 = vpop.f32.mrf.mxu0
      %v6626 = vadd.f32 %v6607, %v6625
      %6627 = vdwg.mxu0
      %6628 = vmatpush.bf16.msra.mxu0 %v5833
      %6629 = vmatpush.bf16.msra.mxu0 %v5822
      %6630 = vmatpush.bf16.msra.mxu0 %v5811
      %6631 = vmatpush.bf16.msra.mxu0 %v5800
      %6632 = vmatpush.bf16.msra.mxu0 %v5789
      %6633 = vmatpush.bf16.msra.mxu0 %v5778
      %6634 = vmatpush.bf16.msra.mxu0 %v5767
      %6635 = vmatpush.bf16.msra.mxu0 %v5756
      %6636 = vmatmul.bf16.gmra.mxu0 %v3984
      %v6637 = vpop.f32.mrf.mxu0
      %v6638 = vadd.f32 %v6619, %v6637
      %v6639 = vpop.f32.mrf.mxu0
      %v6640 = vadd.f32 %v6621, %v6639
      %6641 = vmatmul.bf16.gmra.mxu0 %v3988
      %v6642 = vpop.f32.mrf.mxu0
      %v6643 = vadd.f32 %v6624, %v6642
      %v6644 = vpop.f32.mrf.mxu0
      %v6645 = vadd.f32 %v6626, %v6644
      %6646 = vdwg.mxu0
      %6647 = vmatpush.bf16.msra.mxu0 %v5570
      %6648 = vmatpush.bf16.msra.mxu0 %v5559
      %6649 = vmatpush.bf16.msra.mxu0 %v5548
      %6650 = vmatpush.bf16.msra.mxu0 %v5537
      %6651 = vmatpush.bf16.msra.mxu0 %v5526
      %6652 = vmatpush.bf16.msra.mxu0 %v5515
      %6653 = vmatpush.bf16.msra.mxu0 %v5504
      %6654 = vmatpush.bf16.msra.mxu0 %v5493
      %6655 = vmatmul.bf16.gmra.mxu0 %v3981
      %v6656 = vpop.f32.mrf.mxu0
      %v6657 = vadd.f32 %v4383, %v6656
      %v6658 = vpop.f32.mrf.mxu0
      %v6659 = vadd.f32 %v4383, %v6658
      %6660 = vmatmul.bf16.gmra.mxu0 %v3985
      %v6661 = vpop.f32.mrf.mxu0
      %v6662 = vadd.f32 %v4383, %v6661
      %v6663 = vpop.f32.mrf.mxu0
      %v6664 = vadd.f32 %v4383, %v6663
      %6665 = vdwg.mxu0
      %6666 = vmatpush.bf16.msra.mxu0 %v5658
      %6667 = vmatpush.bf16.msra.mxu0 %v5647
      %6668 = vmatpush.bf16.msra.mxu0 %v5636
      %6669 = vmatpush.bf16.msra.mxu0 %v5625
      %6670 = vmatpush.bf16.msra.mxu0 %v5614
      %6671 = vmatpush.bf16.msra.mxu0 %v5603
      %6672 = vmatpush.bf16.msra.mxu0 %v5592
      %6673 = vmatpush.bf16.msra.mxu0 %v5581
      %6674 = vmatmul.bf16.gmra.mxu0 %v3982
      %v6675 = vpop.f32.mrf.mxu0
      %v6676 = vadd.f32 %v6657, %v6675
      %v6677 = vpop.f32.mrf.mxu0
      %v6678 = vadd.f32 %v6659, %v6677
      %6679 = vmatmul.bf16.gmra.mxu0 %v3986
      %v6680 = vpop.f32.mrf.mxu0
      %v6681 = vadd.f32 %v6662, %v6680
      %v6682 = vpop.f32.mrf.mxu0
      %v6683 = vadd.f32 %v6664, %v6682
      %6684 = vdwg.mxu0
      %6685 = vmatpush.bf16.msra.mxu0 %v5746
      %6686 = vmatpush.bf16.msra.mxu0 %v5735
      %6687 = vmatpush.bf16.msra.mxu0 %v5724
      %6688 = vmatpush.bf16.msra.mxu0 %v5713
      %6689 = vmatpush.bf16.msra.mxu0 %v5702
      %6690 = vmatpush.bf16.msra.mxu0 %v5691
      %6691 = vmatpush.bf16.msra.mxu0 %v5680
      %6692 = vmatpush.bf16.msra.mxu0 %v5669
      %6693 = vmatmul.bf16.gmra.mxu0 %v3983
      %v6694 = vpop.f32.mrf.mxu0
      %v6695 = vadd.f32 %v6676, %v6694
      %v6696 = vpop.f32.mrf.mxu0
      %v6697 = vadd.f32 %v6678, %v6696
      %6698 = vmatmul.bf16.gmra.mxu0 %v3987
      %v6699 = vpop.f32.mrf.mxu0
      %v6700 = vadd.f32 %v6681, %v6699
      %v6701 = vpop.f32.mrf.mxu0
      %v6702 = vadd.f32 %v6683, %v6701
      %6703 = vdwg.mxu0
      %6704 = vmatpush.bf16.msra.mxu0 %v5834
      %6705 = vmatpush.bf16.msra.mxu0 %v5823
      %6706 = vmatpush.bf16.msra.mxu0 %v5812
      %6707 = vmatpush.bf16.msra.mxu0 %v5801
      %6708 = vmatpush.bf16.msra.mxu0 %v5790
      %6709 = vmatpush.bf16.msra.mxu0 %v5779
      %6710 = vmatpush.bf16.msra.mxu0 %v5768
      %6711 = vmatpush.bf16.msra.mxu0 %v5757
      %6712 = vmatmul.bf16.gmra.mxu0 %v3984
      %v6713 = vpop.f32.mrf.mxu0
      %v6714 = vadd.f32 %v6695, %v6713
      %v6715 = vpop.f32.mrf.mxu0
      %v6716 = vadd.f32 %v6697, %v6715
      %6717 = vmatmul.bf16.gmra.mxu0 %v3988
      %v6718 = vpop.f32.mrf.mxu0
      %v6719 = vadd.f32 %v6700, %v6718
      %v6720 = vpop.f32.mrf.mxu0
      %v6721 = vadd.f32 %v6702, %v6720
      %6722 = vdwg.mxu0
      %6723 = vmatpush.bf16.msra.mxu0 %v5571
      %6724 = vmatpush.bf16.msra.mxu0 %v5560
      %6725 = vmatpush.bf16.msra.mxu0 %v5549
      %6726 = vmatpush.bf16.msra.mxu0 %v5538
      %6727 = vmatpush.bf16.msra.mxu0 %v5527
      %6728 = vmatpush.bf16.msra.mxu0 %v5516
      %6729 = vmatpush.bf16.msra.mxu0 %v5505
      %6730 = vmatpush.bf16.msra.mxu0 %v5494
      %6731 = vmatmul.bf16.gmra.mxu0 %v3981
      %v6732 = vpop.f32.mrf.mxu0
      %v6733 = vadd.f32 %v4384, %v6732
      %v6734 = vpop.f32.mrf.mxu0
      %v6735 = vadd.f32 %v4384, %v6734
      %6736 = vmatmul.bf16.gmra.mxu0 %v3985
      %v6737 = vpop.f32.mrf.mxu0
      %v6738 = vadd.f32 %v4384, %v6737
      %v6739 = vpop.f32.mrf.mxu0
      %v6740 = vadd.f32 %v4384, %v6739
      %6741 = vdwg.mxu0
      %6742 = vmatpush.bf16.msra.mxu0 %v5659
      %6743 = vmatpush.bf16.msra.mxu0 %v5648
      %6744 = vmatpush.bf16.msra.mxu0 %v5637
      %6745 = vmatpush.bf16.msra.mxu0 %v5626
      %6746 = vmatpush.bf16.msra.mxu0 %v5615
      %6747 = vmatpush.bf16.msra.mxu0 %v5604
      %6748 = vmatpush.bf16.msra.mxu0 %v5593
      %6749 = vmatpush.bf16.msra.mxu0 %v5582
      %6750 = vmatmul.bf16.gmra.mxu0 %v3982
      %v6751 = vpop.f32.mrf.mxu0
      %v6752 = vadd.f32 %v6733, %v6751
      %v6753 = vpop.f32.mrf.mxu0
      %v6754 = vadd.f32 %v6735, %v6753
      %6755 = vmatmul.bf16.gmra.mxu0 %v3986
      %v6756 = vpop.f32.mrf.mxu0
      %v6757 = vadd.f32 %v6738, %v6756
      %v6758 = vpop.f32.mrf.mxu0
      %v6759 = vadd.f32 %v6740, %v6758
      %6760 = vdwg.mxu0
      %6761 = vmatpush.bf16.msra.mxu0 %v5747
      %6762 = vmatpush.bf16.msra.mxu0 %v5736
      %6763 = vmatpush.bf16.msra.mxu0 %v5725
      %6764 = vmatpush.bf16.msra.mxu0 %v5714
      %6765 = vmatpush.bf16.msra.mxu0 %v5703
      %6766 = vmatpush.bf16.msra.mxu0 %v5692
      %6767 = vmatpush.bf16.msra.mxu0 %v5681
      %6768 = vmatpush.bf16.msra.mxu0 %v5670
      %6769 = vmatmul.bf16.gmra.mxu0 %v3983
      %v6770 = vpop.f32.mrf.mxu0
      %v6771 = vadd.f32 %v6752, %v6770
      %v6772 = vpop.f32.mrf.mxu0
      %v6773 = vadd.f32 %v6754, %v6772
      %6774 = vmatmul.bf16.gmra.mxu0 %v3987
      %v6775 = vpop.f32.mrf.mxu0
      %v6776 = vadd.f32 %v6757, %v6775
      %v6777 = vpop.f32.mrf.mxu0
      %v6778 = vadd.f32 %v6759, %v6777
      %6779 = vdwg.mxu0
      %6780 = vmatpush.bf16.msra.mxu0 %v5835
      %6781 = vmatpush.bf16.msra.mxu0 %v5824
      %6782 = vmatpush.bf16.msra.mxu0 %v5813
      %6783 = vmatpush.bf16.msra.mxu0 %v5802
      %6784 = vmatpush.bf16.msra.mxu0 %v5791
      %6785 = vmatpush.bf16.msra.mxu0 %v5780
      %6786 = vmatpush.bf16.msra.mxu0 %v5769
      %6787 = vmatpush.bf16.msra.mxu0 %v5758
      %6788 = vmatmul.bf16.gmra.mxu0 %v3984
      %v6789 = vpop.f32.mrf.mxu0
      %v6790 = vadd.f32 %v6771, %v6789
      %v6791 = vpop.f32.mrf.mxu0
      %v6792 = vadd.f32 %v6773, %v6791
      %6793 = vmatmul.bf16.gmra.mxu0 %v3988
      %v6794 = vpop.f32.mrf.mxu0
      %v6795 = vadd.f32 %v6776, %v6794
      %v6796 = vpop.f32.mrf.mxu0
      %v6797 = vadd.f32 %v6778, %v6796
      %6798 = vdwg.mxu0
      %6799 = vmatpush.bf16.msra.mxu0 %v5572
      %6800 = vmatpush.bf16.msra.mxu0 %v5561
      %6801 = vmatpush.bf16.msra.mxu0 %v5550
      %6802 = vmatpush.bf16.msra.mxu0 %v5539
      %6803 = vmatpush.bf16.msra.mxu0 %v5528
      %6804 = vmatpush.bf16.msra.mxu0 %v5517
      %6805 = vmatpush.bf16.msra.mxu0 %v5506
      %6806 = vmatpush.bf16.msra.mxu0 %v5495
      %6807 = vmatmul.bf16.gmra.mxu0 %v3981
      %v6808 = vpop.f32.mrf.mxu0
      %v6809 = vadd.f32 %v4385, %v6808
      %v6810 = vpop.f32.mrf.mxu0
      %v6811 = vadd.f32 %v4385, %v6810
      %6812 = vmatmul.bf16.gmra.mxu0 %v3985
      %v6813 = vpop.f32.mrf.mxu0
      %v6814 = vadd.f32 %v4385, %v6813
      %v6815 = vpop.f32.mrf.mxu0
      %v6816 = vadd.f32 %v4385, %v6815
      %6817 = vdwg.mxu0
      %6818 = vmatpush.bf16.msra.mxu0 %v5660
      %6819 = vmatpush.bf16.msra.mxu0 %v5649
      %6820 = vmatpush.bf16.msra.mxu0 %v5638
      %6821 = vmatpush.bf16.msra.mxu0 %v5627
      %6822 = vmatpush.bf16.msra.mxu0 %v5616
      %6823 = vmatpush.bf16.msra.mxu0 %v5605
      %6824 = vmatpush.bf16.msra.mxu0 %v5594
      %6825 = vmatpush.bf16.msra.mxu0 %v5583
      %6826 = vmatmul.bf16.gmra.mxu0 %v3982
      %v6827 = vpop.f32.mrf.mxu0
      %v6828 = vadd.f32 %v6809, %v6827
      %v6829 = vpop.f32.mrf.mxu0
      %v6830 = vadd.f32 %v6811, %v6829
      %6831 = vmatmul.bf16.gmra.mxu0 %v3986
      %v6832 = vpop.f32.mrf.mxu0
      %v6833 = vadd.f32 %v6814, %v6832
      %v6834 = vpop.f32.mrf.mxu0
      %v6835 = vadd.f32 %v6816, %v6834
      %6836 = vdwg.mxu0
      %6837 = vmatpush.bf16.msra.mxu0 %v5748
      %6838 = vmatpush.bf16.msra.mxu0 %v5737
      %6839 = vmatpush.bf16.msra.mxu0 %v5726
      %6840 = vmatpush.bf16.msra.mxu0 %v5715
      %6841 = vmatpush.bf16.msra.mxu0 %v5704
      %6842 = vmatpush.bf16.msra.mxu0 %v5693
      %6843 = vmatpush.bf16.msra.mxu0 %v5682
      %6844 = vmatpush.bf16.msra.mxu0 %v5671
      %6845 = vmatmul.bf16.gmra.mxu0 %v3983
      %v6846 = vpop.f32.mrf.mxu0
      %v6847 = vadd.f32 %v6828, %v6846
      %v6848 = vpop.f32.mrf.mxu0
      %v6849 = vadd.f32 %v6830, %v6848
      %6850 = vmatmul.bf16.gmra.mxu0 %v3987
      %v6851 = vpop.f32.mrf.mxu0
      %v6852 = vadd.f32 %v6833, %v6851
      %v6853 = vpop.f32.mrf.mxu0
      %v6854 = vadd.f32 %v6835, %v6853
      %6855 = vdwg.mxu0
      %6856 = vmatpush.bf16.msra.mxu0 %v5836
      %6857 = vmatpush.bf16.msra.mxu0 %v5825
      %6858 = vmatpush.bf16.msra.mxu0 %v5814
      %6859 = vmatpush.bf16.msra.mxu0 %v5803
      %6860 = vmatpush.bf16.msra.mxu0 %v5792
      %6861 = vmatpush.bf16.msra.mxu0 %v5781
      %6862 = vmatpush.bf16.msra.mxu0 %v5770
      %6863 = vmatpush.bf16.msra.mxu0 %v5759
      %6864 = vmatmul.bf16.gmra.mxu0 %v3984
      %v6865 = vpop.f32.mrf.mxu0
      %v6866 = vadd.f32 %v6847, %v6865
      %v6867 = vpop.f32.mrf.mxu0
      %v6868 = vadd.f32 %v6849, %v6867
      %6869 = vmatmul.bf16.gmra.mxu0 %v3988
      %v6870 = vpop.f32.mrf.mxu0
      %v6871 = vadd.f32 %v6852, %v6870
      %v6872 = vpop.f32.mrf.mxu0
      %v6873 = vadd.f32 %v6854, %v6872
      %6874 = vdwg.mxu0
      %6875 = vmatpush.bf16.msra.mxu0 %v5573
      %6876 = vmatpush.bf16.msra.mxu0 %v5562
      %6877 = vmatpush.bf16.msra.mxu0 %v5551
      %6878 = vmatpush.bf16.msra.mxu0 %v5540
      %6879 = vmatpush.bf16.msra.mxu0 %v5529
      %6880 = vmatpush.bf16.msra.mxu0 %v5518
      %6881 = vmatpush.bf16.msra.mxu0 %v5507
      %6882 = vmatpush.bf16.msra.mxu0 %v5496
      %6883 = vmatmul.bf16.gmra.mxu0 %v3981
      %v6884 = vpop.f32.mrf.mxu0
      %v6885 = vadd.f32 %v4386, %v6884
      %v6886 = vpop.f32.mrf.mxu0
      %v6887 = vadd.f32 %v4386, %v6886
      %6888 = vmatmul.bf16.gmra.mxu0 %v3985
      %v6889 = vpop.f32.mrf.mxu0
      %v6890 = vadd.f32 %v4386, %v6889
      %v6891 = vpop.f32.mrf.mxu0
      %v6892 = vadd.f32 %v4386, %v6891
      %6893 = vdwg.mxu0
      %6894 = vmatpush.bf16.msra.mxu0 %v5661
      %6895 = vmatpush.bf16.msra.mxu0 %v5650
      %6896 = vmatpush.bf16.msra.mxu0 %v5639
      %6897 = vmatpush.bf16.msra.mxu0 %v5628
      %6898 = vmatpush.bf16.msra.mxu0 %v5617
      %6899 = vmatpush.bf16.msra.mxu0 %v5606
      %6900 = vmatpush.bf16.msra.mxu0 %v5595
      %6901 = vmatpush.bf16.msra.mxu0 %v5584
      %6902 = vmatmul.bf16.gmra.mxu0 %v3982
      %v6903 = vpop.f32.mrf.mxu0
      %v6904 = vadd.f32 %v6885, %v6903
      %v6905 = vpop.f32.mrf.mxu0
      %v6906 = vadd.f32 %v6887, %v6905
      %6907 = vmatmul.bf16.gmra.mxu0 %v3986
      %v6908 = vpop.f32.mrf.mxu0
      %v6909 = vadd.f32 %v6890, %v6908
      %v6910 = vpop.f32.mrf.mxu0
      %v6911 = vadd.f32 %v6892, %v6910
      %6912 = vdwg.mxu0
      %6913 = vmatpush.bf16.msra.mxu0 %v5749
      %6914 = vmatpush.bf16.msra.mxu0 %v5738
      %6915 = vmatpush.bf16.msra.mxu0 %v5727
      %6916 = vmatpush.bf16.msra.mxu0 %v5716
      %6917 = vmatpush.bf16.msra.mxu0 %v5705
      %6918 = vmatpush.bf16.msra.mxu0 %v5694
      %6919 = vmatpush.bf16.msra.mxu0 %v5683
      %6920 = vmatpush.bf16.msra.mxu0 %v5672
      %6921 = vmatmul.bf16.gmra.mxu0 %v3983
      %v6922 = vpop.f32.mrf.mxu0
      %v6923 = vadd.f32 %v6904, %v6922
      %v6924 = vpop.f32.mrf.mxu0
      %v6925 = vadd.f32 %v6906, %v6924
      %6926 = vmatmul.bf16.gmra.mxu0 %v3987
      %v6927 = vpop.f32.mrf.mxu0
      %v6928 = vadd.f32 %v6909, %v6927
      %v6929 = vpop.f32.mrf.mxu0
      %v6930 = vadd.f32 %v6911, %v6929
      %6931 = vdwg.mxu0
      %6932 = vmatpush.bf16.msra.mxu0 %v5837
      %6933 = vmatpush.bf16.msra.mxu0 %v5826
      %6934 = vmatpush.bf16.msra.mxu0 %v5815
      %6935 = vmatpush.bf16.msra.mxu0 %v5804
      %6936 = vmatpush.bf16.msra.mxu0 %v5793
      %6937 = vmatpush.bf16.msra.mxu0 %v5782
      %6938 = vmatpush.bf16.msra.mxu0 %v5771
      %6939 = vmatpush.bf16.msra.mxu0 %v5760
      %6940 = vmatmul.bf16.gmra.mxu0 %v3984
      %v6941 = vpop.f32.mrf.mxu0
      %v6942 = vadd.f32 %v6923, %v6941
      %v6943 = vpop.f32.mrf.mxu0
      %v6944 = vadd.f32 %v6925, %v6943
      %6945 = vmatmul.bf16.gmra.mxu0 %v3988
      %v6946 = vpop.f32.mrf.mxu0
      %v6947 = vadd.f32 %v6928, %v6946
      %v6948 = vpop.f32.mrf.mxu0
      %v6949 = vadd.f32 %v6930, %v6948
      %6950 = vdwg.mxu0
      %6951 = vmatpush.bf16.msra.mxu0 %v5574
      %6952 = vmatpush.bf16.msra.mxu0 %v5563
      %6953 = vmatpush.bf16.msra.mxu0 %v5552
      %6954 = vmatpush.bf16.msra.mxu0 %v5541
      %6955 = vmatpush.bf16.msra.mxu0 %v5530
      %6956 = vmatpush.bf16.msra.mxu0 %v5519
      %6957 = vmatpush.bf16.msra.mxu0 %v5508
      %6958 = vmatpush.bf16.msra.mxu0 %v5497
      %6959 = vmatmul.bf16.gmra.mxu0 %v3981
      %v6960 = vpop.f32.mrf.mxu0
      %v6961 = vadd.f32 %v4387, %v6960
      %v6962 = vpop.f32.mrf.mxu0
      %v6963 = vadd.f32 %v4387, %v6962
      %6964 = vmatmul.bf16.gmra.mxu0 %v3985
      %v6965 = vpop.f32.mrf.mxu0
      %v6966 = vadd.f32 %v4387, %v6965
      %v6967 = vpop.f32.mrf.mxu0
      %v6968 = vadd.f32 %v4387, %v6967
      %6969 = vdwg.mxu0
      %6970 = vmatpush.bf16.msra.mxu0 %v5662
      %6971 = vmatpush.bf16.msra.mxu0 %v5651
      %6972 = vmatpush.bf16.msra.mxu0 %v5640
      %6973 = vmatpush.bf16.msra.mxu0 %v5629
      %6974 = vmatpush.bf16.msra.mxu0 %v5618
      %6975 = vmatpush.bf16.msra.mxu0 %v5607
      %6976 = vmatpush.bf16.msra.mxu0 %v5596
      %6977 = vmatpush.bf16.msra.mxu0 %v5585
      %6978 = vmatmul.bf16.gmra.mxu0 %v3982
      %v6979 = vpop.f32.mrf.mxu0
      %v6980 = vadd.f32 %v6961, %v6979
      %v6981 = vpop.f32.mrf.mxu0
      %v6982 = vadd.f32 %v6963, %v6981
      %6983 = vmatmul.bf16.gmra.mxu0 %v3986
      %v6984 = vpop.f32.mrf.mxu0
      %v6985 = vadd.f32 %v6966, %v6984
      %v6986 = vpop.f32.mrf.mxu0
      %v6987 = vadd.f32 %v6968, %v6986
      %6988 = vdwg.mxu0
      %6989 = vmatpush.bf16.msra.mxu0 %v5750
      %6990 = vmatpush.bf16.msra.mxu0 %v5739
      %6991 = vmatpush.bf16.msra.mxu0 %v5728
      %6992 = vmatpush.bf16.msra.mxu0 %v5717
      %6993 = vmatpush.bf16.msra.mxu0 %v5706
      %6994 = vmatpush.bf16.msra.mxu0 %v5695
      %6995 = vmatpush.bf16.msra.mxu0 %v5684
      %6996 = vmatpush.bf16.msra.mxu0 %v5673
      %6997 = vmatmul.bf16.gmra.mxu0 %v3983
      %v6998 = vpop.f32.mrf.mxu0
      %v6999 = vadd.f32 %v6980, %v6998
      %v7000 = vpop.f32.mrf.mxu0
      %v7001 = vadd.f32 %v6982, %v7000
      %7002 = vmatmul.bf16.gmra.mxu0 %v3987
      %v7003 = vpop.f32.mrf.mxu0
      %v7004 = vadd.f32 %v6985, %v7003
      %v7005 = vpop.f32.mrf.mxu0
      %v7006 = vadd.f32 %v6987, %v7005
      %7007 = vdwg.mxu0
      %7008 = vmatpush.bf16.msra.mxu0 %v5838
      %7009 = vmatpush.bf16.msra.mxu0 %v5827
      %7010 = vmatpush.bf16.msra.mxu0 %v5816
      %7011 = vmatpush.bf16.msra.mxu0 %v5805
      %7012 = vmatpush.bf16.msra.mxu0 %v5794
      %7013 = vmatpush.bf16.msra.mxu0 %v5783
      %7014 = vmatpush.bf16.msra.mxu0 %v5772
      %7015 = vmatpush.bf16.msra.mxu0 %v5761
      %7016 = vmatmul.bf16.gmra.mxu0 %v3984
      %v7017 = vpop.f32.mrf.mxu0
      %v7018 = vadd.f32 %v6999, %v7017
      %v7019 = vpop.f32.mrf.mxu0
      %v7020 = vadd.f32 %v7001, %v7019
      %7021 = vmatmul.bf16.gmra.mxu0 %v3988
      %v7022 = vpop.f32.mrf.mxu0
      %v7023 = vadd.f32 %v7004, %v7022
      %v7024 = vpop.f32.mrf.mxu0
      %v7025 = vadd.f32 %v7006, %v7024
      %7026 = vdwg.mxu0
      %7027 = vst [vmem:[%s339] sm:$0xff] %v6258
      %7028 = vst [vmem:[%s339 + $0x8] sm:$0xff] %v6334
      %7029 = vst [vmem:[%s339 + $0x10] sm:$0xff] %v6410
      %7030 = vst [vmem:[%s339 + $0x18] sm:$0xff] %v6486
      %7031 = vst [vmem:[%s339 + $0x20] sm:$0xff] %v6562
      %7032 = vst [vmem:[%s339 + $0x28] sm:$0xff] %v6638
      %7033 = vst [vmem:[%s339 + $0x30] sm:$0xff] %v6714
      %7034 = vst [vmem:[%s339 + $0x38] sm:$0xff] %v6790
      %7035 = vst [vmem:[%s339 + $0x40] sm:$0xff] %v6866
      %7036 = vst [vmem:[%s339 + $0x48] sm:$0xff] %v6942
      %7037 = vst.msk [vmem:[%s339 + $0x50] sm:$0xff] %vm2482, %v7018
      %7038 = vst [vmem:[%s339 + $0x58] sm:$0xff] %v6260
      %7039 = vst [vmem:[%s339 + $0x60] sm:$0xff] %v6336
      %7040 = vst [vmem:[%s339 + $0x68] sm:$0xff] %v6412
      %7041 = vst [vmem:[%s339 + $0x70] sm:$0xff] %v6488
      %7042 = vst [vmem:[%s339 + $0x78] sm:$0xff] %v6564
      %7043 = vst [vmem:[%s339 + $0x80] sm:$0xff] %v6640
      %7044 = vst [vmem:[%s339 + $0x88] sm:$0xff] %v6716
      %7045 = vst [vmem:[%s339 + $0x90] sm:$0xff] %v6792
      %7046 = vst [vmem:[%s339 + $0x98] sm:$0xff] %v6868
      %7047 = vst [vmem:[%s339 + $0xa0] sm:$0xff] %v6944
      %7048 = vst.msk [vmem:[%s339 + $0xa8] sm:$0xff] %vm2482, %v7020
      %7049 = vst [vmem:[%s339 + $0xb0] sm:$0xff] %v6263
      %7050 = vst [vmem:[%s339 + $0xb8] sm:$0xff] %v6339
      %7051 = vst [vmem:[%s339 + $0xc0] sm:$0xff] %v6415
      %7052 = vst [vmem:[%s339 + $0xc8] sm:$0xff] %v6491
      %7053 = vst [vmem:[%s339 + $0xd0] sm:$0xff] %v6567
      %7054 = vst [vmem:[%s339 + $0xd8] sm:$0xff] %v6643
      %7055 = vst [vmem:[%s339 + $0xe0] sm:$0xff] %v6719
      %7056 = vst [vmem:[%s339 + $0xe8] sm:$0xff] %v6795
      %7057 = vst [vmem:[%s339 + $0xf0] sm:$0xff] %v6871
      %7058 = vst [vmem:[%s339 + $0xf8] sm:$0xff] %v6947
      %7059 = vst.msk [vmem:[%s339 + $0x100] sm:$0xff] %vm2482, %v7023
      %7060 = vst [vmem:[%s339 + $0x108] sm:$0xff] %v6265
      %7061 = vst [vmem:[%s339 + $0x110] sm:$0xff] %v6341
      %7062 = vst [vmem:[%s339 + $0x118] sm:$0xff] %v6417
      %7063 = vst [vmem:[%s339 + $0x120] sm:$0xff] %v6493
      %7064 = vst [vmem:[%s339 + $0x128] sm:$0xff] %v6569
      %7065 = vst [vmem:[%s339 + $0x130] sm:$0xff] %v6645
      %7066 = vst [vmem:[%s339 + $0x138] sm:$0xff] %v6721
      %7067 = vst [vmem:[%s339 + $0x140] sm:$0xff] %v6797
      %7068 = vst [vmem:[%s339 + $0x148] sm:$0xff] %v6873
      %7069 = vst [vmem:[%s339 + $0x150] sm:$0xff] %v6949
      %7070 = vst.msk [vmem:[%s339 + $0x158] sm:$0xff] %vm2482, %v7025
      %s7071 = smul.u32 4, %s20
      %p7072 = scmp.lt.s32.totalorder %s7071, 7
      %s7073 = scalar_select %p7072, %s7071, 7
      %s7074 = smul.addr %s7073, 11
      %s7075 = smul.addr %s7074, 8
      %s7076 = scalar_lea.vmem %s9, %s7075
      // Predicated region
      $region57: #{_forward_impl.1} parent=55 // pred_check
        %p7077 = pneg %p232
      $region58: #{_forward_impl.1} parent=55 // pred_check_branch
        %7079 = sbr.rel (%p7077) target = $region60
      $region59: #{_forward_impl.1} parent=55 // pred_region
        %s7080 = smul.u32 4, %s20
      $region60: #{_forward_impl.1} parent=55 // pred_fallthru
        _
    $region56: #{_forward_impl.1} parent=5 // pred_fallthru
      _
    %p7081 = scmp.le.s32.totalorder 2, %s15
    // Predicated region
    $region61: #{_forward_impl.1} parent=5 // pred_check
      %p7082 = pneg %p7081
    $region62: #{_forward_impl.1} parent=5 // pred_check_branch
      %7084 = sbr.rel (%p7082) target = $region64
    $region63: #{_forward_impl.1} parent=5 // pred_region
      %s7085 = ssub.s32 %s15, 2
      // Predicated region
      $region65: #{_forward_impl.1} parent=63 // pred_check
        %p7086 = pneg %p238
      $region66: #{_forward_impl.1} parent=63 // pred_check_branch
        %7088 = sbr.rel (%p7086) target = $region68
      $region67: #{_forward_impl.1} parent=63 // pred_region
        %s7089 = smul.u32 4, %s21
        %p7090 = scmp.lt.s32.totalorder %s7089, 7
        %s7091 = scalar_select %p7090, %s7089, 7
        %s7092 = smul.addr %s7091, 11
        %s7093 = smul.addr %s7092, 8
        %s7094 = scalar_lea.vmem %s9, %s7093
      $region68: #{_forward_impl.1} parent=63 // pred_fallthru
        _
    $region64: #{_forward_impl.1} parent=5 // pred_fallthru
      _
  $region6: #{_forward_impl.1} parent=0 // loop_footer
    %s19 = sadd.s32 1, %s15
  $region7: #{_forward_impl.1} parent=0 // loop_footer_branch
    %14 = sbr.rel target = $region3
  $region8: #{_forward_impl.1} parent=0 // loop_exit
    _

</llo_original>
